<compile_context>
chip_gen: v7x
topology: tpu7x:2x2x1
jax: 0.10.0
libtpu: 0.0.40
codegen_flags: <defaults>
</compile_context>

<pallas_src>
import jax
import jax.numpy as jnp
import numpy as np
from jax import lax
from jax.experimental import pallas as pl
from jax.experimental.pallas import tpu as pltpu

EPS = 1e-5
LANES = 128


def _round_up(x, m):
    return ((x + m - 1) // m) * m


def _full_spec(shape):
    nd = len(shape)
    return pl.BlockSpec(tuple(shape), lambda i, _nd=nd: (0,) * _nd)


# ----------------------------------------------------------------------------
# The fused Pallas kernel
# ----------------------------------------------------------------------------
def _make_kernel(n, ho, wo, wp8, cin, cpad, stride, has_sc_conv):
    nhw = n * ho * wo
    s = stride
    nphase = s * s
    inv_nhw = 1.0 / float(nhw)

    def _bn(y, gamma, beta, relu):
        # Training-mode BatchNorm over (N,H,W): single-pass batch mean + biased
        # variance (E[x^2] - mean^2, clamped >= 0), all statistics in f32.
        # Zero-padded lanes stay exactly zero (gamma = beta = 0 there).
        s1 = jnp.sum(y, axis=0, keepdims=True)
        s2 = jnp.sum(y * y, axis=0, keepdims=True)
        mean = s1 * inv_nhw
        var = jnp.maximum(s2 * inv_nhw - mean * mean, 0.0)
        out = (y - mean) * lax.rsqrt(var + EPS) * gamma + beta
        return jnp.maximum(out, 0.0) if relu else out

    def kernel(*refs):
        phase_refs = refs[:nphase]
        w1_ref, g1_ref, b1_ref, w2_ref, g2_ref, b2_ref = refs[nphase:nphase + 6]
        if has_sc_conv:
            wsc_ref, gsc_ref, bsc_ref = refs[nphase + 6:nphase + 9]
            out_ref, lhs1_ref, lhs2_ref, pad_ref = refs[nphase + 9:]
        else:
            out_ref, lhs1_ref, lhs2_ref, pad_ref = refs[nphase + 6:]

        def in_tap(ph_h, ph_w, off_h, off_w):
            # Shifted window of one stride-phase of the padded bf16 input.
            pref = phase_refs[ph_h * s + ph_w]
            return pref[:, off_h:off_h + ho, off_w:off_w + wo, :].reshape(nhw, cin)

        # ---- conv1: stage the 9 taps as one bf16 im2col (nhw, 9*cin), then a
        #      single deep-K MXU matmul with f32 accumulation.
        for kh in range(3):
            for kw in range(3):
                t = kh * 3 + kw
                lhs1_ref[:, t * cin:(t + 1) * cin] = in_tap(
                    kh % s, kw % s, kh // s, kw // s)
        acc1 = jnp.dot(lhs1_ref[...], w1_ref[...],
                       preferred_element_type=jnp.float32)
        o1 = _bn(acc1, g1_ref[...], b1_ref[...], relu=True)          # BN1 + ReLU

        # ---- zero-pad o1 (padding=1) into the f32 VMEM scratch: only the 1-px
        #      halo is zeroed; W padded to wp8 so each image row is tile-aligned.
        pad_ref[:, 0:1, :, :] = jnp.zeros((n, 1, wp8, cpad), jnp.float32)
        pad_ref[:, ho + 1:ho + 2, :, :] = jnp.zeros((n, 1, wp8, cpad), jnp.float32)
        pad_ref[:, 1:ho + 1, 0:1, :] = jnp.zeros((n, ho, 1, cpad), jnp.float32)
        pad_ref[:, 1:ho + 1, wo + 1:wo + 2, :] = jnp.zeros((n, ho, 1, cpad), jnp.float32)
        pad_ref[:, 1:ho + 1, 1:wo + 1, :] = o1.reshape(n, ho, wo, cpad)

        # ---- conv2: bf16 im2col (nhw, 9*cpad) + single K = 9*cpad matmul.
        #      Each tap column is 128-lane aligned, so staging stores are
        #      unmasked lane-dense stores.
        for kh in range(3):
            for kw in range(3):
                t = kh * 3 + kw
                lhs2_ref[:, t * cpad:(t + 1) * cpad] = (
                    pad_ref[:, kh:kh + ho, kw:kw + wo, :]
                    .reshape(nhw, cpad).astype(jnp.bfloat16))
        acc2 = jnp.dot(lhs2_ref[...], w2_ref[...],
                       preferred_element_type=jnp.float32)
        o2 = _bn(acc2, g2_ref[...], b2_ref[...], relu=False)         # BN2

        # ---- shortcut: read from the SAME phase tensors (padded offset 1 ==
        #      unpadded offset 0), so no second activation copy is DMA'd.
        res = in_tap(1 % s, 1 % s, 1 // s, 1 // s)                   # (nhw, cin) bf16
        if has_sc_conv:
            sc = jnp.dot(res, wsc_ref[...], preferred_element_type=jnp.float32)
            sc = _bn(sc, gsc_ref[...], bsc_ref[...], relu=False)
            out_ref[...] = jnp.maximum(o2 + sc, 0.0).astype(jnp.bfloat16)
        else:
            # Identity shortcut: no projection matmul.  Lane-dense store of the
            # full tile (padded lanes are exactly zero), then a narrow fix-up
            # store adding the residual into the first cin lanes (pure VPU).
            resf = res.astype(jnp.float32)                           # f32 residual add
            if cin < cpad:
                out_ref[...] = jnp.maximum(o2, 0.0).astype(jnp.bfloat16)
                out_ref[:, :cin] = jnp.maximum(
                    o2[:, :cin] + resf, 0.0).astype(jnp.bfloat16)
            else:
                out_ref[...] = jnp.maximum(o2 + resf, 0.0).astype(jnp.bfloat16)

    return kernel


# ----------------------------------------------------------------------------
# Wrapper (NCHW in / NCHW out, PyTorch OIHW weights)
# ----------------------------------------------------------------------------
def residual_block_forward(x_nchw, params, stride):
    s = int(stride)
    # NCHW -> NHWC, cast to bf16 ONCE; the pad and the s*s stride-phase slices
    # below are pure (non-overlapping) slices of the padded tensor, so XLA
    # fuses them into ~one HBM pass over the activation.
    x = jnp.transpose(x_nchw, (0, 2, 3, 1)).astype(jnp.bfloat16)      # NHWC bf16
    n, h, w, cin = x.shape
    cout = params["w1"].shape[0]
    cpad = _round_up(cout, LANES)
    ho = (h - 1) // s + 1
    wo = (w - 1) // s + 1
    nhw = n * ho * wo
    wp8 = _round_up(wo + 2, 8)
    has_sc_conv = (s != 1) or (cin != cout)

    xp = jnp.pad(x, ((0, 0), (1, 1), (1, 1), (0, 0)))
    phases = [xp[:, ph::s, pw::s, :] for ph in range(s) for pw in range(s)]

    def conv_w(w_oihw, pad_in_to=None):
        # torch OIHW -> K-folded (KH*KW*I[, padded], Cpad) bf16, matching the
        # in-kernel im2col column order (tap-major, channel-minor).
        o, i, kh, kw = w_oihw.shape
        wt = jnp.transpose(w_oihw, (2, 3, 1, 0)).astype(jnp.float32)  # (KH,KW,I,O)
        if pad_in_to is not None:
            wt = jnp.pad(wt, ((0, 0), (0, 0), (0, pad_in_to - i), (0, 0)))
        wt = jnp.pad(wt, ((0, 0), (0, 0), (0, 0), (0, cpad - o)))
        return wt.reshape(kh * kw * wt.shape[2], cpad).astype(jnp.bfloat16)

    def bn_p(v):  # gamma/beta -> (1, Cpad) f32 (zero-padded columns stay zero)
        return jnp.pad(v.astype(jnp.float32), (0, cpad - cout)).reshape(1, cpad)

    inputs = list(phases) + [
        conv_w(params["w1"]), bn_p(params["g1"]), bn_p(params["b1"]),
        conv_w(params["w2"], pad_in_to=cpad), bn_p(params["g2"]), bn_p(params["b2"]),
    ]
    if has_sc_conv:
        inputs += [conv_w(params["wsc"]),                             # (cin, Cpad)
                   bn_p(params["gsc"]), bn_p(params["bsc"])]

    kernel = _make_kernel(n, ho, wo, wp8, cin, cpad, s, has_sc_conv)
    out2d = pl.pallas_call(
        kernel,
        out_shape=jax.ShapeDtypeStruct((nhw, cpad), jnp.bfloat16),    # lane-dense bf16
        grid=(1,),
        in_specs=[_full_spec(a.shape) for a in inputs],
        out_specs=_full_spec((nhw, cpad)),
        scratch_shapes=[
            pltpu.VMEM((nhw, 9 * cin), jnp.bfloat16),                 # conv1 im2col
            pltpu.VMEM((nhw, 9 * cpad), jnp.bfloat16),                # conv2 im2col
            pltpu.VMEM((n, ho + 2, wp8, cpad), jnp.float32),          # conv2 padded o1
        ],
        compiler_params=pltpu.CompilerParams(dimension_semantics=("arbitrary",)),
    )(*inputs)

    out = out2d[:, :cout].astype(jnp.float32).reshape(n, ho, wo, cout)
    return jnp.transpose(out, (0, 3, 1, 2))                           # NCHW f32


# ----------------------------------------------------------------------------
# Pure-JAX reference (for correctness check)
# ----------------------------------------------------------------------------
def residual_block_reference(x_nchw, params, stride):
    x = jnp.transpose(x_nchw, (0, 2, 3, 1)).astype(jnp.float32)
    cin = x.shape[-1]
    cout = params["w1"].shape[0]

    def conv(y, w_oihw, s, pad):
        w = jnp.transpose(w_oihw, (2, 3, 1, 0))  # HWIO
        return lax.conv_general_dilated(
            y, w, (s, s), [(pad, pad), (pad, pad)],
            dimension_numbers=("NHWC", "HWIO", "NHWC"))

    def bn(y, g, b):
        m = jnp.mean(y, axis=(0, 1, 2))
        v = jnp.mean((y - m) ** 2, axis=(0, 1, 2))
        return (y - m) * lax.rsqrt(v + EPS) * g + b

    o = jax.nn.relu(bn(conv(x, params["w1"], stride, 1), params["g1"], params["b1"]))
    o = bn(conv(o, params["w2"], 1, 1), params["g2"], params["b2"])
    if (stride != 1) or (cin != cout):
        sc = bn(conv(x, params["wsc"], stride, 0), params["gsc"], params["bsc"])
    else:
        sc = x
    return jnp.transpose(jax.nn.relu(o + sc), (0, 3, 1, 2))


# ----------------------------------------------------------------------------
if __name__ == "__main__":
    key = jax.random.PRNGKey(0)

    def make_params(keys, cin, cout, with_sc):
        p = {
            "w1": 0.2 * jax.random.normal(keys[0], (cout, cin, 3, 3), jnp.float32),
            "g1": 1.0 + 0.1 * jax.random.normal(keys[1], (cout,), jnp.float32),
            "b1": 0.1 * jax.random.normal(keys[2], (cout,), jnp.float32),
            "w2": 0.2 * jax.random.normal(keys[3], (cout, cout, 3, 3), jnp.float32),
            "g2": 1.0 + 0.1 * jax.random.normal(keys[4], (cout,), jnp.float32),
            "b2": 0.1 * jax.random.normal(keys[5], (cout,), jnp.float32),
        }
        if with_sc:
            p["wsc"] = 0.2 * jax.random.normal(keys[6], (cout, cin, 1, 1), jnp.float32)
            p["gsc"] = 1.0 + 0.1 * jax.random.normal(keys[7], (cout,), jnp.float32)
            p["bsc"] = 0.1 * jax.random.normal(keys[8], (cout,), jnp.float32)
        return p

    # Case 1: downsampling block (stride=2, 4 -> 8 channels, projection shortcut)
    ks = jax.random.split(key, 10)
    params = make_params(ks, 4, 8, True)
    x = jax.random.normal(ks[9], (2, 4, 16, 16), jnp.float32)         # NCHW input
    out = jax.block_until_ready(residual_block_forward(x, params, 2))
    ref = jax.block_until_ready(residual_block_reference(x, params, 2))
    assert out.shape == ref.shape == (2, 8, 8, 8)
    np.testing.assert_allclose(np.asarray(out), np.asarray(ref), atol=5e-2, rtol=5e-2)

    # Case 2: identity-shortcut block (stride=1, 8 -> 8 channels)
    ks2 = jax.random.split(jax.random.fold_in(key, 1), 10)
    params2 = make_params(ks2, 8, 8, False)
    x2 = jax.random.normal(ks2[9], (2, 8, 16, 16), jnp.float32)
    out2 = jax.block_until_ready(residual_block_forward(x2, params2, 1))
    ref2 = jax.block_until_ready(residual_block_reference(x2, params2, 1))
    assert out2.shape == ref2.shape == (2, 8, 16, 16)
    np.testing.assert_allclose(np.asarray(out2), np.asarray(ref2), atol=5e-2, rtol=5e-2)

    print("KERNEL_OK")
</pallas_src>

<mosaic_0001>
module attributes {stable_mosaic.version = 11 : i64} {
  func.func @kernel(%arg0: i32, %arg1: memref<2x9x9x4xbf16, #tpu.memory_space<vmem>>, %arg2: memref<2x9x9x4xbf16, #tpu.memory_space<vmem>>, %arg3: memref<2x9x9x4xbf16, #tpu.memory_space<vmem>>, %arg4: memref<2x9x9x4xbf16, #tpu.memory_space<vmem>>, %arg5: memref<36x128xbf16, #tpu.memory_space<vmem>>, %arg6: memref<1x128xf32, #tpu.memory_space<vmem>>, %arg7: memref<1x128xf32, #tpu.memory_space<vmem>>, %arg8: memref<1152x128xbf16, #tpu.memory_space<vmem>>, %arg9: memref<1x128xf32, #tpu.memory_space<vmem>>, %arg10: memref<1x128xf32, #tpu.memory_space<vmem>>, %arg11: memref<4x128xbf16, #tpu.memory_space<vmem>>, %arg12: memref<1x128xf32, #tpu.memory_space<vmem>>, %arg13: memref<1x128xf32, #tpu.memory_space<vmem>>, %arg14: memref<128x128xbf16, #tpu.memory_space<vmem>>, %arg15: memref<128x36xbf16, #tpu.memory_space<vmem>>, %arg16: memref<128x1152xbf16, #tpu.memory_space<vmem>>, %arg17: memref<2x10x16x128xf32, #tpu.memory_space<vmem>>) attributes {dimension_semantics = [#tpu.dimension_semantics<arbitrary>], iteration_bounds = array<i64: 1>, scalar_prefetch = 0 : i64, scratch_operands = 3 : i64, tpu.core_type = #tpu.core_type<tc>, window_params = [{pipeline_mode = #tpu.pipeline_mode<synchronous>, transform_indices = @transform_0, window_bounds = array<i64: 2, 9, 9, 4>}, {pipeline_mode = #tpu.pipeline_mode<synchronous>, transform_indices = @transform_1, window_bounds = array<i64: 2, 9, 9, 4>}, {pipeline_mode = #tpu.pipeline_mode<synchronous>, transform_indices = @transform_2, window_bounds = array<i64: 2, 9, 9, 4>}, {pipeline_mode = #tpu.pipeline_mode<synchronous>, transform_indices = @transform_3, window_bounds = array<i64: 2, 9, 9, 4>}, {pipeline_mode = #tpu.pipeline_mode<synchronous>, transform_indices = @transform_4, window_bounds = array<i64: 36, 128>}, {pipeline_mode = #tpu.pipeline_mode<synchronous>, transform_indices = @transform_5, window_bounds = array<i64: 1, 128>}, {pipeline_mode = #tpu.pipeline_mode<synchronous>, transform_indices = @transform_6, window_bounds = array<i64: 1, 128>}, {pipeline_mode = #tpu.pipeline_mode<synchronous>, transform_indices = @transform_7, window_bounds = array<i64: 1152, 128>}, {pipeline_mode = #tpu.pipeline_mode<synchronous>, transform_indices = @transform_8, window_bounds = array<i64: 1, 128>}, {pipeline_mode = #tpu.pipeline_mode<synchronous>, transform_indices = @transform_9, window_bounds = array<i64: 1, 128>}, {pipeline_mode = #tpu.pipeline_mode<synchronous>, transform_indices = @transform_10, window_bounds = array<i64: 4, 128>}, {pipeline_mode = #tpu.pipeline_mode<synchronous>, transform_indices = @transform_11, window_bounds = array<i64: 1, 128>}, {pipeline_mode = #tpu.pipeline_mode<synchronous>, transform_indices = @transform_12, window_bounds = array<i64: 1, 128>}, {pipeline_mode = #tpu.pipeline_mode<synchronous>, transform_indices = @transform_13, window_bounds = array<i64: 128, 128>}]} {
    %c0 = arith.constant 0 : index
    %c0_0 = arith.constant 0 : index
    %c0_1 = arith.constant 0 : index
    %c0_2 = arith.constant 0 : index
    %0 = vector.load %arg1[%c0, %c0_0, %c0_1, %c0_2] : memref<2x9x9x4xbf16, #tpu.memory_space<vmem>>, vector<2x8x8x4xbf16>
    %1 = vector.shape_cast %0 : vector<2x8x8x4xbf16> to vector<128x4xbf16>
    %c0_3 = arith.constant 0 : index
    %c0_4 = arith.constant 0 : index
    %2 = vector.load %arg15[%c0_3, %c0_4] : memref<128x36xbf16, #tpu.memory_space<vmem>>, vector<128x4xbf16>
    tpu.vector_store %arg15[%c0_3, %c0_4], %1 {strides = array<i32>} : memref<128x36xbf16, #tpu.memory_space<vmem>>, vector<128x4xbf16>,
    %c0_5 = arith.constant 0 : index
    %c0_6 = arith.constant 0 : index
    %c0_7 = arith.constant 0 : index
    %c0_8 = arith.constant 0 : index
    %3 = vector.load %arg2[%c0_5, %c0_6, %c0_7, %c0_8] : memref<2x9x9x4xbf16, #tpu.memory_space<vmem>>, vector<2x8x8x4xbf16>
    %4 = vector.shape_cast %3 : vector<2x8x8x4xbf16> to vector<128x4xbf16>
    %c0_9 = arith.constant 0 : index
    %c4 = arith.constant 4 : index
    %5 = vector.load %arg15[%c0_9, %c4] : memref<128x36xbf16, #tpu.memory_space<vmem>>, vector<128x4xbf16>
    tpu.vector_store %arg15[%c0_9, %c4], %4 {strides = array<i32>} : memref<128x36xbf16, #tpu.memory_space<vmem>>, vector<128x4xbf16>,
    %c0_10 = arith.constant 0 : index
    %c0_11 = arith.constant 0 : index
    %c1 = arith.constant 1 : index
    %c0_12 = arith.constant 0 : index
    %6 = vector.load %arg1[%c0_10, %c0_11, %c1, %c0_12] : memref<2x9x9x4xbf16, #tpu.memory_space<vmem>>, vector<2x8x8x4xbf16>
    %7 = vector.shape_cast %6 : vector<2x8x8x4xbf16> to vector<128x4xbf16>
    %c0_13 = arith.constant 0 : index
    %c8 = arith.constant 8 : index
    %8 = vector.load %arg15[%c0_13, %c8] : memref<128x36xbf16, #tpu.memory_space<vmem>>, vector<128x4xbf16>
    tpu.vector_store %arg15[%c0_13, %c8], %7 {strides = array<i32>} : memref<128x36xbf16, #tpu.memory_space<vmem>>, vector<128x4xbf16>,
    %c0_14 = arith.constant 0 : index
    %c0_15 = arith.constant 0 : index
    %c0_16 = arith.constant 0 : index
    %c0_17 = arith.constant 0 : index
    %9 = vector.load %arg3[%c0_14, %c0_15, %c0_16, %c0_17] : memref<2x9x9x4xbf16, #tpu.memory_space<vmem>>, vector<2x8x8x4xbf16>
    %10 = vector.shape_cast %9 : vector<2x8x8x4xbf16> to vector<128x4xbf16>
    %c0_18 = arith.constant 0 : index
    %c12 = arith.constant 12 : index
    %11 = vector.load %arg15[%c0_18, %c12] : memref<128x36xbf16, #tpu.memory_space<vmem>>, vector<128x4xbf16>
    tpu.vector_store %arg15[%c0_18, %c12], %10 {strides = array<i32>} : memref<128x36xbf16, #tpu.memory_space<vmem>>, vector<128x4xbf16>,
    %c0_19 = arith.constant 0 : index
    %c0_20 = arith.constant 0 : index
    %c0_21 = arith.constant 0 : index
    %c0_22 = arith.constant 0 : index
    %12 = vector.load %arg4[%c0_19, %c0_20, %c0_21, %c0_22] : memref<2x9x9x4xbf16, #tpu.memory_space<vmem>>, vector<2x8x8x4xbf16>
    %13 = vector.shape_cast %12 : vector<2x8x8x4xbf16> to vector<128x4xbf16>
    %c0_23 = arith.constant 0 : index
    %c16 = arith.constant 16 : index
    %14 = vector.load %arg15[%c0_23, %c16] : memref<128x36xbf16, #tpu.memory_space<vmem>>, vector<128x4xbf16>
    tpu.vector_store %arg15[%c0_23, %c16], %13 {strides = array<i32>} : memref<128x36xbf16, #tpu.memory_space<vmem>>, vector<128x4xbf16>,
    %c0_24 = arith.constant 0 : index
    %c0_25 = arith.constant 0 : index
    %c1_26 = arith.constant 1 : index
    %c0_27 = arith.constant 0 : index
    %15 = vector.load %arg3[%c0_24, %c0_25, %c1_26, %c0_27] : memref<2x9x9x4xbf16, #tpu.memory_space<vmem>>, vector<2x8x8x4xbf16>
    %16 = vector.shape_cast %15 : vector<2x8x8x4xbf16> to vector<128x4xbf16>
    %c0_28 = arith.constant 0 : index
    %c20 = arith.constant 20 : index
    %17 = vector.load %arg15[%c0_28, %c20] : memref<128x36xbf16, #tpu.memory_space<vmem>>, vector<128x4xbf16>
    tpu.vector_store %arg15[%c0_28, %c20], %16 {strides = array<i32>} : memref<128x36xbf16, #tpu.memory_space<vmem>>, vector<128x4xbf16>,
    %c0_29 = arith.constant 0 : index
    %c1_30 = arith.constant 1 : index
    %c0_31 = arith.constant 0 : index
    %c0_32 = arith.constant 0 : index
    %18 = vector.load %arg1[%c0_29, %c1_30, %c0_31, %c0_32] : memref<2x9x9x4xbf16, #tpu.memory_space<vmem>>, vector<2x8x8x4xbf16>
    %19 = vector.shape_cast %18 : vector<2x8x8x4xbf16> to vector<128x4xbf16>
    %c0_33 = arith.constant 0 : index
    %c24 = arith.constant 24 : index
    %20 = vector.load %arg15[%c0_33, %c24] : memref<128x36xbf16, #tpu.memory_space<vmem>>, vector<128x4xbf16>
    tpu.vector_store %arg15[%c0_33, %c24], %19 {strides = array<i32>} : memref<128x36xbf16, #tpu.memory_space<vmem>>, vector<128x4xbf16>,
    %c0_34 = arith.constant 0 : index
    %c1_35 = arith.constant 1 : index
    %c0_36 = arith.constant 0 : index
    %c0_37 = arith.constant 0 : index
    %21 = vector.load %arg2[%c0_34, %c1_35, %c0_36, %c0_37] : memref<2x9x9x4xbf16, #tpu.memory_space<vmem>>, vector<2x8x8x4xbf16>
    %22 = vector.shape_cast %21 : vector<2x8x8x4xbf16> to vector<128x4xbf16>
    %c0_38 = arith.constant 0 : index
    %c28 = arith.constant 28 : index
    %23 = vector.load %arg15[%c0_38, %c28] : memref<128x36xbf16, #tpu.memory_space<vmem>>, vector<128x4xbf16>
    tpu.vector_store %arg15[%c0_38, %c28], %22 {strides = array<i32>} : memref<128x36xbf16, #tpu.memory_space<vmem>>, vector<128x4xbf16>,
    %c0_39 = arith.constant 0 : index
    %c1_40 = arith.constant 1 : index
    %c1_41 = arith.constant 1 : index
    %c0_42 = arith.constant 0 : index
    %24 = vector.load %arg1[%c0_39, %c1_40, %c1_41, %c0_42] : memref<2x9x9x4xbf16, #tpu.memory_space<vmem>>, vector<2x8x8x4xbf16>
    %25 = vector.shape_cast %24 : vector<2x8x8x4xbf16> to vector<128x4xbf16>
    %c0_43 = arith.constant 0 : index
    %c32 = arith.constant 32 : index
    %26 = vector.load %arg15[%c0_43, %c32] : memref<128x36xbf16, #tpu.memory_space<vmem>>, vector<128x4xbf16>
    tpu.vector_store %arg15[%c0_43, %c32], %25 {strides = array<i32>} : memref<128x36xbf16, #tpu.memory_space<vmem>>, vector<128x4xbf16>,
    %c0_44 = arith.constant 0 : index
    %c0_45 = arith.constant 0 : index
    %27 = vector.load %arg15[%c0_44, %c0_45] : memref<128x36xbf16, #tpu.memory_space<vmem>>, vector<128x36xbf16>
    %c0_46 = arith.constant 0 : index
    %c0_47 = arith.constant 0 : index
    %28 = vector.load %arg5[%c0_46, %c0_47] : memref<36x128xbf16, #tpu.memory_space<vmem>>, vector<36x128xbf16>
    %cst = arith.constant dense<0.000000e+00> : vector<128x128xf32>
    %29 = tpu.matmul %27, %28, %cst {dimension_numbers = #tpu.dot_dimension_numbers<[1], [0], [0], [1], [0, 0, 1, 1], [], []>} : vector<128x36xbf16>, vector<36x128xbf16>, vector<128x128xf32> -> vector<128x128xf32>
    %c0_48 = arith.constant 0 : index
    %c0_49 = arith.constant 0 : index
    %30 = vector.load %arg6[%c0_48, %c0_49] : memref<1x128xf32, #tpu.memory_space<vmem>>, vector<1x128xf32>
    %c0_50 = arith.constant 0 : index
    %c0_51 = arith.constant 0 : index
    %31 = vector.load %arg7[%c0_50, %c0_51] : memref<1x128xf32, #tpu.memory_space<vmem>>, vector<1x128xf32>
    %cst_52 = arith.constant dense<0.000000e+00> : vector<128xf32>
    %32 = vector.multi_reduction <add>, %29, %cst_52 [0] : vector<128x128xf32> to vector<128xf32>
    %33 = vector.shape_cast %32 : vector<128xf32> to vector<1x128xf32>
    %34 = arith.mulf %29, %29 : vector<128x128xf32>
    %cst_53 = arith.constant dense<0.000000e+00> : vector<128xf32>
    %35 = vector.multi_reduction <add>, %34, %cst_53 [0] : vector<128x128xf32> to vector<128xf32>
    %36 = vector.shape_cast %35 : vector<128xf32> to vector<1x128xf32>
    %cst_54 = arith.constant 7.812500e-03 : f32
    %37 = vector.broadcast %cst_54 : f32 to vector<1x128xf32>
    %38 = arith.mulf %33, %37 : vector<1x128xf32>
    %cst_55 = arith.constant 7.812500e-03 : f32
    %39 = vector.broadcast %cst_55 : f32 to vector<1x128xf32>
    %40 = arith.mulf %36, %39 : vector<1x128xf32>
    %41 = arith.mulf %38, %38 : vector<1x128xf32>
    %42 = arith.subf %40, %41 : vector<1x128xf32>
    %cst_56 = arith.constant 0.000000e+00 : f32
    %43 = vector.broadcast %cst_56 : f32 to vector<1x128xf32>
    %44 = arith.maximumf %42, %43 : vector<1x128xf32>
    %45 = vector.broadcast %38 : vector<1x128xf32> to vector<128x128xf32>
    %46 = arith.subf %29, %45 : vector<128x128xf32>
    %cst_57 = arith.constant 9.99999974E-6 : f32
    %47 = vector.broadcast %cst_57 : f32 to vector<1x128xf32>
    %48 = arith.addf %44, %47 : vector<1x128xf32>
    %49 = math.rsqrt %48 : vector<1x128xf32>
    %50 = vector.broadcast %49 : vector<1x128xf32> to vector<128x128xf32>
    %51 = arith.mulf %46, %50 : vector<128x128xf32>
    %52 = vector.broadcast %30 : vector<1x128xf32> to vector<128x128xf32>
    %53 = arith.mulf %51, %52 : vector<128x128xf32>
    %54 = vector.broadcast %31 : vector<1x128xf32> to vector<128x128xf32>
    %55 = arith.addf %53, %54 : vector<128x128xf32>
    %cst_58 = arith.constant 0.000000e+00 : f32
    %56 = vector.broadcast %cst_58 : f32 to vector<128x128xf32>
    %57 = arith.maximumf %55, %56 : vector<128x128xf32>
    %cst_59 = arith.constant 0.000000e+00 : f32
    %58 = vector.broadcast %cst_59 : f32 to vector<2x1x16x128xf32>
    %c0_60 = arith.constant 0 : index
    %c0_61 = arith.constant 0 : index
    %c0_62 = arith.constant 0 : index
    %c0_63 = arith.constant 0 : index
    %59 = vector.load %arg17[%c0_60, %c0_61, %c0_62, %c0_63] : memref<2x10x16x128xf32, #tpu.memory_space<vmem>>, vector<2x1x16x128xf32>
    tpu.vector_store %arg17[%c0_60, %c0_61, %c0_62, %c0_63], %58 {strides = array<i32>} : memref<2x10x16x128xf32, #tpu.memory_space<vmem>>, vector<2x1x16x128xf32>,
    %cst_64 = arith.constant 0.000000e+00 : f32
    %60 = vector.broadcast %cst_64 : f32 to vector<2x1x16x128xf32>
    %c0_65 = arith.constant 0 : index
    %c9 = arith.constant 9 : index
    %c0_66 = arith.constant 0 : index
    %c0_67 = arith.constant 0 : index
    %61 = vector.load %arg17[%c0_65, %c9, %c0_66, %c0_67] : memref<2x10x16x128xf32, #tpu.memory_space<vmem>>, vector<2x1x16x128xf32>
    tpu.vector_store %arg17[%c0_65, %c9, %c0_66, %c0_67], %60 {strides = array<i32>} : memref<2x10x16x128xf32, #tpu.memory_space<vmem>>, vector<2x1x16x128xf32>,
    %cst_68 = arith.constant 0.000000e+00 : f32
    %62 = vector.broadcast %cst_68 : f32 to vector<2x8x1x128xf32>
    %c0_69 = arith.constant 0 : index
    %c1_70 = arith.constant 1 : index
    %c0_71 = arith.constant 0 : index
    %c0_72 = arith.constant 0 : index
    %63 = vector.load %arg17[%c0_69, %c1_70, %c0_71, %c0_72] : memref<2x10x16x128xf32, #tpu.memory_space<vmem>>, vector<2x8x1x128xf32>
    tpu.vector_store %arg17[%c0_69, %c1_70, %c0_71, %c0_72], %62 {strides = array<i32>} : memref<2x10x16x128xf32, #tpu.memory_space<vmem>>, vector<2x8x1x128xf32>,
    %cst_73 = arith.constant 0.000000e+00 : f32
    %64 = vector.broadcast %cst_73 : f32 to vector<2x8x1x128xf32>
    %c0_74 = arith.constant 0 : index
    %c1_75 = arith.constant 1 : index
    %c9_76 = arith.constant 9 : index
    %c0_77 = arith.constant 0 : index
    %65 = vector.load %arg17[%c0_74, %c1_75, %c9_76, %c0_77] : memref<2x10x16x128xf32, #tpu.memory_space<vmem>>, vector<2x8x1x128xf32>
    tpu.vector_store %arg17[%c0_74, %c1_75, %c9_76, %c0_77], %64 {strides = array<i32>} : memref<2x10x16x128xf32, #tpu.memory_space<vmem>>, vector<2x8x1x128xf32>,
    %66 = vector.shape_cast %57 : vector<128x128xf32> to vector<2x8x8x128xf32>
    %c0_78 = arith.constant 0 : index
    %c1_79 = arith.constant 1 : index
    %c1_80 = arith.constant 1 : index
    %c0_81 = arith.constant 0 : index
    %67 = vector.load %arg17[%c0_78, %c1_79, %c1_80, %c0_81] : memref<2x10x16x128xf32, #tpu.memory_space<vmem>>, vector<2x8x8x128xf32>
    tpu.vector_store %arg17[%c0_78, %c1_79, %c1_80, %c0_81], %66 {strides = array<i32>} : memref<2x10x16x128xf32, #tpu.memory_space<vmem>>, vector<2x8x8x128xf32>,
    %c0_82 = arith.constant 0 : index
    %c0_83 = arith.constant 0 : index
    %c0_84 = arith.constant 0 : index
    %c0_85 = arith.constant 0 : index
    %68 = vector.load %arg17[%c0_82, %c0_83, %c0_84, %c0_85] : memref<2x10x16x128xf32, #tpu.memory_space<vmem>>, vector<2x8x8x128xf32>
    %69 = vector.shape_cast %68 : vector<2x8x8x128xf32> to vector<128x128xf32>
    %70 = arith.truncf %69 : vector<128x128xf32> to vector<128x128xbf16>
    %c0_86 = arith.constant 0 : index
    %c0_87 = arith.constant 0 : index
    %71 = vector.load %arg16[%c0_86, %c0_87] : memref<128x1152xbf16, #tpu.memory_space<vmem>>, vector<128x128xbf16>
    tpu.vector_store %arg16[%c0_86, %c0_87], %70 {strides = array<i32>} : memref<128x1152xbf16, #tpu.memory_space<vmem>>, vector<128x128xbf16>,
    %c0_88 = arith.constant 0 : index
    %c0_89 = arith.constant 0 : index
    %c1_90 = arith.constant 1 : index
    %c0_91 = arith.constant 0 : index
    %72 = vector.load %arg17[%c0_88, %c0_89, %c1_90, %c0_91] : memref<2x10x16x128xf32, #tpu.memory_space<vmem>>, vector<2x8x8x128xf32>
    %73 = vector.shape_cast %72 : vector<2x8x8x128xf32> to vector<128x128xf32>
    %74 = arith.truncf %73 : vector<128x128xf32> to vector<128x128xbf16>
    %c0_92 = arith.constant 0 : index
    %c128 = arith.constant 128 : index
    %75 = vector.load %arg16[%c0_92, %c128] : memref<128x1152xbf16, #tpu.memory_space<vmem>>, vector<128x128xbf16>
    tpu.vector_store %arg16[%c0_92, %c128], %74 {strides = array<i32>} : memref<128x1152xbf16, #tpu.memory_space<vmem>>, vector<128x128xbf16>,
    %c0_93 = arith.constant 0 : index
    %c0_94 = arith.constant 0 : index
    %c2 = arith.constant 2 : index
    %c0_95 = arith.constant 0 : index
    %76 = vector.load %arg17[%c0_93, %c0_94, %c2, %c0_95] : memref<2x10x16x128xf32, #tpu.memory_space<vmem>>, vector<2x8x8x128xf32>
    %77 = vector.shape_cast %76 : vector<2x8x8x128xf32> to vector<128x128xf32>
    %78 = arith.truncf %77 : vector<128x128xf32> to vector<128x128xbf16>
    %c0_96 = arith.constant 0 : index
    %c256 = arith.constant 256 : index
    %79 = vector.load %arg16[%c0_96, %c256] : memref<128x1152xbf16, #tpu.memory_space<vmem>>, vector<128x128xbf16>
    tpu.vector_store %arg16[%c0_96, %c256], %78 {strides = array<i32>} : memref<128x1152xbf16, #tpu.memory_space<vmem>>, vector<128x128xbf16>,
    %c0_97 = arith.constant 0 : index
    %c1_98 = arith.constant 1 : index
    %c0_99 = arith.constant 0 : index
    %c0_100 = arith.constant 0 : index
    %80 = vector.load %arg17[%c0_97, %c1_98, %c0_99, %c0_100] : memref<2x10x16x128xf32, #tpu.memory_space<vmem>>, vector<2x8x8x128xf32>
    %81 = vector.shape_cast %80 : vector<2x8x8x128xf32> to vector<128x128xf32>
    %82 = arith.truncf %81 : vector<128x128xf32> to vector<128x128xbf16>
    %c0_101 = arith.constant 0 : index
    %c384 = arith.constant 384 : index
    %83 = vector.load %arg16[%c0_101, %c384] : memref<128x1152xbf16, #tpu.memory_space<vmem>>, vector<128x128xbf16>
    tpu.vector_store %arg16[%c0_101, %c384], %82 {strides = array<i32>} : memref<128x1152xbf16, #tpu.memory_space<vmem>>, vector<128x128xbf16>,
    %c0_102 = arith.constant 0 : index
    %c1_103 = arith.constant 1 : index
    %c1_104 = arith.constant 1 : index
    %c0_105 = arith.constant 0 : index
    %84 = vector.load %arg17[%c0_102, %c1_103, %c1_104, %c0_105] : memref<2x10x16x128xf32, #tpu.memory_space<vmem>>, vector<2x8x8x128xf32>
    %85 = vector.shape_cast %84 : vector<2x8x8x128xf32> to vector<128x128xf32>
    %86 = arith.truncf %85 : vector<128x128xf32> to vector<128x128xbf16>
    %c0_106 = arith.constant 0 : index
    %c512 = arith.constant 512 : index
    %87 = vector.load %arg16[%c0_106, %c512] : memref<128x1152xbf16, #tpu.memory_space<vmem>>, vector<128x128xbf16>
    tpu.vector_store %arg16[%c0_106, %c512], %86 {strides = array<i32>} : memref<128x1152xbf16, #tpu.memory_space<vmem>>, vector<128x128xbf16>,
    %c0_107 = arith.constant 0 : index
    %c1_108 = arith.constant 1 : index
    %c2_109 = arith.constant 2 : index
    %c0_110 = arith.constant 0 : index
    %88 = vector.load %arg17[%c0_107, %c1_108, %c2_109, %c0_110] : memref<2x10x16x128xf32, #tpu.memory_space<vmem>>, vector<2x8x8x128xf32>
    %89 = vector.shape_cast %88 : vector<2x8x8x128xf32> to vector<128x128xf32>
    %90 = arith.truncf %89 : vector<128x128xf32> to vector<128x128xbf16>
    %c0_111 = arith.constant 0 : index
    %c640 = arith.constant 640 : index
    %91 = vector.load %arg16[%c0_111, %c640] : memref<128x1152xbf16, #tpu.memory_space<vmem>>, vector<128x128xbf16>
    tpu.vector_store %arg16[%c0_111, %c640], %90 {strides = array<i32>} : memref<128x1152xbf16, #tpu.memory_space<vmem>>, vector<128x128xbf16>,
    %c0_112 = arith.constant 0 : index
    %c2_113 = arith.constant 2 : index
    %c0_114 = arith.constant 0 : index
    %c0_115 = arith.constant 0 : index
    %92 = vector.load %arg17[%c0_112, %c2_113, %c0_114, %c0_115] : memref<2x10x16x128xf32, #tpu.memory_space<vmem>>, vector<2x8x8x128xf32>
    %93 = vector.shape_cast %92 : vector<2x8x8x128xf32> to vector<128x128xf32>
    %94 = arith.truncf %93 : vector<128x128xf32> to vector<128x128xbf16>
    %c0_116 = arith.constant 0 : index
    %c768 = arith.constant 768 : index
    %95 = vector.load %arg16[%c0_116, %c768] : memref<128x1152xbf16, #tpu.memory_space<vmem>>, vector<128x128xbf16>
    tpu.vector_store %arg16[%c0_116, %c768], %94 {strides = array<i32>} : memref<128x1152xbf16, #tpu.memory_space<vmem>>, vector<128x128xbf16>,
    %c0_117 = arith.constant 0 : index
    %c2_118 = arith.constant 2 : index
    %c1_119 = arith.constant 1 : index
    %c0_120 = arith.constant 0 : index
    %96 = vector.load %arg17[%c0_117, %c2_118, %c1_119, %c0_120] : memref<2x10x16x128xf32, #tpu.memory_space<vmem>>, vector<2x8x8x128xf32>
    %97 = vector.shape_cast %96 : vector<2x8x8x128xf32> to vector<128x128xf32>
    %98 = arith.truncf %97 : vector<128x128xf32> to vector<128x128xbf16>
    %c0_121 = arith.constant 0 : index
    %c896 = arith.constant 896 : index
    %99 = vector.load %arg16[%c0_121, %c896] : memref<128x1152xbf16, #tpu.memory_space<vmem>>, vector<128x128xbf16>
    tpu.vector_store %arg16[%c0_121, %c896], %98 {strides = array<i32>} : memref<128x1152xbf16, #tpu.memory_space<vmem>>, vector<128x128xbf16>,
    %c0_122 = arith.constant 0 : index
    %c2_123 = arith.constant 2 : index
    %c2_124 = arith.constant 2 : index
    %c0_125 = arith.constant 0 : index
    %100 = vector.load %arg17[%c0_122, %c2_123, %c2_124, %c0_125] : memref<2x10x16x128xf32, #tpu.memory_space<vmem>>, vector<2x8x8x128xf32>
    %101 = vector.shape_cast %100 : vector<2x8x8x128xf32> to vector<128x128xf32>
    %102 = arith.truncf %101 : vector<128x128xf32> to vector<128x128xbf16>
    %c0_126 = arith.constant 0 : index
    %c1024 = arith.constant 1024 : index
    %103 = vector.load %arg16[%c0_126, %c1024] : memref<128x1152xbf16, #tpu.memory_space<vmem>>, vector<128x128xbf16>
    tpu.vector_store %arg16[%c0_126, %c1024], %102 {strides = array<i32>} : memref<128x1152xbf16, #tpu.memory_space<vmem>>, vector<128x128xbf16>,
    %c0_127 = arith.constant 0 : index
    %c0_128 = arith.constant 0 : index
    %104 = vector.load %arg16[%c0_127, %c0_128] : memref<128x1152xbf16, #tpu.memory_space<vmem>>, vector<128x1152xbf16>
    %c0_129 = arith.constant 0 : index
    %c0_130 = arith.constant 0 : index
    %105 = vector.load %arg8[%c0_129, %c0_130] : memref<1152x128xbf16, #tpu.memory_space<vmem>>, vector<1152x128xbf16>
    %cst_131 = arith.constant dense<0.000000e+00> : vector<128x128xf32>
    %106 = tpu.matmul %104, %105, %cst_131 {dimension_numbers = #tpu.dot_dimension_numbers<[1], [0], [0], [1], [0, 0, 1, 1], [], []>} : vector<128x1152xbf16>, vector<1152x128xbf16>, vector<128x128xf32> -> vector<128x128xf32>
    %c0_132 = arith.constant 0 : index
    %c0_133 = arith.constant 0 : index
    %107 = vector.load %arg9[%c0_132, %c0_133] : memref<1x128xf32, #tpu.memory_space<vmem>>, vector<1x128xf32>
    %c0_134 = arith.constant 0 : index
    %c0_135 = arith.constant 0 : index
    %108 = vector.load %arg10[%c0_134, %c0_135] : memref<1x128xf32, #tpu.memory_space<vmem>>, vector<1x128xf32>
    %cst_136 = arith.constant dense<0.000000e+00> : vector<128xf32>
    %109 = vector.multi_reduction <add>, %106, %cst_136 [0] : vector<128x128xf32> to vector<128xf32>
    %110 = vector.shape_cast %109 : vector<128xf32> to vector<1x128xf32>
    %111 = arith.mulf %106, %106 : vector<128x128xf32>
    %cst_137 = arith.constant dense<0.000000e+00> : vector<128xf32>
    %112 = vector.multi_reduction <add>, %111, %cst_137 [0] : vector<128x128xf32> to vector<128xf32>
    %113 = vector.shape_cast %112 : vector<128xf32> to vector<1x128xf32>
    %cst_138 = arith.constant 7.812500e-03 : f32
    %114 = vector.broadcast %cst_138 : f32 to vector<1x128xf32>
    %115 = arith.mulf %110, %114 : vector<1x128xf32>
    %cst_139 = arith.constant 7.812500e-03 : f32
    %116 = vector.broadcast %cst_139 : f32 to vector<1x128xf32>
    %117 = arith.mulf %113, %116 : vector<1x128xf32>
    %118 = arith.mulf %115, %115 : vector<1x128xf32>
    %119 = arith.subf %117, %118 : vector<1x128xf32>
    %cst_140 = arith.constant 0.000000e+00 : f32
    %120 = vector.broadcast %cst_140 : f32 to vector<1x128xf32>
    %121 = arith.maximumf %119, %120 : vector<1x128xf32>
    %122 = vector.broadcast %115 : vector<1x128xf32> to vector<128x128xf32>
    %123 = arith.subf %106, %122 : vector<128x128xf32>
    %cst_141 = arith.constant 9.99999974E-6 : f32
    %124 = vector.broadcast %cst_141 : f32 to vector<1x128xf32>
    %125 = arith.addf %121, %124 : vector<1x128xf32>
    %126 = math.rsqrt %125 : vector<1x128xf32>
    %127 = vector.broadcast %126 : vector<1x128xf32> to vector<128x128xf32>
    %128 = arith.mulf %123, %127 : vector<128x128xf32>
    %129 = vector.broadcast %107 : vector<1x128xf32> to vector<128x128xf32>
    %130 = arith.mulf %128, %129 : vector<128x128xf32>
    %131 = vector.broadcast %108 : vector<1x128xf32> to vector<128x128xf32>
    %132 = arith.addf %130, %131 : vector<128x128xf32>
    %c0_142 = arith.constant 0 : index
    %c0_143 = arith.constant 0 : index
    %c0_144 = arith.constant 0 : index
    %c0_145 = arith.constant 0 : index
    %133 = vector.load %arg4[%c0_142, %c0_143, %c0_144, %c0_145] : memref<2x9x9x4xbf16, #tpu.memory_space<vmem>>, vector<2x8x8x4xbf16>
    %134 = vector.shape_cast %133 : vector<2x8x8x4xbf16> to vector<128x4xbf16>
    %c0_146 = arith.constant 0 : index
    %c0_147 = arith.constant 0 : index
    %135 = vector.load %arg11[%c0_146, %c0_147] : memref<4x128xbf16, #tpu.memory_space<vmem>>, vector<4x128xbf16>
    %cst_148 = arith.constant dense<0.000000e+00> : vector<128x128xf32>
    %136 = tpu.matmul %134, %135, %cst_148 {dimension_numbers = #tpu.dot_dimension_numbers<[1], [0], [0], [1], [0, 0, 1, 1], [], []>} : vector<128x4xbf16>, vector<4x128xbf16>, vector<128x128xf32> -> vector<128x128xf32>
    %c0_149 = arith.constant 0 : index
    %c0_150 = arith.constant 0 : index
    %137 = vector.load %arg12[%c0_149, %c0_150] : memref<1x128xf32, #tpu.memory_space<vmem>>, vector<1x128xf32>
    %c0_151 = arith.constant 0 : index
    %c0_152 = arith.constant 0 : index
    %138 = vector.load %arg13[%c0_151, %c0_152] : memref<1x128xf32, #tpu.memory_space<vmem>>, vector<1x128xf32>
    %cst_153 = arith.constant dense<0.000000e+00> : vector<128xf32>
    %139 = vector.multi_reduction <add>, %136, %cst_153 [0] : vector<128x128xf32> to vector<128xf32>
    %140 = vector.shape_cast %139 : vector<128xf32> to vector<1x128xf32>
    %141 = arith.mulf %136, %136 : vector<128x128xf32>
    %cst_154 = arith.constant dense<0.000000e+00> : vector<128xf32>
    %142 = vector.multi_reduction <add>, %141, %cst_154 [0] : vector<128x128xf32> to vector<128xf32>
    %143 = vector.shape_cast %142 : vector<128xf32> to vector<1x128xf32>
    %cst_155 = arith.constant 7.812500e-03 : f32
    %144 = vector.broadcast %cst_155 : f32 to vector<1x128xf32>
    %145 = arith.mulf %140, %144 : vector<1x128xf32>
    %cst_156 = arith.constant 7.812500e-03 : f32
    %146 = vector.broadcast %cst_156 : f32 to vector<1x128xf32>
    %147 = arith.mulf %143, %146 : vector<1x128xf32>
    %148 = arith.mulf %145, %145 : vector<1x128xf32>
    %149 = arith.subf %147, %148 : vector<1x128xf32>
    %cst_157 = arith.constant 0.000000e+00 : f32
    %150 = vector.broadcast %cst_157 : f32 to vector<1x128xf32>
    %151 = arith.maximumf %149, %150 : vector<1x128xf32>
    %152 = vector.broadcast %145 : vector<1x128xf32> to vector<128x128xf32>
    %153 = arith.subf %136, %152 : vector<128x128xf32>
    %cst_158 = arith.constant 9.99999974E-6 : f32
    %154 = vector.broadcast %cst_158 : f32 to vector<1x128xf32>
    %155 = arith.addf %151, %154 : vector<1x128xf32>
    %156 = math.rsqrt %155 : vector<1x128xf32>
    %157 = vector.broadcast %156 : vector<1x128xf32> to vector<128x128xf32>
    %158 = arith.mulf %153, %157 : vector<128x128xf32>
    %159 = vector.broadcast %137 : vector<1x128xf32> to vector<128x128xf32>
    %160 = arith.mulf %158, %159 : vector<128x128xf32>
    %161 = vector.broadcast %138 : vector<1x128xf32> to vector<128x128xf32>
    %162 = arith.addf %160, %161 : vector<128x128xf32>
    %163 = arith.addf %132, %162 : vector<128x128xf32>
    %cst_159 = arith.constant 0.000000e+00 : f32
    %164 = vector.broadcast %cst_159 : f32 to vector<128x128xf32>
    %165 = arith.maximumf %163, %164 : vector<128x128xf32>
    %166 = arith.truncf %165 : vector<128x128xf32> to vector<128x128xbf16>
    %c0_160 = arith.constant 0 : index
    %c0_161 = arith.constant 0 : index
    %167 = vector.load %arg14[%c0_160, %c0_161] : memref<128x128xbf16, #tpu.memory_space<vmem>>, vector<128x128xbf16>
    tpu.vector_store %arg14[%c0_160, %c0_161], %166 {strides = array<i32>} : memref<128x128xbf16, #tpu.memory_space<vmem>>, vector<128x128xbf16>,
    return
  }
  func.func @transform_0(%arg0: i32) -> (i32, i32, i32, i32) {
    %c0_i32 = arith.constant 0 : i32
    %c0_i32_0 = arith.constant 0 : i32
    %c0_i32_1 = arith.constant 0 : i32
    %c0_i32_2 = arith.constant 0 : i32
    %c0_i32_3 = arith.constant 0 : i32
    return %c0_i32, %c0_i32_0, %c0_i32_1, %c0_i32_2 : i32, i32, i32, i32
  }
  func.func @transform_1(%arg0: i32) -> (i32, i32, i32, i32) {
    %c0_i32 = arith.constant 0 : i32
    %c0_i32_0 = arith.constant 0 : i32
    %c0_i32_1 = arith.constant 0 : i32
    %c0_i32_2 = arith.constant 0 : i32
    %c0_i32_3 = arith.constant 0 : i32
    return %c0_i32, %c0_i32_0, %c0_i32_1, %c0_i32_2 : i32, i32, i32, i32
  }
  func.func @transform_2(%arg0: i32) -> (i32, i32, i32, i32) {
    %c0_i32 = arith.constant 0 : i32
    %c0_i32_0 = arith.constant 0 : i32
    %c0_i32_1 = arith.constant 0 : i32
    %c0_i32_2 = arith.constant 0 : i32
    %c0_i32_3 = arith.constant 0 : i32
    return %c0_i32, %c0_i32_0, %c0_i32_1, %c0_i32_2 : i32, i32, i32, i32
  }
  func.func @transform_3(%arg0: i32) -> (i32, i32, i32, i32) {
    %c0_i32 = arith.constant 0 : i32
    %c0_i32_0 = arith.constant 0 : i32
    %c0_i32_1 = arith.constant 0 : i32
    %c0_i32_2 = arith.constant 0 : i32
    %c0_i32_3 = arith.constant 0 : i32
    return %c0_i32, %c0_i32_0, %c0_i32_1, %c0_i32_2 : i32, i32, i32, i32
  }
  func.func @transform_4(%arg0: i32) -> (i32, i32) {
    %c0_i32 = arith.constant 0 : i32
    %c0_i32_0 = arith.constant 0 : i32
    %c0_i32_1 = arith.constant 0 : i32
    return %c0_i32, %c0_i32_0 : i32, i32
  }
  func.func @transform_5(%arg0: i32) -> (i32, i32) {
    %c0_i32 = arith.constant 0 : i32
    %c0_i32_0 = arith.constant 0 : i32
    %c0_i32_1 = arith.constant 0 : i32
    return %c0_i32, %c0_i32_0 : i32, i32
  }
  func.func @transform_6(%arg0: i32) -> (i32, i32) {
    %c0_i32 = arith.constant 0 : i32
    %c0_i32_0 = arith.constant 0 : i32
    %c0_i32_1 = arith.constant 0 : i32
    return %c0_i32, %c0_i32_0 : i32, i32
  }
  func.func @transform_7(%arg0: i32) -> (i32, i32) {
    %c0_i32 = arith.constant 0 : i32
    %c0_i32_0 = arith.constant 0 : i32
    %c0_i32_1 = arith.constant 0 : i32
    return %c0_i32, %c0_i32_0 : i32, i32
  }
  func.func @transform_8(%arg0: i32) -> (i32, i32) {
    %c0_i32 = arith.constant 0 : i32
    %c0_i32_0 = arith.constant 0 : i32
    %c0_i32_1 = arith.constant 0 : i32
    return %c0_i32, %c0_i32_0 : i32, i32
  }
  func.func @transform_9(%arg0: i32) -> (i32, i32) {
    %c0_i32 = arith.constant 0 : i32
    %c0_i32_0 = arith.constant 0 : i32
    %c0_i32_1 = arith.constant 0 : i32
    return %c0_i32, %c0_i32_0 : i32, i32
  }
  func.func @transform_10(%arg0: i32) -> (i32, i32) {
    %c0_i32 = arith.constant 0 : i32
    %c0_i32_0 = arith.constant 0 : i32
    %c0_i32_1 = arith.constant 0 : i32
    return %c0_i32, %c0_i32_0 : i32, i32
  }
  func.func @transform_11(%arg0: i32) -> (i32, i32) {
    %c0_i32 = arith.constant 0 : i32
    %c0_i32_0 = arith.constant 0 : i32
    %c0_i32_1 = arith.constant 0 : i32
    return %c0_i32, %c0_i32_0 : i32, i32
  }
  func.func @transform_12(%arg0: i32) -> (i32, i32) {
    %c0_i32 = arith.constant 0 : i32
    %c0_i32_0 = arith.constant 0 : i32
    %c0_i32_1 = arith.constant 0 : i32
    return %c0_i32, %c0_i32_0 : i32, i32
  }
  func.func @transform_13(%arg0: i32) -> (i32, i32) {
    %c0_i32 = arith.constant 0 : i32
    %c0_i32_0 = arith.constant 0 : i32
    %c0_i32_1 = arith.constant 0 : i32
    return %c0_i32, %c0_i32_0 : i32, i32
  }
}

</mosaic_0001>

<llo_original>
// kernel: tpu_custom_call.1
$region0: #{tpu_custom_call.1}
  #allocation0 [shape = 'u32[]', space=smem, size = 0x4, offset = 0x4, fixed_abs, tag = 'smem constant byte address 0x4 - core index']
  #allocation1 [shape = 'u32[144,128]{1,0:T(1,128)}', space=vmem, size = 0x12000, scoped, tag = 'internal scratch']
  #allocation2 [shape = 'bf16[128,36]{1,0:T(16,128)(2,1)}', space=vmem, size = 0x8000, scoped, tag = 'scratch operand']
  #allocation3 [shape = 'bf16[128,1152]{1,0:T(16,128)(2,1)}', space=vmem, size = 0x48000, scoped, tag = 'scratch operand']
  #allocation4 [shape = 'f32[2,10,16,128]{3,2,1,0:T(8,128)}', space=vmem, size = 0x28000, scoped, tag = 'scratch operand']
  %s0 = inlined_call_operand.vmem [shape: bf16[2,9,9,4], index: 0, kind: input, shape index: {}]
  %s1 = inlined_call_operand.vmem [shape: bf16[2,9,9,4], index: 1, kind: input, shape index: {}]
  %s2 = inlined_call_operand.vmem [shape: bf16[2,9,9,4], index: 2, kind: input, shape index: {}]
  %s3 = inlined_call_operand.vmem [shape: bf16[2,9,9,4], index: 3, kind: input, shape index: {}]
  %s4 = inlined_call_operand.vmem [shape: bf16[36,128], index: 4, kind: input, shape index: {}]
  %s5 = inlined_call_operand.vmem [shape: f32[1,128], index: 5, kind: input, shape index: {}]
  %s6 = inlined_call_operand.vmem [shape: f32[1,128], index: 6, kind: input, shape index: {}]
  %s7 = inlined_call_operand.vmem [shape: bf16[1152,128], index: 7, kind: input, shape index: {}]
  %s8 = inlined_call_operand.vmem [shape: f32[1,128], index: 8, kind: input, shape index: {}]
  %s9 = inlined_call_operand.vmem [shape: f32[1,128], index: 9, kind: input, shape index: {}]
  %s10 = inlined_call_operand.vmem [shape: bf16[4,128], index: 10, kind: input, shape index: {}]
  %s11 = inlined_call_operand.vmem [shape: f32[1,128], index: 11, kind: input, shape index: {}]
  %s12 = inlined_call_operand.vmem [shape: f32[1,128], index: 12, kind: input, shape index: {}]
  %s13 = inlined_call_operand.hbm [shape: bf16[128,128], index: 13, kind: output, shape index: {}]
  %s14 = sld [smem:[#allocation0]]
  $region62: #{tpu_custom_call.1} parent=0
    _
  %s16 = ssub.s32 1, %s14
  %s17 = scalar_select 0, %s16, %s14
  $region1: #{tpu_custom_call.1} parent=0
    #allocation5 [shape = 'u8[32768]{0}', space=vmem, size = 0x8000, scoped, tag = 'output window, operand 0, single buffered']
    #allocation6 [shape = 's32[1]{0}', space=sflag, size = 0x4, scoped, tag = 'scoped memory for tpu_custom_call.1']
    %18 = vsyncpa [#allocation6], 0
    // Predicated region
    $region2: #{tpu_custom_call.1} parent=1 // pred_check
      _
    $region3: #{tpu_custom_call.1} parent=1 // pred_check_branch
      %20 = sbr.rel (0) target = $region5
    $region4: #{tpu_custom_call.1} parent=1 // pred_region
      _
    $region5: #{tpu_custom_call.1} parent=1 // pred_fallthru
      _
    // Predicated region
    $region6: #{tpu_custom_call.1} parent=1 // pred_check
      _
    $region7: #{tpu_custom_call.1} parent=1 // pred_check_branch
      %22 = sbr.rel (0) target = $region9
    $region8: #{tpu_custom_call.1} parent=1 // pred_region
      _
    $region9: #{tpu_custom_call.1} parent=1 // pred_fallthru
      _
    // Predicated region
    $region10: #{tpu_custom_call.1} parent=1 // pred_check
      _
    $region11: #{tpu_custom_call.1} parent=1 // pred_check_branch
      %24 = sbr.rel (0) target = $region13
    $region12: #{tpu_custom_call.1} parent=1 // pred_region
      _
    $region13: #{tpu_custom_call.1} parent=1 // pred_fallthru
      _
    // Predicated region
    $region14: #{tpu_custom_call.1} parent=1 // pred_check
      _
    $region15: #{tpu_custom_call.1} parent=1 // pred_check_branch
      %26 = sbr.rel (0) target = $region17
    $region16: #{tpu_custom_call.1} parent=1 // pred_region
      _
    $region17: #{tpu_custom_call.1} parent=1 // pred_fallthru
      _
    // Predicated region
    $region18: #{tpu_custom_call.1} parent=1 // pred_check
      _
    $region19: #{tpu_custom_call.1} parent=1 // pred_check_branch
      %28 = sbr.rel (0) target = $region21
    $region20: #{tpu_custom_call.1} parent=1 // pred_region
      _
    $region21: #{tpu_custom_call.1} parent=1 // pred_fallthru
      _
    // Predicated region
    $region22: #{tpu_custom_call.1} parent=1 // pred_check
      _
    $region23: #{tpu_custom_call.1} parent=1 // pred_check_branch
      %30 = sbr.rel (0) target = $region25
    $region24: #{tpu_custom_call.1} parent=1 // pred_region
      _
    $region25: #{tpu_custom_call.1} parent=1 // pred_fallthru
      _
    // Predicated region
    $region26: #{tpu_custom_call.1} parent=1 // pred_check
      _
    $region27: #{tpu_custom_call.1} parent=1 // pred_check_branch
      %32 = sbr.rel (0) target = $region29
    $region28: #{tpu_custom_call.1} parent=1 // pred_region
      _
    $region29: #{tpu_custom_call.1} parent=1 // pred_fallthru
      _
    // Predicated region
    $region30: #{tpu_custom_call.1} parent=1 // pred_check
      _
    $region31: #{tpu_custom_call.1} parent=1 // pred_check_branch
      %34 = sbr.rel (0) target = $region33
    $region32: #{tpu_custom_call.1} parent=1 // pred_region
      _
    $region33: #{tpu_custom_call.1} parent=1 // pred_fallthru
      _
    // Predicated region
    $region34: #{tpu_custom_call.1} parent=1 // pred_check
      _
    $region35: #{tpu_custom_call.1} parent=1 // pred_check_branch
      %36 = sbr.rel (0) target = $region37
    $region36: #{tpu_custom_call.1} parent=1 // pred_region
      _
    $region37: #{tpu_custom_call.1} parent=1 // pred_fallthru
      _
    // Predicated region
    $region38: #{tpu_custom_call.1} parent=1 // pred_check
      _
    $region39: #{tpu_custom_call.1} parent=1 // pred_check_branch
      %38 = sbr.rel (0) target = $region41
    $region40: #{tpu_custom_call.1} parent=1 // pred_region
      _
    $region41: #{tpu_custom_call.1} parent=1 // pred_fallthru
      _
    // Predicated region
    $region42: #{tpu_custom_call.1} parent=1 // pred_check
      _
    $region43: #{tpu_custom_call.1} parent=1 // pred_check_branch
      %40 = sbr.rel (0) target = $region45
    $region44: #{tpu_custom_call.1} parent=1 // pred_region
      _
    $region45: #{tpu_custom_call.1} parent=1 // pred_fallthru
      _
    // Predicated region
    $region46: #{tpu_custom_call.1} parent=1 // pred_check
      _
    $region47: #{tpu_custom_call.1} parent=1 // pred_check_branch
      %42 = sbr.rel (0) target = $region49
    $region48: #{tpu_custom_call.1} parent=1 // pred_region
      _
    $region49: #{tpu_custom_call.1} parent=1 // pred_fallthru
      _
    // Predicated region
    $region50: #{tpu_custom_call.1} parent=1 // pred_check
      _
    $region51: #{tpu_custom_call.1} parent=1 // pred_check_branch
      %44 = sbr.rel (0) target = $region53
    $region52: #{tpu_custom_call.1} parent=1 // pred_region
      _
    $region53: #{tpu_custom_call.1} parent=1 // pred_fallthru
      _
    %v46 = vld [vmem:[%s0] sm:$0xf]
    %v47 = vld [vmem:[%s0 + $0x8] sm:$0xf]
    %v48 = vld [vmem:[%s0 + $0x10] sm:$0xf]
    %v49 = vld [vmem:[%s0 + $0x18] sm:$0xf]
    %v50 = vld [vmem:[%s0 + $0x20] sm:$0xf]
    %v51 = vld [vmem:[%s0 + $0x28] sm:$0xf]
    %v52 = vld [vmem:[%s0 + $0x30] sm:$0xf]
    %v53 = vld [vmem:[%s0 + $0x38] sm:$0xf]
    %v54 = vld [vmem:[%s0 + $0x48] sm:$0xf]
    %v55 = vld [vmem:[%s0 + $0x50] sm:$0xf]
    %v56 = vld [vmem:[%s0 + $0x58] sm:$0xf]
    %v57 = vld [vmem:[%s0 + $0x60] sm:$0xf]
    %v58 = vld [vmem:[%s0 + $0x68] sm:$0xf]
    %v59 = vld [vmem:[%s0 + $0x70] sm:$0xf]
    %v60 = vld [vmem:[%s0 + $0x78] sm:$0xf]
    %v61 = vld [vmem:[%s0 + $0x80] sm:$0xf]
    %v78 = vunpack.c.l.b16 %v46
    %v79 = vunpack.c.l.b16 %v47
    %v80 = vunpack.c.l.b16 %v48
    %v81 = vunpack.c.l.b16 %v49
    %v82 = vunpack.c.l.b16 %v50
    %v83 = vunpack.c.l.b16 %v51
    %v84 = vunpack.c.l.b16 %v52
    %v85 = vunpack.c.l.b16 %v53
    %v86 = vunpack.c.l.b16 %v54
    %v87 = vunpack.c.l.b16 %v55
    %v88 = vunpack.c.l.b16 %v56
    %v89 = vunpack.c.l.b16 %v57
    %v90 = vunpack.c.l.b16 %v58
    %v91 = vunpack.c.l.b16 %v59
    %v92 = vunpack.c.l.b16 %v60
    %v93 = vunpack.c.l.b16 %v61
    %v94 = vpack.c.b16 %v79, %v78
    %v95 = vpack.c.b16 %v81, %v80
    %v96 = vpack.c.b16 %v83, %v82
    %v97 = vpack.c.b16 %v85, %v84
    %v98 = vpack.c.b16 %v87, %v86
    %v99 = vpack.c.b16 %v89, %v88
    %v100 = vpack.c.b16 %v91, %v90
    %v101 = vpack.c.b16 %v93, %v92
    %vm110 = vcmask 31744
    %111 = vst.msk [vmem:[#allocation2] sm:$0xff] %vm110, %v94
    %112 = vst.msk [vmem:[#allocation2 + $0x8] sm:$0xff] %vm110, %v95
    %113 = vst.msk [vmem:[#allocation2 + $0x10] sm:$0xff] %vm110, %v96
    %114 = vst.msk [vmem:[#allocation2 + $0x18] sm:$0xff] %vm110, %v97
    %115 = vst.msk [vmem:[#allocation2 + $0x20] sm:$0xff] %vm110, %v98
    %116 = vst.msk [vmem:[#allocation2 + $0x28] sm:$0xff] %vm110, %v99
    %117 = vst.msk [vmem:[#allocation2 + $0x30] sm:$0xff] %vm110, %v100
    %118 = vst.msk [vmem:[#allocation2 + $0x38] sm:$0xff] %vm110, %v101
    %v119 = vld [vmem:[%s1] sm:$0xf]
    %v120 = vld [vmem:[%s1 + $0x8] sm:$0xf]
    %v121 = vld [vmem:[%s1 + $0x10] sm:$0xf]
    %v122 = vld [vmem:[%s1 + $0x18] sm:$0xf]
    %v123 = vld [vmem:[%s1 + $0x20] sm:$0xf]
    %v124 = vld [vmem:[%s1 + $0x28] sm:$0xf]
    %v125 = vld [vmem:[%s1 + $0x30] sm:$0xf]
    %v126 = vld [vmem:[%s1 + $0x38] sm:$0xf]
    %v127 = vld [vmem:[%s1 + $0x48] sm:$0xf]
    %v128 = vld [vmem:[%s1 + $0x50] sm:$0xf]
    %v129 = vld [vmem:[%s1 + $0x58] sm:$0xf]
    %v130 = vld [vmem:[%s1 + $0x60] sm:$0xf]
    %v131 = vld [vmem:[%s1 + $0x68] sm:$0xf]
    %v132 = vld [vmem:[%s1 + $0x70] sm:$0xf]
    %v133 = vld [vmem:[%s1 + $0x78] sm:$0xf]
    %v134 = vld [vmem:[%s1 + $0x80] sm:$0xf]
    %v151 = vunpack.c.l.b16 %v119
    %v152 = vunpack.c.l.b16 %v120
    %v153 = vunpack.c.l.b16 %v121
    %v154 = vunpack.c.l.b16 %v122
    %v155 = vunpack.c.l.b16 %v123
    %v156 = vunpack.c.l.b16 %v124
    %v157 = vunpack.c.l.b16 %v125
    %v158 = vunpack.c.l.b16 %v126
    %v159 = vunpack.c.l.b16 %v127
    %v160 = vunpack.c.l.b16 %v128
    %v161 = vunpack.c.l.b16 %v129
    %v162 = vunpack.c.l.b16 %v130
    %v163 = vunpack.c.l.b16 %v131
    %v164 = vunpack.c.l.b16 %v132
    %v165 = vunpack.c.l.b16 %v133
    %v166 = vunpack.c.l.b16 %v134
    %v167 = vpack.c.b16 %v152, %v151
    %v168 = vpack.c.b16 %v154, %v153
    %v169 = vpack.c.b16 %v156, %v155
    %v170 = vpack.c.b16 %v158, %v157
    %v171 = vpack.c.b16 %v160, %v159
    %v172 = vpack.c.b16 %v162, %v161
    %v173 = vpack.c.b16 %v164, %v163
    %v174 = vpack.c.b16 %v166, %v165
    %175 = vrot.lane.b32.xlu0 %v167, 4
    %v176 = vpop.permute.xlu0 %175
    %177 = vrot.lane.b32.xlu0 %v168, 4
    %v178 = vpop.permute.xlu0 %177
    %179 = vrot.lane.b32.xlu0 %v169, 4
    %v180 = vpop.permute.xlu0 %179
    %181 = vrot.lane.b32.xlu0 %v170, 4
    %v182 = vpop.permute.xlu0 %181
    %183 = vrot.lane.b32.xlu0 %v171, 4
    %v184 = vpop.permute.xlu0 %183
    %185 = vrot.lane.b32.xlu0 %v172, 4
    %v186 = vpop.permute.xlu0 %185
    %187 = vrot.lane.b32.xlu0 %v173, 4
    %v188 = vpop.permute.xlu0 %187
    %189 = vrot.lane.b32.xlu0 %v174, 4
    %v190 = vpop.permute.xlu0 %189
    %vm199 = vcmask 64544
    %200 = vst.msk [vmem:[#allocation2] sm:$0xff] %vm199, %v176
    %201 = vst.msk [vmem:[#allocation2 + $0x8] sm:$0xff] %vm199, %v178
    %202 = vst.msk [vmem:[#allocation2 + $0x10] sm:$0xff] %vm199, %v180
    %203 = vst.msk [vmem:[#allocation2 + $0x18] sm:$0xff] %vm199, %v182
    %204 = vst.msk [vmem:[#allocation2 + $0x20] sm:$0xff] %vm199, %v184
    %205 = vst.msk [vmem:[#allocation2 + $0x28] sm:$0xff] %vm199, %v186
    %206 = vst.msk [vmem:[#allocation2 + $0x30] sm:$0xff] %vm199, %v188
    %207 = vst.msk [vmem:[#allocation2 + $0x38] sm:$0xff] %vm199, %v190
    %v208 = vld [vmem:[%s0] sm:$0xf]
    %v209 = vld [vmem:[%s0 + $0x4] sm:$0x1]
    %v210 = vld [vmem:[%s0 + $0x8] sm:$0xf]
    %v211 = vld [vmem:[%s0 + $0xc] sm:$0x1]
    %v212 = vld [vmem:[%s0 + $0x10] sm:$0xf]
    %v213 = vld [vmem:[%s0 + $0x14] sm:$0x1]
    %v214 = vld [vmem:[%s0 + $0x18] sm:$0xf]
    %v215 = vld [vmem:[%s0 + $0x1c] sm:$0x1]
    %v216 = vld [vmem:[%s0 + $0x20] sm:$0xf]
    %v217 = vld [vmem:[%s0 + $0x24] sm:$0x1]
    %v218 = vld [vmem:[%s0 + $0x28] sm:$0xf]
    %v219 = vld [vmem:[%s0 + $0x2c] sm:$0x1]
    %v220 = vld [vmem:[%s0 + $0x30] sm:$0xf]
    %v221 = vld [vmem:[%s0 + $0x34] sm:$0x1]
    %v222 = vld [vmem:[%s0 + $0x38] sm:$0xf]
    %v223 = vld [vmem:[%s0 + $0x3c] sm:$0x1]
    %v224 = vld [vmem:[%s0 + $0x48] sm:$0xf]
    %v225 = vld [vmem:[%s0 + $0x4c] sm:$0x1]
    %v226 = vld [vmem:[%s0 + $0x50] sm:$0xf]
    %v227 = vld [vmem:[%s0 + $0x54] sm:$0x1]
    %v228 = vld [vmem:[%s0 + $0x58] sm:$0xf]
    %v229 = vld [vmem:[%s0 + $0x5c] sm:$0x1]
    %v230 = vld [vmem:[%s0 + $0x60] sm:$0xf]
    %v231 = vld [vmem:[%s0 + $0x64] sm:$0x1]
    %v232 = vld [vmem:[%s0 + $0x68] sm:$0xf]
    %v233 = vld [vmem:[%s0 + $0x6c] sm:$0x1]
    %v234 = vld [vmem:[%s0 + $0x70] sm:$0xf]
    %v235 = vld [vmem:[%s0 + $0x74] sm:$0x1]
    %v236 = vld [vmem:[%s0 + $0x78] sm:$0xf]
    %v237 = vld [vmem:[%s0 + $0x7c] sm:$0x1]
    %v238 = vld [vmem:[%s0 + $0x80] sm:$0xf]
    %v239 = vld [vmem:[%s0 + $0x84] sm:$0x1]
    %vm240 = vsmask.f32 3328
    %vm241 = vsmask.f32 7440
    %vm242 = vmor %vm240, %vm241
    %v244 = vshrl.u32 %v208, 16
    %v246 = vrot.slane %v244, 4
    %v247 = vshll.u32 %v208, 16
    %v249 = vrot.slane %v247, 5
    %v250 = vor.u32 %v246, %v249
    %v251 = vrot.slane %v250, 4
    %v253 = vshll.u32 %v209, 16
    %v255 = vrot.slane %v253, 5
    %v256 = vsel %vm242, %v251, %v255
    %v258 = vshrl.u32 %v210, 16
    %v260 = vrot.slane %v258, 4
    %v261 = vshll.u32 %v210, 16
    %v263 = vrot.slane %v261, 5
    %v264 = vor.u32 %v260, %v263
    %v265 = vrot.slane %v264, 4
    %v267 = vshll.u32 %v211, 16
    %v269 = vrot.slane %v267, 5
    %v270 = vsel %vm242, %v265, %v269
    %v272 = vshrl.u32 %v212, 16
    %v274 = vrot.slane %v272, 4
    %v275 = vshll.u32 %v212, 16
    %v277 = vrot.slane %v275, 5
    %v278 = vor.u32 %v274, %v277
    %v279 = vrot.slane %v278, 4
    %v281 = vshll.u32 %v213, 16
    %v283 = vrot.slane %v281, 5
    %v284 = vsel %vm242, %v279, %v283
    %v286 = vshrl.u32 %v214, 16
    %v288 = vrot.slane %v286, 4
    %v289 = vshll.u32 %v214, 16
    %v291 = vrot.slane %v289, 5
    %v292 = vor.u32 %v288, %v291
    %v293 = vrot.slane %v292, 4
    %v295 = vshll.u32 %v215, 16
    %v297 = vrot.slane %v295, 5
    %v298 = vsel %vm242, %v293, %v297
    %v300 = vshrl.u32 %v216, 16
    %v302 = vrot.slane %v300, 4
    %v303 = vshll.u32 %v216, 16
    %v305 = vrot.slane %v303, 5
    %v306 = vor.u32 %v302, %v305
    %v307 = vrot.slane %v306, 4
    %v309 = vshll.u32 %v217, 16
    %v311 = vrot.slane %v309, 5
    %v312 = vsel %vm242, %v307, %v311
    %v314 = vshrl.u32 %v218, 16
    %v316 = vrot.slane %v314, 4
    %v317 = vshll.u32 %v218, 16
    %v319 = vrot.slane %v317, 5
    %v320 = vor.u32 %v316, %v319
    %v321 = vrot.slane %v320, 4
    %v323 = vshll.u32 %v219, 16
    %v325 = vrot.slane %v323, 5
    %v326 = vsel %vm242, %v321, %v325
    %v328 = vshrl.u32 %v220, 16
    %v330 = vrot.slane %v328, 4
    %v331 = vshll.u32 %v220, 16
    %v333 = vrot.slane %v331, 5
    %v334 = vor.u32 %v330, %v333
    %v335 = vrot.slane %v334, 4
    %v337 = vshll.u32 %v221, 16
    %v339 = vrot.slane %v337, 5
    %v340 = vsel %vm242, %v335, %v339
    %v342 = vshrl.u32 %v222, 16
    %v344 = vrot.slane %v342, 4
    %v345 = vshll.u32 %v222, 16
    %v347 = vrot.slane %v345, 5
    %v348 = vor.u32 %v344, %v347
    %v349 = vrot.slane %v348, 4
    %v351 = vshll.u32 %v223, 16
    %v353 = vrot.slane %v351, 5
    %v354 = vsel %vm242, %v349, %v353
    %v356 = vshrl.u32 %v224, 16
    %v358 = vrot.slane %v356, 4
    %v359 = vshll.u32 %v224, 16
    %v361 = vrot.slane %v359, 5
    %v362 = vor.u32 %v358, %v361
    %v363 = vrot.slane %v362, 4
    %v365 = vshll.u32 %v225, 16
    %v367 = vrot.slane %v365, 5
    %v368 = vsel %vm242, %v363, %v367
    %v370 = vshrl.u32 %v226, 16
    %v372 = vrot.slane %v370, 4
    %v373 = vshll.u32 %v226, 16
    %v375 = vrot.slane %v373, 5
    %v376 = vor.u32 %v372, %v375
    %v377 = vrot.slane %v376, 4
    %v379 = vshll.u32 %v227, 16
    %v381 = vrot.slane %v379, 5
    %v382 = vsel %vm242, %v377, %v381
    %v384 = vshrl.u32 %v228, 16
    %v386 = vrot.slane %v384, 4
    %v387 = vshll.u32 %v228, 16
    %v389 = vrot.slane %v387, 5
    %v390 = vor.u32 %v386, %v389
    %v391 = vrot.slane %v390, 4
    %v393 = vshll.u32 %v229, 16
    %v395 = vrot.slane %v393, 5
    %v396 = vsel %vm242, %v391, %v395
    %v398 = vshrl.u32 %v230, 16
    %v400 = vrot.slane %v398, 4
    %v401 = vshll.u32 %v230, 16
    %v403 = vrot.slane %v401, 5
    %v404 = vor.u32 %v400, %v403
    %v405 = vrot.slane %v404, 4
    %v407 = vshll.u32 %v231, 16
    %v409 = vrot.slane %v407, 5
    %v410 = vsel %vm242, %v405, %v409
    %v412 = vshrl.u32 %v232, 16
    %v414 = vrot.slane %v412, 4
    %v415 = vshll.u32 %v232, 16
    %v417 = vrot.slane %v415, 5
    %v418 = vor.u32 %v414, %v417
    %v419 = vrot.slane %v418, 4
    %v421 = vshll.u32 %v233, 16
    %v423 = vrot.slane %v421, 5
    %v424 = vsel %vm242, %v419, %v423
    %v426 = vshrl.u32 %v234, 16
    %v428 = vrot.slane %v426, 4
    %v429 = vshll.u32 %v234, 16
    %v431 = vrot.slane %v429, 5
    %v432 = vor.u32 %v428, %v431
    %v433 = vrot.slane %v432, 4
    %v435 = vshll.u32 %v235, 16
    %v437 = vrot.slane %v435, 5
    %v438 = vsel %vm242, %v433, %v437
    %v440 = vshrl.u32 %v236, 16
    %v442 = vrot.slane %v440, 4
    %v443 = vshll.u32 %v236, 16
    %v445 = vrot.slane %v443, 5
    %v446 = vor.u32 %v442, %v445
    %v447 = vrot.slane %v446, 4
    %v449 = vshll.u32 %v237, 16
    %v451 = vrot.slane %v449, 5
    %v452 = vsel %vm242, %v447, %v451
    %v454 = vshrl.u32 %v238, 16
    %v456 = vrot.slane %v454, 4
    %v457 = vshll.u32 %v238, 16
    %v459 = vrot.slane %v457, 5
    %v460 = vor.u32 %v456, %v459
    %v461 = vrot.slane %v460, 4
    %v463 = vshll.u32 %v239, 16
    %v465 = vrot.slane %v463, 5
    %v466 = vsel %vm242, %v461, %v465
    %v467 = vunpack.c.l.b16 %v256
    %v468 = vunpack.c.l.b16 %v270
    %v469 = vunpack.c.l.b16 %v284
    %v470 = vunpack.c.l.b16 %v298
    %v471 = vunpack.c.l.b16 %v312
    %v472 = vunpack.c.l.b16 %v326
    %v473 = vunpack.c.l.b16 %v340
    %v474 = vunpack.c.l.b16 %v354
    %v475 = vunpack.c.l.b16 %v368
    %v476 = vunpack.c.l.b16 %v382
    %v477 = vunpack.c.l.b16 %v396
    %v478 = vunpack.c.l.b16 %v410
    %v479 = vunpack.c.l.b16 %v424
    %v480 = vunpack.c.l.b16 %v438
    %v481 = vunpack.c.l.b16 %v452
    %v482 = vunpack.c.l.b16 %v466
    %v483 = vpack.c.b16 %v468, %v467
    %v484 = vpack.c.b16 %v470, %v469
    %v485 = vpack.c.b16 %v472, %v471
    %v486 = vpack.c.b16 %v474, %v473
    %v487 = vpack.c.b16 %v476, %v475
    %v488 = vpack.c.b16 %v478, %v477
    %v489 = vpack.c.b16 %v480, %v479
    %v490 = vpack.c.b16 %v482, %v481
    %491 = vrot.lane.b32.xlu0 %v483, 8
    %v492 = vpop.permute.xlu0 %491
    %493 = vrot.lane.b32.xlu0 %v484, 8
    %v494 = vpop.permute.xlu0 %493
    %495 = vrot.lane.b32.xlu0 %v485, 8
    %v496 = vpop.permute.xlu0 %495
    %497 = vrot.lane.b32.xlu0 %v486, 8
    %v498 = vpop.permute.xlu0 %497
    %499 = vrot.lane.b32.xlu0 %v487, 8
    %v500 = vpop.permute.xlu0 %499
    %501 = vrot.lane.b32.xlu0 %v488, 8
    %v502 = vpop.permute.xlu0 %501
    %503 = vrot.lane.b32.xlu0 %v489, 8
    %v504 = vpop.permute.xlu0 %503
    %505 = vrot.lane.b32.xlu0 %v490, 8
    %v506 = vpop.permute.xlu0 %505
    %vm515 = vcmask 97344
    %516 = vst.msk [vmem:[#allocation2] sm:$0xff] %vm515, %v492
    %517 = vst.msk [vmem:[#allocation2 + $0x8] sm:$0xff] %vm515, %v494
    %518 = vst.msk [vmem:[#allocation2 + $0x10] sm:$0xff] %vm515, %v496
    %519 = vst.msk [vmem:[#allocation2 + $0x18] sm:$0xff] %vm515, %v498
    %520 = vst.msk [vmem:[#allocation2 + $0x20] sm:$0xff] %vm515, %v500
    %521 = vst.msk [vmem:[#allocation2 + $0x28] sm:$0xff] %vm515, %v502
    %522 = vst.msk [vmem:[#allocation2 + $0x30] sm:$0xff] %vm515, %v504
    %523 = vst.msk [vmem:[#allocation2 + $0x38] sm:$0xff] %vm515, %v506
    %v524 = vld [vmem:[%s2] sm:$0xf]
    %v525 = vld [vmem:[%s2 + $0x8] sm:$0xf]
    %v526 = vld [vmem:[%s2 + $0x10] sm:$0xf]
    %v527 = vld [vmem:[%s2 + $0x18] sm:$0xf]
    %v528 = vld [vmem:[%s2 + $0x20] sm:$0xf]
    %v529 = vld [vmem:[%s2 + $0x28] sm:$0xf]
    %v530 = vld [vmem:[%s2 + $0x30] sm:$0xf]
    %v531 = vld [vmem:[%s2 + $0x38] sm:$0xf]
    %v532 = vld [vmem:[%s2 + $0x48] sm:$0xf]
    %v533 = vld [vmem:[%s2 + $0x50] sm:$0xf]
    %v534 = vld [vmem:[%s2 + $0x58] sm:$0xf]
    %v535 = vld [vmem:[%s2 + $0x60] sm:$0xf]
    %v536 = vld [vmem:[%s2 + $0x68] sm:$0xf]
    %v537 = vld [vmem:[%s2 + $0x70] sm:$0xf]
    %v538 = vld [vmem:[%s2 + $0x78] sm:$0xf]
    %v539 = vld [vmem:[%s2 + $0x80] sm:$0xf]
    %v556 = vunpack.c.l.b16 %v524
    %v557 = vunpack.c.l.b16 %v525
    %v558 = vunpack.c.l.b16 %v526
    %v559 = vunpack.c.l.b16 %v527
    %v560 = vunpack.c.l.b16 %v528
    %v561 = vunpack.c.l.b16 %v529
    %v562 = vunpack.c.l.b16 %v530
    %v563 = vunpack.c.l.b16 %v531
    %v564 = vunpack.c.l.b16 %v532
    %v565 = vunpack.c.l.b16 %v533
    %v566 = vunpack.c.l.b16 %v534
    %v567 = vunpack.c.l.b16 %v535
    %v568 = vunpack.c.l.b16 %v536
    %v569 = vunpack.c.l.b16 %v537
    %v570 = vunpack.c.l.b16 %v538
    %v571 = vunpack.c.l.b16 %v539
    %v572 = vpack.c.b16 %v557, %v556
    %v573 = vpack.c.b16 %v559, %v558
    %v574 = vpack.c.b16 %v561, %v560
    %v575 = vpack.c.b16 %v563, %v562
    %v576 = vpack.c.b16 %v565, %v564
    %v577 = vpack.c.b16 %v567, %v566
    %v578 = vpack.c.b16 %v569, %v568
    %v579 = vpack.c.b16 %v571, %v570
    %580 = vrot.lane.b32.xlu0 %v572, 12
    %v581 = vpop.permute.xlu0 %580
    %582 = vrot.lane.b32.xlu0 %v573, 12
    %v583 = vpop.permute.xlu0 %582
    %584 = vrot.lane.b32.xlu0 %v574, 12
    %v585 = vpop.permute.xlu0 %584
    %586 = vrot.lane.b32.xlu0 %v575, 12
    %v587 = vpop.permute.xlu0 %586
    %588 = vrot.lane.b32.xlu0 %v576, 12
    %v589 = vpop.permute.xlu0 %588
    %590 = vrot.lane.b32.xlu0 %v577, 12
    %v591 = vpop.permute.xlu0 %590
    %592 = vrot.lane.b32.xlu0 %v578, 12
    %v593 = vpop.permute.xlu0 %592
    %594 = vrot.lane.b32.xlu0 %v579, 12
    %v595 = vpop.permute.xlu0 %594
    %vm604 = vcmask 130144
    %605 = vst.msk [vmem:[#allocation2] sm:$0xff] %vm604, %v581
    %606 = vst.msk [vmem:[#allocation2 + $0x8] sm:$0xff] %vm604, %v583
    %607 = vst.msk [vmem:[#allocation2 + $0x10] sm:$0xff] %vm604, %v585
    %608 = vst.msk [vmem:[#allocation2 + $0x18] sm:$0xff] %vm604, %v587
    %609 = vst.msk [vmem:[#allocation2 + $0x20] sm:$0xff] %vm604, %v589
    %610 = vst.msk [vmem:[#allocation2 + $0x28] sm:$0xff] %vm604, %v591
    %611 = vst.msk [vmem:[#allocation2 + $0x30] sm:$0xff] %vm604, %v593
    %612 = vst.msk [vmem:[#allocation2 + $0x38] sm:$0xff] %vm604, %v595
    %v613 = vld [vmem:[%s3] sm:$0xf]
    %v614 = vld [vmem:[%s3 + $0x8] sm:$0xf]
    %v615 = vld [vmem:[%s3 + $0x10] sm:$0xf]
    %v616 = vld [vmem:[%s3 + $0x18] sm:$0xf]
    %v617 = vld [vmem:[%s3 + $0x20] sm:$0xf]
    %v618 = vld [vmem:[%s3 + $0x28] sm:$0xf]
    %v619 = vld [vmem:[%s3 + $0x30] sm:$0xf]
    %v620 = vld [vmem:[%s3 + $0x38] sm:$0xf]
    %v621 = vld [vmem:[%s3 + $0x48] sm:$0xf]
    %v622 = vld [vmem:[%s3 + $0x50] sm:$0xf]
    %v623 = vld [vmem:[%s3 + $0x58] sm:$0xf]
    %v624 = vld [vmem:[%s3 + $0x60] sm:$0xf]
    %v625 = vld [vmem:[%s3 + $0x68] sm:$0xf]
    %v626 = vld [vmem:[%s3 + $0x70] sm:$0xf]
    %v627 = vld [vmem:[%s3 + $0x78] sm:$0xf]
    %v628 = vld [vmem:[%s3 + $0x80] sm:$0xf]
    %v645 = vunpack.c.l.b16 %v613
    %v646 = vunpack.c.l.b16 %v614
    %v647 = vunpack.c.l.b16 %v615
    %v648 = vunpack.c.l.b16 %v616
    %v649 = vunpack.c.l.b16 %v617
    %v650 = vunpack.c.l.b16 %v618
    %v651 = vunpack.c.l.b16 %v619
    %v652 = vunpack.c.l.b16 %v620
    %v653 = vunpack.c.l.b16 %v621
    %v654 = vunpack.c.l.b16 %v622
    %v655 = vunpack.c.l.b16 %v623
    %v656 = vunpack.c.l.b16 %v624
    %v657 = vunpack.c.l.b16 %v625
    %v658 = vunpack.c.l.b16 %v626
    %v659 = vunpack.c.l.b16 %v627
    %v660 = vunpack.c.l.b16 %v628
    %v661 = vpack.c.b16 %v646, %v645
    %v662 = vpack.c.b16 %v648, %v647
    %v663 = vpack.c.b16 %v650, %v649
    %v664 = vpack.c.b16 %v652, %v651
    %v665 = vpack.c.b16 %v654, %v653
    %v666 = vpack.c.b16 %v656, %v655
    %v667 = vpack.c.b16 %v658, %v657
    %v668 = vpack.c.b16 %v660, %v659
    %669 = vrot.lane.b32.xlu0 %v661, 16
    %v670 = vpop.permute.xlu0 %669
    %671 = vrot.lane.b32.xlu0 %v662, 16
    %v672 = vpop.permute.xlu0 %671
    %673 = vrot.lane.b32.xlu0 %v663, 16
    %v674 = vpop.permute.xlu0 %673
    %675 = vrot.lane.b32.xlu0 %v664, 16
    %v676 = vpop.permute.xlu0 %675
    %677 = vrot.lane.b32.xlu0 %v665, 16
    %v678 = vpop.permute.xlu0 %677
    %679 = vrot.lane.b32.xlu0 %v666, 16
    %v680 = vpop.permute.xlu0 %679
    %681 = vrot.lane.b32.xlu0 %v667, 16
    %v682 = vpop.permute.xlu0 %681
    %683 = vrot.lane.b32.xlu0 %v668, 16
    %v684 = vpop.permute.xlu0 %683
    %vm693 = vcmask 162944
    %694 = vst.msk [vmem:[#allocation2] sm:$0xff] %vm693, %v670
    %695 = vst.msk [vmem:[#allocation2 + $0x8] sm:$0xff] %vm693, %v672
    %696 = vst.msk [vmem:[#allocation2 + $0x10] sm:$0xff] %vm693, %v674
    %697 = vst.msk [vmem:[#allocation2 + $0x18] sm:$0xff] %vm693, %v676
    %698 = vst.msk [vmem:[#allocation2 + $0x20] sm:$0xff] %vm693, %v678
    %699 = vst.msk [vmem:[#allocation2 + $0x28] sm:$0xff] %vm693, %v680
    %700 = vst.msk [vmem:[#allocation2 + $0x30] sm:$0xff] %vm693, %v682
    %701 = vst.msk [vmem:[#allocation2 + $0x38] sm:$0xff] %vm693, %v684
    %v702 = vld [vmem:[%s2] sm:$0xf]
    %v703 = vld [vmem:[%s2 + $0x4] sm:$0x1]
    %v704 = vld [vmem:[%s2 + $0x8] sm:$0xf]
    %v705 = vld [vmem:[%s2 + $0xc] sm:$0x1]
    %v706 = vld [vmem:[%s2 + $0x10] sm:$0xf]
    %v707 = vld [vmem:[%s2 + $0x14] sm:$0x1]
    %v708 = vld [vmem:[%s2 + $0x18] sm:$0xf]
    %v709 = vld [vmem:[%s2 + $0x1c] sm:$0x1]
    %v710 = vld [vmem:[%s2 + $0x20] sm:$0xf]
    %v711 = vld [vmem:[%s2 + $0x24] sm:$0x1]
    %v712 = vld [vmem:[%s2 + $0x28] sm:$0xf]
    %v713 = vld [vmem:[%s2 + $0x2c] sm:$0x1]
    %v714 = vld [vmem:[%s2 + $0x30] sm:$0xf]
    %v715 = vld [vmem:[%s2 + $0x34] sm:$0x1]
    %v716 = vld [vmem:[%s2 + $0x38] sm:$0xf]
    %v717 = vld [vmem:[%s2 + $0x3c] sm:$0x1]
    %v718 = vld [vmem:[%s2 + $0x48] sm:$0xf]
    %v719 = vld [vmem:[%s2 + $0x4c] sm:$0x1]
    %v720 = vld [vmem:[%s2 + $0x50] sm:$0xf]
    %v721 = vld [vmem:[%s2 + $0x54] sm:$0x1]
    %v722 = vld [vmem:[%s2 + $0x58] sm:$0xf]
    %v723 = vld [vmem:[%s2 + $0x5c] sm:$0x1]
    %v724 = vld [vmem:[%s2 + $0x60] sm:$0xf]
    %v725 = vld [vmem:[%s2 + $0x64] sm:$0x1]
    %v726 = vld [vmem:[%s2 + $0x68] sm:$0xf]
    %v727 = vld [vmem:[%s2 + $0x6c] sm:$0x1]
    %v728 = vld [vmem:[%s2 + $0x70] sm:$0xf]
    %v729 = vld [vmem:[%s2 + $0x74] sm:$0x1]
    %v730 = vld [vmem:[%s2 + $0x78] sm:$0xf]
    %v731 = vld [vmem:[%s2 + $0x7c] sm:$0x1]
    %v732 = vld [vmem:[%s2 + $0x80] sm:$0xf]
    %v733 = vld [vmem:[%s2 + $0x84] sm:$0x1]
    %v735 = vshrl.u32 %v702, 16
    %v737 = vrot.slane %v735, 4
    %v738 = vshll.u32 %v702, 16
    %v740 = vrot.slane %v738, 5
    %v741 = vor.u32 %v737, %v740
    %v742 = vrot.slane %v741, 4
    %v744 = vshll.u32 %v703, 16
    %v746 = vrot.slane %v744, 5
    %v747 = vsel %vm242, %v742, %v746
    %v749 = vshrl.u32 %v704, 16
    %v751 = vrot.slane %v749, 4
    %v752 = vshll.u32 %v704, 16
    %v754 = vrot.slane %v752, 5
    %v755 = vor.u32 %v751, %v754
    %v756 = vrot.slane %v755, 4
    %v758 = vshll.u32 %v705, 16
    %v760 = vrot.slane %v758, 5
    %v761 = vsel %vm242, %v756, %v760
    %v763 = vshrl.u32 %v706, 16
    %v765 = vrot.slane %v763, 4
    %v766 = vshll.u32 %v706, 16
    %v768 = vrot.slane %v766, 5
    %v769 = vor.u32 %v765, %v768
    %v770 = vrot.slane %v769, 4
    %v772 = vshll.u32 %v707, 16
    %v774 = vrot.slane %v772, 5
    %v775 = vsel %vm242, %v770, %v774
    %v777 = vshrl.u32 %v708, 16
    %v779 = vrot.slane %v777, 4
    %v780 = vshll.u32 %v708, 16
    %v782 = vrot.slane %v780, 5
    %v783 = vor.u32 %v779, %v782
    %v784 = vrot.slane %v783, 4
    %v786 = vshll.u32 %v709, 16
    %v788 = vrot.slane %v786, 5
    %v789 = vsel %vm242, %v784, %v788
    %v791 = vshrl.u32 %v710, 16
    %v793 = vrot.slane %v791, 4
    %v794 = vshll.u32 %v710, 16
    %v796 = vrot.slane %v794, 5
    %v797 = vor.u32 %v793, %v796
    %v798 = vrot.slane %v797, 4
    %v800 = vshll.u32 %v711, 16
    %v802 = vrot.slane %v800, 5
    %v803 = vsel %vm242, %v798, %v802
    %v805 = vshrl.u32 %v712, 16
    %v807 = vrot.slane %v805, 4
    %v808 = vshll.u32 %v712, 16
    %v810 = vrot.slane %v808, 5
    %v811 = vor.u32 %v807, %v810
    %v812 = vrot.slane %v811, 4
    %v814 = vshll.u32 %v713, 16
    %v816 = vrot.slane %v814, 5
    %v817 = vsel %vm242, %v812, %v816
    %v819 = vshrl.u32 %v714, 16
    %v821 = vrot.slane %v819, 4
    %v822 = vshll.u32 %v714, 16
    %v824 = vrot.slane %v822, 5
    %v825 = vor.u32 %v821, %v824
    %v826 = vrot.slane %v825, 4
    %v828 = vshll.u32 %v715, 16
    %v830 = vrot.slane %v828, 5
    %v831 = vsel %vm242, %v826, %v830
    %v833 = vshrl.u32 %v716, 16
    %v835 = vrot.slane %v833, 4
    %v836 = vshll.u32 %v716, 16
    %v838 = vrot.slane %v836, 5
    %v839 = vor.u32 %v835, %v838
    %v840 = vrot.slane %v839, 4
    %v842 = vshll.u32 %v717, 16
    %v844 = vrot.slane %v842, 5
    %v845 = vsel %vm242, %v840, %v844
    %v847 = vshrl.u32 %v718, 16
    %v849 = vrot.slane %v847, 4
    %v850 = vshll.u32 %v718, 16
    %v852 = vrot.slane %v850, 5
    %v853 = vor.u32 %v849, %v852
    %v854 = vrot.slane %v853, 4
    %v856 = vshll.u32 %v719, 16
    %v858 = vrot.slane %v856, 5
    %v859 = vsel %vm242, %v854, %v858
    %v861 = vshrl.u32 %v720, 16
    %v863 = vrot.slane %v861, 4
    %v864 = vshll.u32 %v720, 16
    %v866 = vrot.slane %v864, 5
    %v867 = vor.u32 %v863, %v866
    %v868 = vrot.slane %v867, 4
    %v870 = vshll.u32 %v721, 16
    %v872 = vrot.slane %v870, 5
    %v873 = vsel %vm242, %v868, %v872
    %v875 = vshrl.u32 %v722, 16
    %v877 = vrot.slane %v875, 4
    %v878 = vshll.u32 %v722, 16
    %v880 = vrot.slane %v878, 5
    %v881 = vor.u32 %v877, %v880
    %v882 = vrot.slane %v881, 4
    %v884 = vshll.u32 %v723, 16
    %v886 = vrot.slane %v884, 5
    %v887 = vsel %vm242, %v882, %v886
    %v889 = vshrl.u32 %v724, 16
    %v891 = vrot.slane %v889, 4
    %v892 = vshll.u32 %v724, 16
    %v894 = vrot.slane %v892, 5
    %v895 = vor.u32 %v891, %v894
    %v896 = vrot.slane %v895, 4
    %v898 = vshll.u32 %v725, 16
    %v900 = vrot.slane %v898, 5
    %v901 = vsel %vm242, %v896, %v900
    %v903 = vshrl.u32 %v726, 16
    %v905 = vrot.slane %v903, 4
    %v906 = vshll.u32 %v726, 16
    %v908 = vrot.slane %v906, 5
    %v909 = vor.u32 %v905, %v908
    %v910 = vrot.slane %v909, 4
    %v912 = vshll.u32 %v727, 16
    %v914 = vrot.slane %v912, 5
    %v915 = vsel %vm242, %v910, %v914
    %v917 = vshrl.u32 %v728, 16
    %v919 = vrot.slane %v917, 4
    %v920 = vshll.u32 %v728, 16
    %v922 = vrot.slane %v920, 5
    %v923 = vor.u32 %v919, %v922
    %v924 = vrot.slane %v923, 4
    %v926 = vshll.u32 %v729, 16
    %v928 = vrot.slane %v926, 5
    %v929 = vsel %vm242, %v924, %v928
    %v931 = vshrl.u32 %v730, 16
    %v933 = vrot.slane %v931, 4
    %v934 = vshll.u32 %v730, 16
    %v936 = vrot.slane %v934, 5
    %v937 = vor.u32 %v933, %v936
    %v938 = vrot.slane %v937, 4
    %v940 = vshll.u32 %v731, 16
    %v942 = vrot.slane %v940, 5
    %v943 = vsel %vm242, %v938, %v942
    %v945 = vshrl.u32 %v732, 16
    %v947 = vrot.slane %v945, 4
    %v948 = vshll.u32 %v732, 16
    %v950 = vrot.slane %v948, 5
    %v951 = vor.u32 %v947, %v950
    %v952 = vrot.slane %v951, 4
    %v954 = vshll.u32 %v733, 16
    %v956 = vrot.slane %v954, 5
    %v957 = vsel %vm242, %v952, %v956
    %v958 = vunpack.c.l.b16 %v747
    %v959 = vunpack.c.l.b16 %v761
    %v960 = vunpack.c.l.b16 %v775
    %v961 = vunpack.c.l.b16 %v789
    %v962 = vunpack.c.l.b16 %v803
    %v963 = vunpack.c.l.b16 %v817
    %v964 = vunpack.c.l.b16 %v831
    %v965 = vunpack.c.l.b16 %v845
    %v966 = vunpack.c.l.b16 %v859
    %v967 = vunpack.c.l.b16 %v873
    %v968 = vunpack.c.l.b16 %v887
    %v969 = vunpack.c.l.b16 %v901
    %v970 = vunpack.c.l.b16 %v915
    %v971 = vunpack.c.l.b16 %v929
    %v972 = vunpack.c.l.b16 %v943
    %v973 = vunpack.c.l.b16 %v957
    %v974 = vpack.c.b16 %v959, %v958
    %v975 = vpack.c.b16 %v961, %v960
    %v976 = vpack.c.b16 %v963, %v962
    %v977 = vpack.c.b16 %v965, %v964
    %v978 = vpack.c.b16 %v967, %v966
    %v979 = vpack.c.b16 %v969, %v968
    %v980 = vpack.c.b16 %v971, %v970
    %v981 = vpack.c.b16 %v973, %v972
    %982 = vrot.lane.b32.xlu0 %v974, 20
    %v983 = vpop.permute.xlu0 %982
    %984 = vrot.lane.b32.xlu0 %v975, 20
    %v985 = vpop.permute.xlu0 %984
    %986 = vrot.lane.b32.xlu0 %v976, 20
    %v987 = vpop.permute.xlu0 %986
    %988 = vrot.lane.b32.xlu0 %v977, 20
    %v989 = vpop.permute.xlu0 %988
    %990 = vrot.lane.b32.xlu0 %v978, 20
    %v991 = vpop.permute.xlu0 %990
    %992 = vrot.lane.b32.xlu0 %v979, 20
    %v993 = vpop.permute.xlu0 %992
    %994 = vrot.lane.b32.xlu0 %v980, 20
    %v995 = vpop.permute.xlu0 %994
    %996 = vrot.lane.b32.xlu0 %v981, 20
    %v997 = vpop.permute.xlu0 %996
    %vm1006 = vcmask 195744
    %1007 = vst.msk [vmem:[#allocation2] sm:$0xff] %vm1006, %v983
    %1008 = vst.msk [vmem:[#allocation2 + $0x8] sm:$0xff] %vm1006, %v985
    %1009 = vst.msk [vmem:[#allocation2 + $0x10] sm:$0xff] %vm1006, %v987
    %1010 = vst.msk [vmem:[#allocation2 + $0x18] sm:$0xff] %vm1006, %v989
    %1011 = vst.msk [vmem:[#allocation2 + $0x20] sm:$0xff] %vm1006, %v991
    %1012 = vst.msk [vmem:[#allocation2 + $0x28] sm:$0xff] %vm1006, %v993
    %1013 = vst.msk [vmem:[#allocation2 + $0x30] sm:$0xff] %vm1006, %v995
    %1014 = vst.msk [vmem:[#allocation2 + $0x38] sm:$0xff] %vm1006, %v997
    %s1015 = scalar_lea.vmem %s0, 8
    %v1016 = vld [vmem:[%s1015] sm:$0xf]
    %v1017 = vld [vmem:[%s1015 + $0x8] sm:$0xf]
    %v1018 = vld [vmem:[%s1015 + $0x10] sm:$0xf]
    %v1019 = vld [vmem:[%s1015 + $0x18] sm:$0xf]
    %v1020 = vld [vmem:[%s1015 + $0x20] sm:$0xf]
    %v1021 = vld [vmem:[%s1015 + $0x28] sm:$0xf]
    %v1022 = vld [vmem:[%s1015 + $0x30] sm:$0xf]
    %v1023 = vld [vmem:[%s1015 + $0x38] sm:$0xf]
    %v1024 = vld [vmem:[%s1015 + $0x48] sm:$0xf]
    %v1025 = vld [vmem:[%s1015 + $0x50] sm:$0xf]
    %v1026 = vld [vmem:[%s1015 + $0x58] sm:$0xf]
    %v1027 = vld [vmem:[%s1015 + $0x60] sm:$0xf]
    %v1028 = vld [vmem:[%s1015 + $0x68] sm:$0xf]
    %v1029 = vld [vmem:[%s1015 + $0x70] sm:$0xf]
    %v1030 = vld [vmem:[%s1015 + $0x78] sm:$0xf]
    %v1031 = vld [vmem:[%s1015 + $0x80] sm:$0xf]
    %v1048 = vunpack.c.l.b16 %v1016
    %v1049 = vunpack.c.l.b16 %v1017
    %v1050 = vunpack.c.l.b16 %v1018
    %v1051 = vunpack.c.l.b16 %v1019
    %v1052 = vunpack.c.l.b16 %v1020
    %v1053 = vunpack.c.l.b16 %v1021
    %v1054 = vunpack.c.l.b16 %v1022
    %v1055 = vunpack.c.l.b16 %v1023
    %v1056 = vunpack.c.l.b16 %v1024
    %v1057 = vunpack.c.l.b16 %v1025
    %v1058 = vunpack.c.l.b16 %v1026
    %v1059 = vunpack.c.l.b16 %v1027
    %v1060 = vunpack.c.l.b16 %v1028
    %v1061 = vunpack.c.l.b16 %v1029
    %v1062 = vunpack.c.l.b16 %v1030
    %v1063 = vunpack.c.l.b16 %v1031
    %v1064 = vpack.c.b16 %v1049, %v1048
    %v1065 = vpack.c.b16 %v1051, %v1050
    %v1066 = vpack.c.b16 %v1053, %v1052
    %v1067 = vpack.c.b16 %v1055, %v1054
    %v1068 = vpack.c.b16 %v1057, %v1056
    %v1069 = vpack.c.b16 %v1059, %v1058
    %v1070 = vpack.c.b16 %v1061, %v1060
    %v1071 = vpack.c.b16 %v1063, %v1062
    %1072 = vrot.lane.b32.xlu0 %v1064, 24
    %v1073 = vpop.permute.xlu0 %1072
    %1074 = vrot.lane.b32.xlu0 %v1065, 24
    %v1075 = vpop.permute.xlu0 %1074
    %1076 = vrot.lane.b32.xlu0 %v1066, 24
    %v1077 = vpop.permute.xlu0 %1076
    %1078 = vrot.lane.b32.xlu0 %v1067, 24
    %v1079 = vpop.permute.xlu0 %1078
    %1080 = vrot.lane.b32.xlu0 %v1068, 24
    %v1081 = vpop.permute.xlu0 %1080
    %1082 = vrot.lane.b32.xlu0 %v1069, 24
    %v1083 = vpop.permute.xlu0 %1082
    %1084 = vrot.lane.b32.xlu0 %v1070, 24
    %v1085 = vpop.permute.xlu0 %1084
    %1086 = vrot.lane.b32.xlu0 %v1071, 24
    %v1087 = vpop.permute.xlu0 %1086
    %vm1096 = vcmask 228544
    %1097 = vst.msk [vmem:[#allocation2] sm:$0xff] %vm1096, %v1073
    %1098 = vst.msk [vmem:[#allocation2 + $0x8] sm:$0xff] %vm1096, %v1075
    %1099 = vst.msk [vmem:[#allocation2 + $0x10] sm:$0xff] %vm1096, %v1077
    %1100 = vst.msk [vmem:[#allocation2 + $0x18] sm:$0xff] %vm1096, %v1079
    %1101 = vst.msk [vmem:[#allocation2 + $0x20] sm:$0xff] %vm1096, %v1081
    %1102 = vst.msk [vmem:[#allocation2 + $0x28] sm:$0xff] %vm1096, %v1083
    %1103 = vst.msk [vmem:[#allocation2 + $0x30] sm:$0xff] %vm1096, %v1085
    %1104 = vst.msk [vmem:[#allocation2 + $0x38] sm:$0xff] %vm1096, %v1087
    %s1105 = scalar_lea.vmem %s1, 8
    %v1106 = vld [vmem:[%s1105] sm:$0xf]
    %v1107 = vld [vmem:[%s1105 + $0x8] sm:$0xf]
    %v1108 = vld [vmem:[%s1105 + $0x10] sm:$0xf]
    %v1109 = vld [vmem:[%s1105 + $0x18] sm:$0xf]
    %v1110 = vld [vmem:[%s1105 + $0x20] sm:$0xf]
    %v1111 = vld [vmem:[%s1105 + $0x28] sm:$0xf]
    %v1112 = vld [vmem:[%s1105 + $0x30] sm:$0xf]
    %v1113 = vld [vmem:[%s1105 + $0x38] sm:$0xf]
    %v1114 = vld [vmem:[%s1105 + $0x48] sm:$0xf]
    %v1115 = vld [vmem:[%s1105 + $0x50] sm:$0xf]
    %v1116 = vld [vmem:[%s1105 + $0x58] sm:$0xf]
    %v1117 = vld [vmem:[%s1105 + $0x60] sm:$0xf]
    %v1118 = vld [vmem:[%s1105 + $0x68] sm:$0xf]
    %v1119 = vld [vmem:[%s1105 + $0x70] sm:$0xf]
    %v1120 = vld [vmem:[%s1105 + $0x78] sm:$0xf]
    %v1121 = vld [vmem:[%s1105 + $0x80] sm:$0xf]
    %v1138 = vunpack.c.l.b16 %v1106
    %v1139 = vunpack.c.l.b16 %v1107
    %v1140 = vunpack.c.l.b16 %v1108
    %v1141 = vunpack.c.l.b16 %v1109
    %v1142 = vunpack.c.l.b16 %v1110
    %v1143 = vunpack.c.l.b16 %v1111
    %v1144 = vunpack.c.l.b16 %v1112
    %v1145 = vunpack.c.l.b16 %v1113
    %v1146 = vunpack.c.l.b16 %v1114
    %v1147 = vunpack.c.l.b16 %v1115
    %v1148 = vunpack.c.l.b16 %v1116
    %v1149 = vunpack.c.l.b16 %v1117
    %v1150 = vunpack.c.l.b16 %v1118
    %v1151 = vunpack.c.l.b16 %v1119
    %v1152 = vunpack.c.l.b16 %v1120
    %v1153 = vunpack.c.l.b16 %v1121
    %v1154 = vpack.c.b16 %v1139, %v1138
    %v1155 = vpack.c.b16 %v1141, %v1140
    %v1156 = vpack.c.b16 %v1143, %v1142
    %v1157 = vpack.c.b16 %v1145, %v1144
    %v1158 = vpack.c.b16 %v1147, %v1146
    %v1159 = vpack.c.b16 %v1149, %v1148
    %v1160 = vpack.c.b16 %v1151, %v1150
    %v1161 = vpack.c.b16 %v1153, %v1152
    %1162 = vrot.lane.b32.xlu0 %v1154, 28
    %v1163 = vpop.permute.xlu0 %1162
    %1164 = vrot.lane.b32.xlu0 %v1155, 28
    %v1165 = vpop.permute.xlu0 %1164
    %1166 = vrot.lane.b32.xlu0 %v1156, 28
    %v1167 = vpop.permute.xlu0 %1166
    %1168 = vrot.lane.b32.xlu0 %v1157, 28
    %v1169 = vpop.permute.xlu0 %1168
    %1170 = vrot.lane.b32.xlu0 %v1158, 28
    %v1171 = vpop.permute.xlu0 %1170
    %1172 = vrot.lane.b32.xlu0 %v1159, 28
    %v1173 = vpop.permute.xlu0 %1172
    %1174 = vrot.lane.b32.xlu0 %v1160, 28
    %v1175 = vpop.permute.xlu0 %1174
    %1176 = vrot.lane.b32.xlu0 %v1161, 28
    %v1177 = vpop.permute.xlu0 %1176
    %vm1186 = vcmask 261344
    %1187 = vst.msk [vmem:[#allocation2] sm:$0xff] %vm1186, %v1163
    %1188 = vst.msk [vmem:[#allocation2 + $0x8] sm:$0xff] %vm1186, %v1165
    %1189 = vst.msk [vmem:[#allocation2 + $0x10] sm:$0xff] %vm1186, %v1167
    %1190 = vst.msk [vmem:[#allocation2 + $0x18] sm:$0xff] %vm1186, %v1169
    %1191 = vst.msk [vmem:[#allocation2 + $0x20] sm:$0xff] %vm1186, %v1171
    %1192 = vst.msk [vmem:[#allocation2 + $0x28] sm:$0xff] %vm1186, %v1173
    %1193 = vst.msk [vmem:[#allocation2 + $0x30] sm:$0xff] %vm1186, %v1175
    %1194 = vst.msk [vmem:[#allocation2 + $0x38] sm:$0xff] %vm1186, %v1177
    %v1195 = vld [vmem:[%s1015] sm:$0xf]
    %v1196 = vld [vmem:[%s1015 + $0x4] sm:$0x1]
    %v1197 = vld [vmem:[%s1015 + $0x8] sm:$0xf]
    %v1198 = vld [vmem:[%s1015 + $0xc] sm:$0x1]
    %v1199 = vld [vmem:[%s1015 + $0x10] sm:$0xf]
    %v1200 = vld [vmem:[%s1015 + $0x14] sm:$0x1]
    %v1201 = vld [vmem:[%s1015 + $0x18] sm:$0xf]
    %v1202 = vld [vmem:[%s1015 + $0x1c] sm:$0x1]
    %v1203 = vld [vmem:[%s1015 + $0x20] sm:$0xf]
    %v1204 = vld [vmem:[%s1015 + $0x24] sm:$0x1]
    %v1205 = vld [vmem:[%s1015 + $0x28] sm:$0xf]
    %v1206 = vld [vmem:[%s1015 + $0x2c] sm:$0x1]
    %v1207 = vld [vmem:[%s1015 + $0x30] sm:$0xf]
    %v1208 = vld [vmem:[%s1015 + $0x34] sm:$0x1]
    %v1209 = vld [vmem:[%s1015 + $0x38] sm:$0xf]
    %v1210 = vld [vmem:[%s1015 + $0x3c] sm:$0x1]
    %v1211 = vld [vmem:[%s1015 + $0x48] sm:$0xf]
    %v1212 = vld [vmem:[%s1015 + $0x4c] sm:$0x1]
    %v1213 = vld [vmem:[%s1015 + $0x50] sm:$0xf]
    %v1214 = vld [vmem:[%s1015 + $0x54] sm:$0x1]
    %v1215 = vld [vmem:[%s1015 + $0x58] sm:$0xf]
    %v1216 = vld [vmem:[%s1015 + $0x5c] sm:$0x1]
    %v1217 = vld [vmem:[%s1015 + $0x60] sm:$0xf]
    %v1218 = vld [vmem:[%s1015 + $0x64] sm:$0x1]
    %v1219 = vld [vmem:[%s1015 + $0x68] sm:$0xf]
    %v1220 = vld [vmem:[%s1015 + $0x6c] sm:$0x1]
    %v1221 = vld [vmem:[%s1015 + $0x70] sm:$0xf]
    %v1222 = vld [vmem:[%s1015 + $0x74] sm:$0x1]
    %v1223 = vld [vmem:[%s1015 + $0x78] sm:$0xf]
    %v1224 = vld [vmem:[%s1015 + $0x7c] sm:$0x1]
    %v1225 = vld [vmem:[%s1015 + $0x80] sm:$0xf]
    %v1226 = vld [vmem:[%s1015 + $0x84] sm:$0x1]
    %v1228 = vshrl.u32 %v1195, 16
    %v1230 = vrot.slane %v1228, 4
    %v1231 = vshll.u32 %v1195, 16
    %v1233 = vrot.slane %v1231, 5
    %v1234 = vor.u32 %v1230, %v1233
    %v1235 = vrot.slane %v1234, 4
    %v1237 = vshll.u32 %v1196, 16
    %v1239 = vrot.slane %v1237, 5
    %v1240 = vsel %vm242, %v1235, %v1239
    %v1242 = vshrl.u32 %v1197, 16
    %v1244 = vrot.slane %v1242, 4
    %v1245 = vshll.u32 %v1197, 16
    %v1247 = vrot.slane %v1245, 5
    %v1248 = vor.u32 %v1244, %v1247
    %v1249 = vrot.slane %v1248, 4
    %v1251 = vshll.u32 %v1198, 16
    %v1253 = vrot.slane %v1251, 5
    %v1254 = vsel %vm242, %v1249, %v1253
    %v1256 = vshrl.u32 %v1199, 16
    %v1258 = vrot.slane %v1256, 4
    %v1259 = vshll.u32 %v1199, 16
    %v1261 = vrot.slane %v1259, 5
    %v1262 = vor.u32 %v1258, %v1261
    %v1263 = vrot.slane %v1262, 4
    %v1265 = vshll.u32 %v1200, 16
    %v1267 = vrot.slane %v1265, 5
    %v1268 = vsel %vm242, %v1263, %v1267
    %v1270 = vshrl.u32 %v1201, 16
    %v1272 = vrot.slane %v1270, 4
    %v1273 = vshll.u32 %v1201, 16
    %v1275 = vrot.slane %v1273, 5
    %v1276 = vor.u32 %v1272, %v1275
    %v1277 = vrot.slane %v1276, 4
    %v1279 = vshll.u32 %v1202, 16
    %v1281 = vrot.slane %v1279, 5
    %v1282 = vsel %vm242, %v1277, %v1281
    %v1284 = vshrl.u32 %v1203, 16
    %v1286 = vrot.slane %v1284, 4
    %v1287 = vshll.u32 %v1203, 16
    %v1289 = vrot.slane %v1287, 5
    %v1290 = vor.u32 %v1286, %v1289
    %v1291 = vrot.slane %v1290, 4
    %v1293 = vshll.u32 %v1204, 16
    %v1295 = vrot.slane %v1293, 5
    %v1296 = vsel %vm242, %v1291, %v1295
    %v1298 = vshrl.u32 %v1205, 16
    %v1300 = vrot.slane %v1298, 4
    %v1301 = vshll.u32 %v1205, 16
    %v1303 = vrot.slane %v1301, 5
    %v1304 = vor.u32 %v1300, %v1303
    %v1305 = vrot.slane %v1304, 4
    %v1307 = vshll.u32 %v1206, 16
    %v1309 = vrot.slane %v1307, 5
    %v1310 = vsel %vm242, %v1305, %v1309
    %v1312 = vshrl.u32 %v1207, 16
    %v1314 = vrot.slane %v1312, 4
    %v1315 = vshll.u32 %v1207, 16
    %v1317 = vrot.slane %v1315, 5
    %v1318 = vor.u32 %v1314, %v1317
    %v1319 = vrot.slane %v1318, 4
    %v1321 = vshll.u32 %v1208, 16
    %v1323 = vrot.slane %v1321, 5
    %v1324 = vsel %vm242, %v1319, %v1323
    %v1326 = vshrl.u32 %v1209, 16
    %v1328 = vrot.slane %v1326, 4
    %v1329 = vshll.u32 %v1209, 16
    %v1331 = vrot.slane %v1329, 5
    %v1332 = vor.u32 %v1328, %v1331
    %v1333 = vrot.slane %v1332, 4
    %v1335 = vshll.u32 %v1210, 16
    %v1337 = vrot.slane %v1335, 5
    %v1338 = vsel %vm242, %v1333, %v1337
    %v1340 = vshrl.u32 %v1211, 16
    %v1342 = vrot.slane %v1340, 4
    %v1343 = vshll.u32 %v1211, 16
    %v1345 = vrot.slane %v1343, 5
    %v1346 = vor.u32 %v1342, %v1345
    %v1347 = vrot.slane %v1346, 4
    %v1349 = vshll.u32 %v1212, 16
    %v1351 = vrot.slane %v1349, 5
    %v1352 = vsel %vm242, %v1347, %v1351
    %v1354 = vshrl.u32 %v1213, 16
    %v1356 = vrot.slane %v1354, 4
    %v1357 = vshll.u32 %v1213, 16
    %v1359 = vrot.slane %v1357, 5
    %v1360 = vor.u32 %v1356, %v1359
    %v1361 = vrot.slane %v1360, 4
    %v1363 = vshll.u32 %v1214, 16
    %v1365 = vrot.slane %v1363, 5
    %v1366 = vsel %vm242, %v1361, %v1365
    %v1368 = vshrl.u32 %v1215, 16
    %v1370 = vrot.slane %v1368, 4
    %v1371 = vshll.u32 %v1215, 16
    %v1373 = vrot.slane %v1371, 5
    %v1374 = vor.u32 %v1370, %v1373
    %v1375 = vrot.slane %v1374, 4
    %v1377 = vshll.u32 %v1216, 16
    %v1379 = vrot.slane %v1377, 5
    %v1380 = vsel %vm242, %v1375, %v1379
    %v1382 = vshrl.u32 %v1217, 16
    %v1384 = vrot.slane %v1382, 4
    %v1385 = vshll.u32 %v1217, 16
    %v1387 = vrot.slane %v1385, 5
    %v1388 = vor.u32 %v1384, %v1387
    %v1389 = vrot.slane %v1388, 4
    %v1391 = vshll.u32 %v1218, 16
    %v1393 = vrot.slane %v1391, 5
    %v1394 = vsel %vm242, %v1389, %v1393
    %v1396 = vshrl.u32 %v1219, 16
    %v1398 = vrot.slane %v1396, 4
    %v1399 = vshll.u32 %v1219, 16
    %v1401 = vrot.slane %v1399, 5
    %v1402 = vor.u32 %v1398, %v1401
    %v1403 = vrot.slane %v1402, 4
    %v1405 = vshll.u32 %v1220, 16
    %v1407 = vrot.slane %v1405, 5
    %v1408 = vsel %vm242, %v1403, %v1407
    %v1410 = vshrl.u32 %v1221, 16
    %v1412 = vrot.slane %v1410, 4
    %v1413 = vshll.u32 %v1221, 16
    %v1415 = vrot.slane %v1413, 5
    %v1416 = vor.u32 %v1412, %v1415
    %v1417 = vrot.slane %v1416, 4
    %v1419 = vshll.u32 %v1222, 16
    %v1421 = vrot.slane %v1419, 5
    %v1422 = vsel %vm242, %v1417, %v1421
    %v1424 = vshrl.u32 %v1223, 16
    %v1426 = vrot.slane %v1424, 4
    %v1427 = vshll.u32 %v1223, 16
    %v1429 = vrot.slane %v1427, 5
    %v1430 = vor.u32 %v1426, %v1429
    %v1431 = vrot.slane %v1430, 4
    %v1433 = vshll.u32 %v1224, 16
    %v1435 = vrot.slane %v1433, 5
    %v1436 = vsel %vm242, %v1431, %v1435
    %v1438 = vshrl.u32 %v1225, 16
    %v1440 = vrot.slane %v1438, 4
    %v1441 = vshll.u32 %v1225, 16
    %v1443 = vrot.slane %v1441, 5
    %v1444 = vor.u32 %v1440, %v1443
    %v1445 = vrot.slane %v1444, 4
    %v1447 = vshll.u32 %v1226, 16
    %v1449 = vrot.slane %v1447, 5
    %v1450 = vsel %vm242, %v1445, %v1449
    %v1451 = vunpack.c.l.b16 %v1240
    %v1452 = vunpack.c.l.b16 %v1254
    %v1453 = vunpack.c.l.b16 %v1268
    %v1454 = vunpack.c.l.b16 %v1282
    %v1455 = vunpack.c.l.b16 %v1296
    %v1456 = vunpack.c.l.b16 %v1310
    %v1457 = vunpack.c.l.b16 %v1324
    %v1458 = vunpack.c.l.b16 %v1338
    %v1459 = vunpack.c.l.b16 %v1352
    %v1460 = vunpack.c.l.b16 %v1366
    %v1461 = vunpack.c.l.b16 %v1380
    %v1462 = vunpack.c.l.b16 %v1394
    %v1463 = vunpack.c.l.b16 %v1408
    %v1464 = vunpack.c.l.b16 %v1422
    %v1465 = vunpack.c.l.b16 %v1436
    %v1466 = vunpack.c.l.b16 %v1450
    %v1467 = vpack.c.b16 %v1452, %v1451
    %v1468 = vpack.c.b16 %v1454, %v1453
    %v1469 = vpack.c.b16 %v1456, %v1455
    %v1470 = vpack.c.b16 %v1458, %v1457
    %v1471 = vpack.c.b16 %v1460, %v1459
    %v1472 = vpack.c.b16 %v1462, %v1461
    %v1473 = vpack.c.b16 %v1464, %v1463
    %v1474 = vpack.c.b16 %v1466, %v1465
    %1475 = vrot.lane.b32.xlu0 %v1467, 32
    %v1476 = vpop.permute.xlu0 %1475
    %1477 = vrot.lane.b32.xlu0 %v1468, 32
    %v1478 = vpop.permute.xlu0 %1477
    %1479 = vrot.lane.b32.xlu0 %v1469, 32
    %v1480 = vpop.permute.xlu0 %1479
    %1481 = vrot.lane.b32.xlu0 %v1470, 32
    %v1482 = vpop.permute.xlu0 %1481
    %1483 = vrot.lane.b32.xlu0 %v1471, 32
    %v1484 = vpop.permute.xlu0 %1483
    %1485 = vrot.lane.b32.xlu0 %v1472, 32
    %v1486 = vpop.permute.xlu0 %1485
    %1487 = vrot.lane.b32.xlu0 %v1473, 32
    %v1488 = vpop.permute.xlu0 %1487
    %1489 = vrot.lane.b32.xlu0 %v1474, 32
    %v1490 = vpop.permute.xlu0 %1489
    %vm1499 = vcmask 294144
    %1500 = vst.msk [vmem:[#allocation2] sm:$0xff] %vm1499, %v1476
    %1501 = vst.msk [vmem:[#allocation2 + $0x8] sm:$0xff] %vm1499, %v1478
    %1502 = vst.msk [vmem:[#allocation2 + $0x10] sm:$0xff] %vm1499, %v1480
    %1503 = vst.msk [vmem:[#allocation2 + $0x18] sm:$0xff] %vm1499, %v1482
    %1504 = vst.msk [vmem:[#allocation2 + $0x20] sm:$0xff] %vm1499, %v1484
    %1505 = vst.msk [vmem:[#allocation2 + $0x28] sm:$0xff] %vm1499, %v1486
    %1506 = vst.msk [vmem:[#allocation2 + $0x30] sm:$0xff] %vm1499, %v1488
    %1507 = vst.msk [vmem:[#allocation2 + $0x38] sm:$0xff] %vm1499, %v1490
    %v1508 = vld [vmem:[#allocation2] sm:$0xff]
    %v1509 = vld [vmem:[#allocation2 + $0x8] sm:$0xff]
    %v1510 = vld [vmem:[#allocation2 + $0x10] sm:$0xff]
    %v1511 = vld [vmem:[#allocation2 + $0x18] sm:$0xff]
    %v1512 = vld [vmem:[#allocation2 + $0x20] sm:$0xff]
    %v1513 = vld [vmem:[#allocation2 + $0x28] sm:$0xff]
    %v1514 = vld [vmem:[#allocation2 + $0x30] sm:$0xff]
    %v1515 = vld [vmem:[#allocation2 + $0x38] sm:$0xff]
    %v1516 = vld [vmem:[%s4] sm:$0xf]
    %v1517 = vld [vmem:[%s4 + $0x4] sm:$0xf]
    %v1518 = vld [vmem:[%s4 + $0x8] sm:$0xf]
    %v1519 = vld [vmem:[%s4 + $0xc] sm:$0xf]
    %v1520 = vld [vmem:[%s4 + $0x10] sm:$0x3]
    %v1526 = vunpack.c.l.b16 %v1516
    %v1527 = vunpack.c.l.b16 %v1517
    %v1528 = vunpack.c.l.b16 %v1518
    %v1529 = vunpack.c.l.b16 %v1519
    %v1530 = vunpack.c.l.b16 %v1520
    %v1531 = vpack.c.b16 %v1527, %v1526
    %v1532 = vpack.c.b16 %v1529, %v1528
    %v1533 = vpack.c.b16 %v1530, %v1530
    %vm1536 = vcmask 293888
    %v1538 = vsel %vm1536, %v1508, 0
    %v1541 = vsel %vm1536, %v1509, 0
    %v1544 = vsel %vm1536, %v1510, 0
    %v1547 = vsel %vm1536, %v1511, 0
    %v1550 = vsel %vm1536, %v1512, 0
    %v1553 = vsel %vm1536, %v1513, 0
    %v1556 = vsel %vm1536, %v1514, 0
    %v1559 = vsel %vm1536, %v1515, 0
    %vm1561 = vcmask 1041408
    %v1563 = vsel %vm1561, %v1533, 0
    %1565 = vmatprep.subr.bf16.mxu0 0
    %1566 = vmatpush1.bf16.msra.mxu0 %v1531
    %1567 = vmatprep.subr.bf16.mxu0 0
    %1568 = vmatpush1.bf16.msra.mxu0 %v1532
    %1569 = vmatprep.subr.bf16.mxu0 0
    %1570 = vmatpush1.bf16.msra.mxu0 %v1563
    %1571 = vmatprep.subr.bf16.mxu0 0
    %1572 = vmatpush1.bf16.msra.mxu0 0
    %1573 = vmatprep.subr.bf16.mxu0 0
    %1574 = vmatpush1.bf16.msra.mxu0 0
    %1575 = vmatprep.subr.bf16.mxu0 0
    %1576 = vmatpush1.bf16.msra.mxu0 0
    %1577 = vmatprep.subr.bf16.mxu0 0
    %1578 = vmatpush1.bf16.msra.mxu0 0
    %1579 = vmatprep.subr.bf16.mxu0 0
    %1580 = vmatpush1.bf16.msra.mxu0 0
    %1581 = vmatprep.subr.bf16.mxu0 0
    %1582 = vmatpush1.bf16.msra.mxu0 0
    %1583 = vmatprep.subr.bf16.mxu0 0
    %1584 = vmatpush1.bf16.msra.mxu0 0
    %1585 = vmatprep.subr.bf16.mxu0 0
    %1586 = vmatpush1.bf16.msra.mxu0 0
    %1587 = vmatprep.subr.bf16.mxu0 0
    %1588 = vmatpush1.bf16.msra.mxu0 0
    %1589 = vmatprep.subr.bf16.mxu0 0
    %1590 = vmatpush1.bf16.msra.mxu0 0
    %1591 = vmatprep.subr.bf16.mxu0 0
    %1592 = vmatpush1.bf16.msra.mxu0 0
    %1593 = vmatprep.subr.bf16.mxu0 0
    %1594 = vmatpush1.bf16.msra.mxu0 0
    %1595 = vmatprep.subr.bf16.mxu0 0
    %1596 = vmatpush1.bf16.msra.mxu0 0
    %1597 = vmatprep.mubr.bf16.mxu0 0
    %1598 = vmatmul.mubr.bf16.gmra.mrb[0].mxu0 %v1538
    %v1599 = vpop.f32.mrb[0].mxu0
    %v1600 = vadd.f32 0.0, %v1599
    %v1601 = vpop.f32.mrb[0].mxu0
    %v1602 = vpop.f32.mrb[0].mxu0
    %v1603 = vadd.f32 0.0, %v1602
    %v1604 = vpop.f32.mrb[0].mxu0
    %1605 = vmatprep.mubr.bf16.mxu0 0
    %1606 = vmatmul.mubr.bf16.gmra.mrb[0].mxu0 %v1541
    %v1607 = vpop.f32.mrb[0].mxu0
    %v1608 = vadd.f32 0.0, %v1607
    %v1609 = vpop.f32.mrb[0].mxu0
    %v1610 = vpop.f32.mrb[0].mxu0
    %v1611 = vadd.f32 0.0, %v1610
    %v1612 = vpop.f32.mrb[0].mxu0
    %1613 = vmatprep.mubr.bf16.mxu0 0
    %1614 = vmatmul.mubr.bf16.gmra.mrb[0].mxu0 %v1544
    %v1615 = vpop.f32.mrb[0].mxu0
    %v1616 = vadd.f32 0.0, %v1615
    %v1617 = vpop.f32.mrb[0].mxu0
    %v1618 = vpop.f32.mrb[0].mxu0
    %v1619 = vadd.f32 0.0, %v1618
    %v1620 = vpop.f32.mrb[0].mxu0
    %1621 = vmatprep.mubr.bf16.mxu0 0
    %1622 = vmatmul.mubr.bf16.gmra.mrb[0].mxu0 %v1547
    %v1623 = vpop.f32.mrb[0].mxu0
    %v1624 = vadd.f32 0.0, %v1623
    %v1625 = vpop.f32.mrb[0].mxu0
    %v1626 = vpop.f32.mrb[0].mxu0
    %v1627 = vadd.f32 0.0, %v1626
    %v1628 = vpop.f32.mrb[0].mxu0
    %1629 = vmatprep.mubr.bf16.mxu0 0
    %1630 = vmatmul.mubr.bf16.gmra.mrb[0].mxu0 %v1550
    %v1631 = vpop.f32.mrb[0].mxu0
    %v1632 = vadd.f32 0.0, %v1631
    %v1633 = vpop.f32.mrb[0].mxu0
    %v1634 = vpop.f32.mrb[0].mxu0
    %v1635 = vadd.f32 0.0, %v1634
    %v1636 = vpop.f32.mrb[0].mxu0
    %1637 = vmatprep.mubr.bf16.mxu0 0
    %1638 = vmatmul.mubr.bf16.gmra.mrb[0].mxu0 %v1553
    %v1639 = vpop.f32.mrb[0].mxu0
    %v1640 = vadd.f32 0.0, %v1639
    %v1641 = vpop.f32.mrb[0].mxu0
    %v1642 = vpop.f32.mrb[0].mxu0
    %v1643 = vadd.f32 0.0, %v1642
    %v1644 = vpop.f32.mrb[0].mxu0
    %1645 = vmatprep.mubr.bf16.mxu0 0
    %1646 = vmatmul.mubr.bf16.gmra.mrb[0].mxu0 %v1556
    %v1647 = vpop.f32.mrb[0].mxu0
    %v1648 = vadd.f32 0.0, %v1647
    %v1649 = vpop.f32.mrb[0].mxu0
    %v1650 = vpop.f32.mrb[0].mxu0
    %v1651 = vadd.f32 0.0, %v1650
    %v1652 = vpop.f32.mrb[0].mxu0
    %1653 = vmatprep.mubr.bf16.mxu0 0
    %1654 = vmatmul.mubr.bf16.gmra.mrb[0].mxu0 %v1559
    %v1655 = vpop.f32.mrb[0].mxu0
    %v1656 = vadd.f32 0.0, %v1655
    %v1657 = vpop.f32.mrb[0].mxu0
    %v1658 = vpop.f32.mrb[0].mxu0
    %v1659 = vadd.f32 0.0, %v1658
    %v1660 = vpop.f32.mrb[0].mxu0
    %1661 = vdwg.mxu0
    %v1662 = vld [vmem:[%s5] sm:$0x1]
    %v1663 = vld [vmem:[%s6] sm:$0x1]
    %v1664 = vadd.f32 %v1600, %v1603
    %v1665 = vadd.f32 %v1664, %v1608
    %v1666 = vadd.f32 %v1665, %v1611
    %v1667 = vadd.f32 %v1666, %v1616
    %v1668 = vadd.f32 %v1667, %v1619
    %v1669 = vadd.f32 %v1668, %v1624
    %v1670 = vadd.f32 %v1669, %v1627
    %v1671 = vadd.f32 %v1670, %v1632
    %v1672 = vadd.f32 %v1671, %v1635
    %v1673 = vadd.f32 %v1672, %v1640
    %v1674 = vadd.f32 %v1673, %v1643
    %v1675 = vadd.f32 %v1674, %v1648
    %v1676 = vadd.f32 %v1675, %v1651
    %v1677 = vadd.f32 %v1676, %v1656
    %v1678 = vadd.f32 %v1677, %v1659
    %v1679 = vrot.slane %v1678, 4
    %v1680 = vadd.f32 %v1678, %v1679
    %v1681 = vrot.slane %v1680, 2
    %v1682 = vadd.f32 %v1680, %v1681
    %v1683 = vrot.slane %v1682, 1
    %v1684 = vadd.f32 %v1682, %v1683
    %v1685 = vmul.f32 %v1600, %v1600
    %v1686 = vmul.f32 %v1603, %v1603
    %v1687 = vmul.f32 %v1608, %v1608
    %v1688 = vmul.f32 %v1611, %v1611
    %v1689 = vmul.f32 %v1616, %v1616
    %v1690 = vmul.f32 %v1619, %v1619
    %v1691 = vmul.f32 %v1624, %v1624
    %v1692 = vmul.f32 %v1627, %v1627
    %v1693 = vmul.f32 %v1632, %v1632
    %v1694 = vmul.f32 %v1635, %v1635
    %v1695 = vmul.f32 %v1640, %v1640
    %v1696 = vmul.f32 %v1643, %v1643
    %v1697 = vmul.f32 %v1648, %v1648
    %v1698 = vmul.f32 %v1651, %v1651
    %v1699 = vmul.f32 %v1656, %v1656
    %v1700 = vmul.f32 %v1659, %v1659
    %v1701 = vadd.f32 %v1685, %v1686
    %v1702 = vadd.f32 %v1701, %v1687
    %v1703 = vadd.f32 %v1702, %v1688
    %v1704 = vadd.f32 %v1703, %v1689
    %v1705 = vadd.f32 %v1704, %v1690
    %v1706 = vadd.f32 %v1705, %v1691
    %v1707 = vadd.f32 %v1706, %v1692
    %v1708 = vadd.f32 %v1707, %v1693
    %v1709 = vadd.f32 %v1708, %v1694
    %v1710 = vadd.f32 %v1709, %v1695
    %v1711 = vadd.f32 %v1710, %v1696
    %v1712 = vadd.f32 %v1711, %v1697
    %v1713 = vadd.f32 %v1712, %v1698
    %v1714 = vadd.f32 %v1713, %v1699
    %v1715 = vadd.f32 %v1714, %v1700
    %v1716 = vrot.slane %v1715, 4
    %v1717 = vadd.f32 %v1715, %v1716
    %v1718 = vrot.slane %v1717, 2
    %v1719 = vadd.f32 %v1717, %v1718
    %v1720 = vrot.slane %v1719, 1
    %v1721 = vadd.f32 %v1719, %v1720
    %v1722 = vmul.f32 %v1684, 0.0078125
    %v1723 = vmul.f32 %v1721, 0.0078125
    %v1724 = vmul.f32 %v1722, %v1722
    %v1725 = vsub.f32 %v1723, %v1724
    %v1726 = vmax.f32 %v1725, 0.0
    %v1727 = vsub.f32 %v1600, %v1722
    %v1728 = vsub.f32 %v1603, %v1722
    %v1729 = vsub.f32 %v1608, %v1722
    %v1730 = vsub.f32 %v1611, %v1722
    %v1731 = vsub.f32 %v1616, %v1722
    %v1732 = vsub.f32 %v1619, %v1722
    %v1733 = vsub.f32 %v1624, %v1722
    %v1734 = vsub.f32 %v1627, %v1722
    %v1735 = vsub.f32 %v1632, %v1722
    %v1736 = vsub.f32 %v1635, %v1722
    %v1737 = vsub.f32 %v1640, %v1722
    %v1738 = vsub.f32 %v1643, %v1722
    %v1739 = vsub.f32 %v1648, %v1722
    %v1740 = vsub.f32 %v1651, %v1722
    %v1741 = vsub.f32 %v1656, %v1722
    %v1742 = vsub.f32 %v1659, %v1722
    %v1743 = vadd.f32 %v1726, 1e-05
    %v1744 = vrsqrt.pop %v1743
    %v1745 = vmul.f32 %v1727, %v1744
    %v1746 = vmul.f32 %v1728, %v1744
    %v1747 = vmul.f32 %v1729, %v1744
    %v1748 = vmul.f32 %v1730, %v1744
    %v1749 = vmul.f32 %v1731, %v1744
    %v1750 = vmul.f32 %v1732, %v1744
    %v1751 = vmul.f32 %v1733, %v1744
    %v1752 = vmul.f32 %v1734, %v1744
    %v1753 = vmul.f32 %v1735, %v1744
    %v1754 = vmul.f32 %v1736, %v1744
    %v1755 = vmul.f32 %v1737, %v1744
    %v1756 = vmul.f32 %v1738, %v1744
    %v1757 = vmul.f32 %v1739, %v1744
    %v1758 = vmul.f32 %v1740, %v1744
    %v1759 = vmul.f32 %v1741, %v1744
    %v1760 = vmul.f32 %v1742, %v1744
    %v1762 = vlaneseq
    %v1763 = vshrl.u32 %v1762, 7
    %v1764 = vsub.s32 0, %v1763
    %v1765 = vrot.slane %v1662, %v1764
    %v1767 = vmul.f32 %v1745, %v1765
    %v1768 = vmul.f32 %v1746, %v1765
    %v1769 = vmul.f32 %v1747, %v1765
    %v1770 = vmul.f32 %v1748, %v1765
    %v1771 = vmul.f32 %v1749, %v1765
    %v1772 = vmul.f32 %v1750, %v1765
    %v1773 = vmul.f32 %v1751, %v1765
    %v1774 = vmul.f32 %v1752, %v1765
    %v1775 = vmul.f32 %v1753, %v1765
    %v1776 = vmul.f32 %v1754, %v1765
    %v1777 = vmul.f32 %v1755, %v1765
    %v1778 = vmul.f32 %v1756, %v1765
    %v1779 = vmul.f32 %v1757, %v1765
    %v1780 = vmul.f32 %v1758, %v1765
    %v1781 = vmul.f32 %v1759, %v1765
    %v1782 = vmul.f32 %v1760, %v1765
    %v1784 = vlaneseq
    %v1785 = vshrl.u32 %v1784, 7
    %v1786 = vsub.s32 0, %v1785
    %v1787 = vrot.slane %v1663, %v1786
    %v1789 = vadd.f32 %v1767, %v1787
    %v1790 = vadd.f32 %v1768, %v1787
    %v1791 = vadd.f32 %v1769, %v1787
    %v1792 = vadd.f32 %v1770, %v1787
    %v1793 = vadd.f32 %v1771, %v1787
    %v1794 = vadd.f32 %v1772, %v1787
    %v1795 = vadd.f32 %v1773, %v1787
    %v1796 = vadd.f32 %v1774, %v1787
    %v1797 = vadd.f32 %v1775, %v1787
    %v1798 = vadd.f32 %v1776, %v1787
    %v1799 = vadd.f32 %v1777, %v1787
    %v1800 = vadd.f32 %v1778, %v1787
    %v1801 = vadd.f32 %v1779, %v1787
    %v1802 = vadd.f32 %v1780, %v1787
    %v1803 = vadd.f32 %v1781, %v1787
    %v1804 = vadd.f32 %v1782, %v1787
    %v1805 = vmax.f32 %v1789, 0.0
    %v1806 = vmax.f32 %v1790, 0.0
    %v1807 = vmax.f32 %v1791, 0.0
    %v1808 = vmax.f32 %v1792, 0.0
    %v1809 = vmax.f32 %v1793, 0.0
    %v1810 = vmax.f32 %v1794, 0.0
    %v1811 = vmax.f32 %v1795, 0.0
    %v1812 = vmax.f32 %v1796, 0.0
    %v1813 = vmax.f32 %v1797, 0.0
    %v1814 = vmax.f32 %v1798, 0.0
    %v1815 = vmax.f32 %v1799, 0.0
    %v1816 = vmax.f32 %v1800, 0.0
    %v1817 = vmax.f32 %v1801, 0.0
    %v1818 = vmax.f32 %v1802, 0.0
    %v1819 = vmax.f32 %v1803, 0.0
    %v1820 = vmax.f32 %v1804, 0.0
    %1821 = vst [vmem:[#allocation4] sm:$0xff] 0.0
    %1822 = vst [vmem:[#allocation4 + $0x8] sm:$0xff] 0.0
    %1823 = vst [vmem:[#allocation4 + $0xa0] sm:$0xff] 0.0
    %1824 = vst [vmem:[#allocation4 + $0xa8] sm:$0xff] 0.0
    %s1825 = scalar_lea.vmem [#allocation4], 144
    %1826 = vst [vmem:[%s1825] sm:$0xff] 0.0
    %1827 = vst [vmem:[%s1825 + $0x8] sm:$0xff] 0.0
    %1828 = vst [vmem:[%s1825 + $0xa0] sm:$0xff] 0.0
    %1829 = vst [vmem:[%s1825 + $0xa8] sm:$0xff] 0.0
    %s1830 = scalar_lea.vmem [#allocation4], 16
    %1831 = vst [vmem:[%s1830] sm:$0x1] 0.0
    %1832 = vst [vmem:[%s1830 + $0x10] sm:$0x1] 0.0
    %1833 = vst [vmem:[%s1830 + $0x20] sm:$0x1] 0.0
    %1834 = vst [vmem:[%s1830 + $0x30] sm:$0x1] 0.0
    %1835 = vst [vmem:[%s1830 + $0x40] sm:$0x1] 0.0
    %1836 = vst [vmem:[%s1830 + $0x50] sm:$0x1] 0.0
    %1837 = vst [vmem:[%s1830 + $0x60] sm:$0x1] 0.0
    %1838 = vst [vmem:[%s1830 + $0x70] sm:$0x1] 0.0
    %1839 = vst [vmem:[%s1830 + $0xa0] sm:$0x1] 0.0
    %1840 = vst [vmem:[%s1830 + $0xb0] sm:$0x1] 0.0
    %1841 = vst [vmem:[%s1830 + $0xc0] sm:$0x1] 0.0
    %1842 = vst [vmem:[%s1830 + $0xd0] sm:$0x1] 0.0
    %1843 = vst [vmem:[%s1830 + $0xe0] sm:$0x1] 0.0
    %1844 = vst [vmem:[%s1830 + $0xf0] sm:$0x1] 0.0
    %1845 = vst [vmem:[%s1830 + $0x100] sm:$0x1] 0.0
    %1846 = vst [vmem:[%s1830 + $0x110] sm:$0x1] 0.0
    %1847 = vst [vmem:[%s1830 + $0x9] sm:$0x1] 0.0
    %1848 = vst [vmem:[%s1830 + $0x19] sm:$0x1] 0.0
    %1849 = vst [vmem:[%s1830 + $0x29] sm:$0x1] 0.0
    %1850 = vst [vmem:[%s1830 + $0x39] sm:$0x1] 0.0
    %1851 = vst [vmem:[%s1830 + $0x49] sm:$0x1] 0.0
    %1852 = vst [vmem:[%s1830 + $0x59] sm:$0x1] 0.0
    %1853 = vst [vmem:[%s1830 + $0x69] sm:$0x1] 0.0
    %1854 = vst [vmem:[%s1830 + $0x79] sm:$0x1] 0.0
    %1855 = vst [vmem:[%s1830 + $0xa9] sm:$0x1] 0.0
    %1856 = vst [vmem:[%s1830 + $0xb9] sm:$0x1] 0.0
    %1857 = vst [vmem:[%s1830 + $0xc9] sm:$0x1] 0.0
    %1858 = vst [vmem:[%s1830 + $0xd9] sm:$0x1] 0.0
    %1859 = vst [vmem:[%s1830 + $0xe9] sm:$0x1] 0.0
    %1860 = vst [vmem:[%s1830 + $0xf9] sm:$0x1] 0.0
    %1861 = vst [vmem:[%s1830 + $0x109] sm:$0x1] 0.0
    %1862 = vst [vmem:[%s1830 + $0x119] sm:$0x1] 0.0
    %1863 = vst [vmem:[%s1830 + $0x1] sm:$0xff] %v1805
    %1864 = vst [vmem:[%s1830 + $0x11] sm:$0xff] %v1806
    %1865 = vst [vmem:[%s1830 + $0x21] sm:$0xff] %v1807
    %1866 = vst [vmem:[%s1830 + $0x31] sm:$0xff] %v1808
    %1867 = vst [vmem:[%s1830 + $0x41] sm:$0xff] %v1809
    %1868 = vst [vmem:[%s1830 + $0x51] sm:$0xff] %v1810
    %1869 = vst [vmem:[%s1830 + $0x61] sm:$0xff] %v1811
    %1870 = vst [vmem:[%s1830 + $0x71] sm:$0xff] %v1812
    %1871 = vst [vmem:[%s1830 + $0xa1] sm:$0xff] %v1813
    %1872 = vst [vmem:[%s1830 + $0xb1] sm:$0xff] %v1814
    %1873 = vst [vmem:[%s1830 + $0xc1] sm:$0xff] %v1815
    %1874 = vst [vmem:[%s1830 + $0xd1] sm:$0xff] %v1816
    %1875 = vst [vmem:[%s1830 + $0xe1] sm:$0xff] %v1817
    %1876 = vst [vmem:[%s1830 + $0xf1] sm:$0xff] %v1818
    %1877 = vst [vmem:[%s1830 + $0x101] sm:$0xff] %v1819
    %1878 = vst [vmem:[%s1830 + $0x111] sm:$0xff] %v1820
    %v1879 = vld [vmem:[#allocation4] sm:$0xff]
    %v1880 = vld [vmem:[#allocation4 + $0x10] sm:$0xff]
    %v1881 = vld [vmem:[#allocation4 + $0x20] sm:$0xff]
    %v1882 = vld [vmem:[#allocation4 + $0x30] sm:$0xff]
    %v1883 = vld [vmem:[#allocation4 + $0x40] sm:$0xff]
    %v1884 = vld [vmem:[#allocation4 + $0x50] sm:$0xff]
    %v1885 = vld [vmem:[#allocation4 + $0x60] sm:$0xff]
    %v1886 = vld [vmem:[#allocation4 + $0x70] sm:$0xff]
    %v1887 = vld [vmem:[#allocation4 + $0xa0] sm:$0xff]
    %v1888 = vld [vmem:[#allocation4 + $0xb0] sm:$0xff]
    %v1889 = vld [vmem:[#allocation4 + $0xc0] sm:$0xff]
    %v1890 = vld [vmem:[#allocation4 + $0xd0] sm:$0xff]
    %v1891 = vld [vmem:[#allocation4 + $0xe0] sm:$0xff]
    %v1892 = vld [vmem:[#allocation4 + $0xf0] sm:$0xff]
    %v1893 = vld [vmem:[#allocation4 + $0x100] sm:$0xff]
    %v1894 = vld [vmem:[#allocation4 + $0x110] sm:$0xff]
    %v1895 = vpack.c.bf16 %v1880, %v1879
    %v1896 = vpack.c.bf16 %v1882, %v1881
    %v1897 = vpack.c.bf16 %v1884, %v1883
    %v1898 = vpack.c.bf16 %v1886, %v1885
    %v1899 = vpack.c.bf16 %v1888, %v1887
    %v1900 = vpack.c.bf16 %v1890, %v1889
    %v1901 = vpack.c.bf16 %v1892, %v1891
    %v1902 = vpack.c.bf16 %v1894, %v1893
    %1903 = vst [vmem:[#allocation3] sm:$0xff] %v1895
    %1904 = vst [vmem:[#allocation3 + $0x48] sm:$0xff] %v1896
    %1905 = vst [vmem:[#allocation3 + $0x90] sm:$0xff] %v1897
    %1906 = vst [vmem:[#allocation3 + $0xd8] sm:$0xff] %v1898
    %1907 = vst [vmem:[#allocation3 + $0x120] sm:$0xff] %v1899
    %1908 = vst [vmem:[#allocation3 + $0x168] sm:$0xff] %v1900
    %1909 = vst [vmem:[#allocation3 + $0x1b0] sm:$0xff] %v1901
    %1910 = vst [vmem:[#allocation3 + $0x1f8] sm:$0xff] %v1902
    %v1911 = vld [vmem:[#allocation4 + $0x1] sm:$0xff]
    %v1912 = vld [vmem:[#allocation4 + $0x11] sm:$0xff]
    %v1913 = vld [vmem:[#allocation4 + $0x21] sm:$0xff]
    %v1914 = vld [vmem:[#allocation4 + $0x31] sm:$0xff]
    %v1915 = vld [vmem:[#allocation4 + $0x41] sm:$0xff]
    %v1916 = vld [vmem:[#allocation4 + $0x51] sm:$0xff]
    %v1917 = vld [vmem:[#allocation4 + $0x61] sm:$0xff]
    %v1918 = vld [vmem:[#allocation4 + $0x71] sm:$0xff]
    %v1919 = vld [vmem:[#allocation4 + $0xa1] sm:$0xff]
    %v1920 = vld [vmem:[#allocation4 + $0xb1] sm:$0xff]
    %v1921 = vld [vmem:[#allocation4 + $0xc1] sm:$0xff]
    %v1922 = vld [vmem:[#allocation4 + $0xd1] sm:$0xff]
    %v1923 = vld [vmem:[#allocation4 + $0xe1] sm:$0xff]
    %v1924 = vld [vmem:[#allocation4 + $0xf1] sm:$0xff]
    %v1925 = vld [vmem:[#allocation4 + $0x101] sm:$0xff]
    %v1926 = vld [vmem:[#allocation4 + $0x111] sm:$0xff]
    %v1927 = vpack.c.bf16 %v1912, %v1911
    %v1928 = vpack.c.bf16 %v1914, %v1913
    %v1929 = vpack.c.bf16 %v1916, %v1915
    %v1930 = vpack.c.bf16 %v1918, %v1917
    %v1931 = vpack.c.bf16 %v1920, %v1919
    %v1932 = vpack.c.bf16 %v1922, %v1921
    %v1933 = vpack.c.bf16 %v1924, %v1923
    %v1934 = vpack.c.bf16 %v1926, %v1925
    %1935 = vst [vmem:[#allocation3 + $0x8] sm:$0xff] %v1927
    %1936 = vst [vmem:[#allocation3 + $0x50] sm:$0xff] %v1928
    %1937 = vst [vmem:[#allocation3 + $0x98] sm:$0xff] %v1929
    %1938 = vst [vmem:[#allocation3 + $0xe0] sm:$0xff] %v1930
    %1939 = vst [vmem:[#allocation3 + $0x128] sm:$0xff] %v1931
    %1940 = vst [vmem:[#allocation3 + $0x170] sm:$0xff] %v1932
    %1941 = vst [vmem:[#allocation3 + $0x1b8] sm:$0xff] %v1933
    %1942 = vst [vmem:[#allocation3 + $0x200] sm:$0xff] %v1934
    %v1943 = vld [vmem:[#allocation4 + $0x2] sm:$0xff]
    %v1944 = vld [vmem:[#allocation4 + $0x12] sm:$0xff]
    %v1945 = vld [vmem:[#allocation4 + $0x22] sm:$0xff]
    %v1946 = vld [vmem:[#allocation4 + $0x32] sm:$0xff]
    %v1947 = vld [vmem:[#allocation4 + $0x42] sm:$0xff]
    %v1948 = vld [vmem:[#allocation4 + $0x52] sm:$0xff]
    %v1949 = vld [vmem:[#allocation4 + $0x62] sm:$0xff]
    %v1950 = vld [vmem:[#allocation4 + $0x72] sm:$0xff]
    %v1951 = vld [vmem:[#allocation4 + $0xa2] sm:$0xff]
    %v1952 = vld [vmem:[#allocation4 + $0xb2] sm:$0xff]
    %v1953 = vld [vmem:[#allocation4 + $0xc2] sm:$0xff]
    %v1954 = vld [vmem:[#allocation4 + $0xd2] sm:$0xff]
    %v1955 = vld [vmem:[#allocation4 + $0xe2] sm:$0xff]
    %v1956 = vld [vmem:[#allocation4 + $0xf2] sm:$0xff]
    %v1957 = vld [vmem:[#allocation4 + $0x102] sm:$0xff]
    %v1958 = vld [vmem:[#allocation4 + $0x112] sm:$0xff]
    %v1959 = vpack.c.bf16 %v1944, %v1943
    %v1960 = vpack.c.bf16 %v1946, %v1945
    %v1961 = vpack.c.bf16 %v1948, %v1947
    %v1962 = vpack.c.bf16 %v1950, %v1949
    %v1963 = vpack.c.bf16 %v1952, %v1951
    %v1964 = vpack.c.bf16 %v1954, %v1953
    %v1965 = vpack.c.bf16 %v1956, %v1955
    %v1966 = vpack.c.bf16 %v1958, %v1957
    %1967 = vst [vmem:[#allocation3 + $0x10] sm:$0xff] %v1959
    %1968 = vst [vmem:[#allocation3 + $0x58] sm:$0xff] %v1960
    %1969 = vst [vmem:[#allocation3 + $0xa0] sm:$0xff] %v1961
    %1970 = vst [vmem:[#allocation3 + $0xe8] sm:$0xff] %v1962
    %1971 = vst [vmem:[#allocation3 + $0x130] sm:$0xff] %v1963
    %1972 = vst [vmem:[#allocation3 + $0x178] sm:$0xff] %v1964
    %1973 = vst [vmem:[#allocation3 + $0x1c0] sm:$0xff] %v1965
    %1974 = vst [vmem:[#allocation3 + $0x208] sm:$0xff] %v1966
    %v1975 = vld [vmem:[%s1830] sm:$0xff]
    %v1976 = vld [vmem:[%s1830 + $0x10] sm:$0xff]
    %v1977 = vld [vmem:[%s1830 + $0x20] sm:$0xff]
    %v1978 = vld [vmem:[%s1830 + $0x30] sm:$0xff]
    %v1979 = vld [vmem:[%s1830 + $0x40] sm:$0xff]
    %v1980 = vld [vmem:[%s1830 + $0x50] sm:$0xff]
    %v1981 = vld [vmem:[%s1830 + $0x60] sm:$0xff]
    %v1982 = vld [vmem:[%s1830 + $0x70] sm:$0xff]
    %v1983 = vld [vmem:[%s1830 + $0xa0] sm:$0xff]
    %v1984 = vld [vmem:[%s1830 + $0xb0] sm:$0xff]
    %v1985 = vld [vmem:[%s1830 + $0xc0] sm:$0xff]
    %v1986 = vld [vmem:[%s1830 + $0xd0] sm:$0xff]
    %v1987 = vld [vmem:[%s1830 + $0xe0] sm:$0xff]
    %v1988 = vld [vmem:[%s1830 + $0xf0] sm:$0xff]
    %v1989 = vld [vmem:[%s1830 + $0x100] sm:$0xff]
    %v1990 = vld [vmem:[%s1830 + $0x110] sm:$0xff]
    %v1991 = vpack.c.bf16 %v1976, %v1975
    %v1992 = vpack.c.bf16 %v1978, %v1977
    %v1993 = vpack.c.bf16 %v1980, %v1979
    %v1994 = vpack.c.bf16 %v1982, %v1981
    %v1995 = vpack.c.bf16 %v1984, %v1983
    %v1996 = vpack.c.bf16 %v1986, %v1985
    %v1997 = vpack.c.bf16 %v1988, %v1987
    %v1998 = vpack.c.bf16 %v1990, %v1989
    %1999 = vst [vmem:[#allocation3 + $0x18] sm:$0xff] %v1991
    %2000 = vst [vmem:[#allocation3 + $0x60] sm:$0xff] %v1992
    %2001 = vst [vmem:[#allocation3 + $0xa8] sm:$0xff] %v1993
    %2002 = vst [vmem:[#allocation3 + $0xf0] sm:$0xff] %v1994
    %2003 = vst [vmem:[#allocation3 + $0x138] sm:$0xff] %v1995
    %2004 = vst [vmem:[#allocation3 + $0x180] sm:$0xff] %v1996
    %2005 = vst [vmem:[#allocation3 + $0x1c8] sm:$0xff] %v1997
    %2006 = vst [vmem:[#allocation3 + $0x210] sm:$0xff] %v1998
    %v2007 = vld [vmem:[%s1830 + $0x1] sm:$0xff]
    %v2008 = vld [vmem:[%s1830 + $0x11] sm:$0xff]
    %v2009 = vld [vmem:[%s1830 + $0x21] sm:$0xff]
    %v2010 = vld [vmem:[%s1830 + $0x31] sm:$0xff]
    %v2011 = vld [vmem:[%s1830 + $0x41] sm:$0xff]
    %v2012 = vld [vmem:[%s1830 + $0x51] sm:$0xff]
    %v2013 = vld [vmem:[%s1830 + $0x61] sm:$0xff]
    %v2014 = vld [vmem:[%s1830 + $0x71] sm:$0xff]
    %v2015 = vld [vmem:[%s1830 + $0xa1] sm:$0xff]
    %v2016 = vld [vmem:[%s1830 + $0xb1] sm:$0xff]
    %v2017 = vld [vmem:[%s1830 + $0xc1] sm:$0xff]
    %v2018 = vld [vmem:[%s1830 + $0xd1] sm:$0xff]
    %v2019 = vld [vmem:[%s1830 + $0xe1] sm:$0xff]
    %v2020 = vld [vmem:[%s1830 + $0xf1] sm:$0xff]
    %v2021 = vld [vmem:[%s1830 + $0x101] sm:$0xff]
    %v2022 = vld [vmem:[%s1830 + $0x111] sm:$0xff]
    %v2023 = vpack.c.bf16 %v2008, %v2007
    %v2024 = vpack.c.bf16 %v2010, %v2009
    %v2025 = vpack.c.bf16 %v2012, %v2011
    %v2026 = vpack.c.bf16 %v2014, %v2013
    %v2027 = vpack.c.bf16 %v2016, %v2015
    %v2028 = vpack.c.bf16 %v2018, %v2017
    %v2029 = vpack.c.bf16 %v2020, %v2019
    %v2030 = vpack.c.bf16 %v2022, %v2021
    %2031 = vst [vmem:[#allocation3 + $0x20] sm:$0xff] %v2023
    %2032 = vst [vmem:[#allocation3 + $0x68] sm:$0xff] %v2024
    %2033 = vst [vmem:[#allocation3 + $0xb0] sm:$0xff] %v2025
    %2034 = vst [vmem:[#allocation3 + $0xf8] sm:$0xff] %v2026
    %2035 = vst [vmem:[#allocation3 + $0x140] sm:$0xff] %v2027
    %2036 = vst [vmem:[#allocation3 + $0x188] sm:$0xff] %v2028
    %2037 = vst [vmem:[#allocation3 + $0x1d0] sm:$0xff] %v2029
    %2038 = vst [vmem:[#allocation3 + $0x218] sm:$0xff] %v2030
    %v2039 = vld [vmem:[%s1830 + $0x2] sm:$0xff]
    %v2040 = vld [vmem:[%s1830 + $0x12] sm:$0xff]
    %v2041 = vld [vmem:[%s1830 + $0x22] sm:$0xff]
    %v2042 = vld [vmem:[%s1830 + $0x32] sm:$0xff]
    %v2043 = vld [vmem:[%s1830 + $0x42] sm:$0xff]
    %v2044 = vld [vmem:[%s1830 + $0x52] sm:$0xff]
    %v2045 = vld [vmem:[%s1830 + $0x62] sm:$0xff]
    %v2046 = vld [vmem:[%s1830 + $0x72] sm:$0xff]
    %v2047 = vld [vmem:[%s1830 + $0xa2] sm:$0xff]
    %v2048 = vld [vmem:[%s1830 + $0xb2] sm:$0xff]
    %v2049 = vld [vmem:[%s1830 + $0xc2] sm:$0xff]
    %v2050 = vld [vmem:[%s1830 + $0xd2] sm:$0xff]
    %v2051 = vld [vmem:[%s1830 + $0xe2] sm:$0xff]
    %v2052 = vld [vmem:[%s1830 + $0xf2] sm:$0xff]
    %v2053 = vld [vmem:[%s1830 + $0x102] sm:$0xff]
    %v2054 = vld [vmem:[%s1830 + $0x112] sm:$0xff]
    %v2055 = vpack.c.bf16 %v2040, %v2039
    %v2056 = vpack.c.bf16 %v2042, %v2041
    %v2057 = vpack.c.bf16 %v2044, %v2043
    %v2058 = vpack.c.bf16 %v2046, %v2045
    %v2059 = vpack.c.bf16 %v2048, %v2047
    %v2060 = vpack.c.bf16 %v2050, %v2049
    %v2061 = vpack.c.bf16 %v2052, %v2051
    %v2062 = vpack.c.bf16 %v2054, %v2053
    %2063 = vst [vmem:[#allocation3 + $0x28] sm:$0xff] %v2055
    %2064 = vst [vmem:[#allocation3 + $0x70] sm:$0xff] %v2056
    %2065 = vst [vmem:[#allocation3 + $0xb8] sm:$0xff] %v2057
    %2066 = vst [vmem:[#allocation3 + $0x100] sm:$0xff] %v2058
    %2067 = vst [vmem:[#allocation3 + $0x148] sm:$0xff] %v2059
    %2068 = vst [vmem:[#allocation3 + $0x190] sm:$0xff] %v2060
    %2069 = vst [vmem:[#allocation3 + $0x1d8] sm:$0xff] %v2061
    %2070 = vst [vmem:[#allocation3 + $0x220] sm:$0xff] %v2062
    %s2071 = scalar_lea.vmem [#allocation4], 32
    %v2072 = vld [vmem:[%s2071] sm:$0xff]
    %v2073 = vld [vmem:[%s2071 + $0x10] sm:$0xff]
    %v2074 = vld [vmem:[%s2071 + $0x20] sm:$0xff]
    %v2075 = vld [vmem:[%s2071 + $0x30] sm:$0xff]
    %v2076 = vld [vmem:[%s2071 + $0x40] sm:$0xff]
    %v2077 = vld [vmem:[%s2071 + $0x50] sm:$0xff]
    %v2078 = vld [vmem:[%s2071 + $0x60] sm:$0xff]
    %v2079 = vld [vmem:[%s2071 + $0x70] sm:$0xff]
    %v2080 = vld [vmem:[%s2071 + $0xa0] sm:$0xff]
    %v2081 = vld [vmem:[%s2071 + $0xb0] sm:$0xff]
    %v2082 = vld [vmem:[%s2071 + $0xc0] sm:$0xff]
    %v2083 = vld [vmem:[%s2071 + $0xd0] sm:$0xff]
    %v2084 = vld [vmem:[%s2071 + $0xe0] sm:$0xff]
    %v2085 = vld [vmem:[%s2071 + $0xf0] sm:$0xff]
    %v2086 = vld [vmem:[%s2071 + $0x100] sm:$0xff]
    %v2087 = vld [vmem:[%s2071 + $0x110] sm:$0xff]
    %v2088 = vpack.c.bf16 %v2073, %v2072
    %v2089 = vpack.c.bf16 %v2075, %v2074
    %v2090 = vpack.c.bf16 %v2077, %v2076
    %v2091 = vpack.c.bf16 %v2079, %v2078
    %v2092 = vpack.c.bf16 %v2081, %v2080
    %v2093 = vpack.c.bf16 %v2083, %v2082
    %v2094 = vpack.c.bf16 %v2085, %v2084
    %v2095 = vpack.c.bf16 %v2087, %v2086
    %2096 = vst [vmem:[#allocation3 + $0x30] sm:$0xff] %v2088
    %2097 = vst [vmem:[#allocation3 + $0x78] sm:$0xff] %v2089
    %2098 = vst [vmem:[#allocation3 + $0xc0] sm:$0xff] %v2090
    %2099 = vst [vmem:[#allocation3 + $0x108] sm:$0xff] %v2091
    %2100 = vst [vmem:[#allocation3 + $0x150] sm:$0xff] %v2092
    %2101 = vst [vmem:[#allocation3 + $0x198] sm:$0xff] %v2093
    %2102 = vst [vmem:[#allocation3 + $0x1e0] sm:$0xff] %v2094
    %2103 = vst [vmem:[#allocation3 + $0x228] sm:$0xff] %v2095
    %v2104 = vld [vmem:[%s2071 + $0x1] sm:$0xff]
    %v2105 = vld [vmem:[%s2071 + $0x11] sm:$0xff]
    %v2106 = vld [vmem:[%s2071 + $0x21] sm:$0xff]
    %v2107 = vld [vmem:[%s2071 + $0x31] sm:$0xff]
    %v2108 = vld [vmem:[%s2071 + $0x41] sm:$0xff]
    %v2109 = vld [vmem:[%s2071 + $0x51] sm:$0xff]
    %v2110 = vld [vmem:[%s2071 + $0x61] sm:$0xff]
    %v2111 = vld [vmem:[%s2071 + $0x71] sm:$0xff]
    %v2112 = vld [vmem:[%s2071 + $0xa1] sm:$0xff]
    %v2113 = vld [vmem:[%s2071 + $0xb1] sm:$0xff]
    %v2114 = vld [vmem:[%s2071 + $0xc1] sm:$0xff]
    %v2115 = vld [vmem:[%s2071 + $0xd1] sm:$0xff]
    %v2116 = vld [vmem:[%s2071 + $0xe1] sm:$0xff]
    %v2117 = vld [vmem:[%s2071 + $0xf1] sm:$0xff]
    %v2118 = vld [vmem:[%s2071 + $0x101] sm:$0xff]
    %v2119 = vld [vmem:[%s2071 + $0x111] sm:$0xff]
    %v2120 = vpack.c.bf16 %v2105, %v2104
    %v2121 = vpack.c.bf16 %v2107, %v2106
    %v2122 = vpack.c.bf16 %v2109, %v2108
    %v2123 = vpack.c.bf16 %v2111, %v2110
    %v2124 = vpack.c.bf16 %v2113, %v2112
    %v2125 = vpack.c.bf16 %v2115, %v2114
    %v2126 = vpack.c.bf16 %v2117, %v2116
    %v2127 = vpack.c.bf16 %v2119, %v2118
    %2128 = vst [vmem:[#allocation3 + $0x38] sm:$0xff] %v2120
    %2129 = vst [vmem:[#allocation3 + $0x80] sm:$0xff] %v2121
    %2130 = vst [vmem:[#allocation3 + $0xc8] sm:$0xff] %v2122
    %2131 = vst [vmem:[#allocation3 + $0x110] sm:$0xff] %v2123
    %2132 = vst [vmem:[#allocation3 + $0x158] sm:$0xff] %v2124
    %2133 = vst [vmem:[#allocation3 + $0x1a0] sm:$0xff] %v2125
    %2134 = vst [vmem:[#allocation3 + $0x1e8] sm:$0xff] %v2126
    %2135 = vst [vmem:[#allocation3 + $0x230] sm:$0xff] %v2127
    %v2136 = vld [vmem:[%s2071 + $0x2] sm:$0xff]
    %v2137 = vld [vmem:[%s2071 + $0x12] sm:$0xff]
    %v2138 = vld [vmem:[%s2071 + $0x22] sm:$0xff]
    %v2139 = vld [vmem:[%s2071 + $0x32] sm:$0xff]
    %v2140 = vld [vmem:[%s2071 + $0x42] sm:$0xff]
    %v2141 = vld [vmem:[%s2071 + $0x52] sm:$0xff]
    %v2142 = vld [vmem:[%s2071 + $0x62] sm:$0xff]
    %v2143 = vld [vmem:[%s2071 + $0x72] sm:$0xff]
    %v2144 = vld [vmem:[%s2071 + $0xa2] sm:$0xff]
    %v2145 = vld [vmem:[%s2071 + $0xb2] sm:$0xff]
    %v2146 = vld [vmem:[%s2071 + $0xc2] sm:$0xff]
    %v2147 = vld [vmem:[%s2071 + $0xd2] sm:$0xff]
    %v2148 = vld [vmem:[%s2071 + $0xe2] sm:$0xff]
    %v2149 = vld [vmem:[%s2071 + $0xf2] sm:$0xff]
    %v2150 = vld [vmem:[%s2071 + $0x102] sm:$0xff]
    %v2151 = vld [vmem:[%s2071 + $0x112] sm:$0xff]
    %v2152 = vpack.c.bf16 %v2137, %v2136
    %v2153 = vpack.c.bf16 %v2139, %v2138
    %v2154 = vpack.c.bf16 %v2141, %v2140
    %v2155 = vpack.c.bf16 %v2143, %v2142
    %v2156 = vpack.c.bf16 %v2145, %v2144
    %v2157 = vpack.c.bf16 %v2147, %v2146
    %v2158 = vpack.c.bf16 %v2149, %v2148
    %v2159 = vpack.c.bf16 %v2151, %v2150
    %2160 = vst [vmem:[#allocation3 + $0x40] sm:$0xff] %v2152
    %2161 = vst [vmem:[#allocation3 + $0x88] sm:$0xff] %v2153
    %2162 = vst [vmem:[#allocation3 + $0xd0] sm:$0xff] %v2154
    %2163 = vst [vmem:[#allocation3 + $0x118] sm:$0xff] %v2155
    %2164 = vst [vmem:[#allocation3 + $0x160] sm:$0xff] %v2156
    %2165 = vst [vmem:[#allocation3 + $0x1a8] sm:$0xff] %v2157
    %2166 = vst [vmem:[#allocation3 + $0x1f0] sm:$0xff] %v2158
    %2167 = vst [vmem:[#allocation3 + $0x238] sm:$0xff] %v2159
    %v2168 = vld [vmem:[#allocation3] sm:$0xff]
    %v2169 = vld [vmem:[#allocation3 + $0x8] sm:$0xff]
    %v2170 = vld [vmem:[#allocation3 + $0x10] sm:$0xff]
    %v2171 = vld [vmem:[#allocation3 + $0x18] sm:$0xff]
    %v2172 = vld [vmem:[#allocation3 + $0x20] sm:$0xff]
    %v2173 = vld [vmem:[#allocation3 + $0x28] sm:$0xff]
    %v2174 = vld [vmem:[#allocation3 + $0x30] sm:$0xff]
    %v2175 = vld [vmem:[#allocation3 + $0x38] sm:$0xff]
    %v2176 = vld [vmem:[#allocation3 + $0x40] sm:$0xff]
    %v2177 = vld [vmem:[#allocation3 + $0x48] sm:$0xff]
    %v2178 = vld [vmem:[#allocation3 + $0x50] sm:$0xff]
    %v2179 = vld [vmem:[#allocation3 + $0x58] sm:$0xff]
    %v2180 = vld [vmem:[#allocation3 + $0x60] sm:$0xff]
    %v2181 = vld [vmem:[#allocation3 + $0x68] sm:$0xff]
    %v2182 = vld [vmem:[#allocation3 + $0x70] sm:$0xff]
    %v2183 = vld [vmem:[#allocation3 + $0x78] sm:$0xff]
    %v2184 = vld [vmem:[#allocation3 + $0x80] sm:$0xff]
    %v2185 = vld [vmem:[#allocation3 + $0x88] sm:$0xff]
    %v2186 = vld [vmem:[#allocation3 + $0x90] sm:$0xff]
    %v2187 = vld [vmem:[#allocation3 + $0x98] sm:$0xff]
    %v2188 = vld [vmem:[#allocation3 + $0xa0] sm:$0xff]
    %v2189 = vld [vmem:[#allocation3 + $0xa8] sm:$0xff]
    %v2190 = vld [vmem:[#allocation3 + $0xb0] sm:$0xff]
    %v2191 = vld [vmem:[#allocation3 + $0xb8] sm:$0xff]
    %v2192 = vld [vmem:[#allocation3 + $0xc0] sm:$0xff]
    %v2193 = vld [vmem:[#allocation3 + $0xc8] sm:$0xff]
    %v2194 = vld [vmem:[#allocation3 + $0xd0] sm:$0xff]
    %v2195 = vld [vmem:[#allocation3 + $0xd8] sm:$0xff]
    %v2196 = vld [vmem:[#allocation3 + $0xe0] sm:$0xff]
    %v2197 = vld [vmem:[#allocation3 + $0xe8] sm:$0xff]
    %v2198 = vld [vmem:[#allocation3 + $0xf0] sm:$0xff]
    %v2199 = vld [vmem:[#allocation3 + $0xf8] sm:$0xff]
    %v2200 = vld [vmem:[#allocation3 + $0x100] sm:$0xff]
    %v2201 = vld [vmem:[#allocation3 + $0x108] sm:$0xff]
    %v2202 = vld [vmem:[#allocation3 + $0x110] sm:$0xff]
    %v2203 = vld [vmem:[#allocation3 + $0x118] sm:$0xff]
    %v2204 = vld [vmem:[#allocation3 + $0x120] sm:$0xff]
    %v2205 = vld [vmem:[#allocation3 + $0x128] sm:$0xff]
    %v2206 = vld [vmem:[#allocation3 + $0x130] sm:$0xff]
    %v2207 = vld [vmem:[#allocation3 + $0x138] sm:$0xff]
    %v2208 = vld [vmem:[#allocation3 + $0x140] sm:$0xff]
    %v2209 = vld [vmem:[#allocation3 + $0x148] sm:$0xff]
    %v2210 = vld [vmem:[#allocation3 + $0x150] sm:$0xff]
    %v2211 = vld [vmem:[#allocation3 + $0x158] sm:$0xff]
    %v2212 = vld [vmem:[#allocation3 + $0x160] sm:$0xff]
    %v2213 = vld [vmem:[#allocation3 + $0x168] sm:$0xff]
    %v2214 = vld [vmem:[#allocation3 + $0x170] sm:$0xff]
    %v2215 = vld [vmem:[#allocation3 + $0x178] sm:$0xff]
    %v2216 = vld [vmem:[#allocation3 + $0x180] sm:$0xff]
    %v2217 = vld [vmem:[#allocation3 + $0x188] sm:$0xff]
    %v2218 = vld [vmem:[#allocation3 + $0x190] sm:$0xff]
    %v2219 = vld [vmem:[#allocation3 + $0x198] sm:$0xff]
    %v2220 = vld [vmem:[#allocation3 + $0x1a0] sm:$0xff]
    %v2221 = vld [vmem:[#allocation3 + $0x1a8] sm:$0xff]
    %v2222 = vld [vmem:[#allocation3 + $0x1b0] sm:$0xff]
    %v2223 = vld [vmem:[#allocation3 + $0x1b8] sm:$0xff]
    %v2224 = vld [vmem:[#allocation3 + $0x1c0] sm:$0xff]
    %v2225 = vld [vmem:[#allocation3 + $0x1c8] sm:$0xff]
    %v2226 = vld [vmem:[#allocation3 + $0x1d0] sm:$0xff]
    %v2227 = vld [vmem:[#allocation3 + $0x1d8] sm:$0xff]
    %v2228 = vld [vmem:[#allocation3 + $0x1e0] sm:$0xff]
    %v2229 = vld [vmem:[#allocation3 + $0x1e8] sm:$0xff]
    %v2230 = vld [vmem:[#allocation3 + $0x1f0] sm:$0xff]
    %v2231 = vld [vmem:[#allocation3 + $0x1f8] sm:$0xff]
    %v2232 = vld [vmem:[#allocation3 + $0x200] sm:$0xff]
    %v2233 = vld [vmem:[#allocation3 + $0x208] sm:$0xff]
    %v2234 = vld [vmem:[#allocation3 + $0x210] sm:$0xff]
    %v2235 = vld [vmem:[#allocation3 + $0x218] sm:$0xff]
    %v2236 = vld [vmem:[#allocation3 + $0x220] sm:$0xff]
    %v2237 = vld [vmem:[#allocation3 + $0x228] sm:$0xff]
    %v2238 = vld [vmem:[#allocation3 + $0x230] sm:$0xff]
    %v2239 = vld [vmem:[#allocation3 + $0x238] sm:$0xff]
    %v2240 = vld [vmem:[%s7] sm:$0xf]
    %v2241 = vld [vmem:[%s7 + $0x4] sm:$0xf]
    %v2242 = vld [vmem:[%s7 + $0x8] sm:$0xf]
    %v2243 = vld [vmem:[%s7 + $0xc] sm:$0xf]
    %v2244 = vld [vmem:[%s7 + $0x10] sm:$0xf]
    %v2245 = vld [vmem:[%s7 + $0x14] sm:$0xf]
    %v2246 = vld [vmem:[%s7 + $0x18] sm:$0xf]
    %v2247 = vld [vmem:[%s7 + $0x1c] sm:$0xf]
    %v2248 = vld [vmem:[%s7 + $0x20] sm:$0xf]
    %v2249 = vld [vmem:[%s7 + $0x24] sm:$0xf]
    %v2250 = vld [vmem:[%s7 + $0x28] sm:$0xf]
    %v2251 = vld [vmem:[%s7 + $0x2c] sm:$0xf]
    %v2252 = vld [vmem:[%s7 + $0x30] sm:$0xf]
    %v2253 = vld [vmem:[%s7 + $0x34] sm:$0xf]
    %v2254 = vld [vmem:[%s7 + $0x38] sm:$0xf]
    %v2255 = vld [vmem:[%s7 + $0x3c] sm:$0xf]
    %v2256 = vld [vmem:[%s7 + $0x40] sm:$0xf]
    %v2257 = vld [vmem:[%s7 + $0x44] sm:$0xf]
    %v2258 = vld [vmem:[%s7 + $0x48] sm:$0xf]
    %v2259 = vld [vmem:[%s7 + $0x4c] sm:$0xf]
    %v2260 = vld [vmem:[%s7 + $0x50] sm:$0xf]
    %v2261 = vld [vmem:[%s7 + $0x54] sm:$0xf]
    %v2262 = vld [vmem:[%s7 + $0x58] sm:$0xf]
    %v2263 = vld [vmem:[%s7 + $0x5c] sm:$0xf]
    %v2264 = vld [vmem:[%s7 + $0x60] sm:$0xf]
    %v2265 = vld [vmem:[%s7 + $0x64] sm:$0xf]
    %v2266 = vld [vmem:[%s7 + $0x68] sm:$0xf]
    %v2267 = vld [vmem:[%s7 + $0x6c] sm:$0xf]
    %v2268 = vld [vmem:[%s7 + $0x70] sm:$0xf]
    %v2269 = vld [vmem:[%s7 + $0x74] sm:$0xf]
    %v2270 = vld [vmem:[%s7 + $0x78] sm:$0xf]
    %v2271 = vld [vmem:[%s7 + $0x7c] sm:$0xf]
    %v2272 = vld [vmem:[%s7 + $0x80] sm:$0xf]
    %v2273 = vld [vmem:[%s7 + $0x84] sm:$0xf]
    %v2274 = vld [vmem:[%s7 + $0x88] sm:$0xf]
    %v2275 = vld [vmem:[%s7 + $0x8c] sm:$0xf]
    %v2276 = vld [vmem:[%s7 + $0x90] sm:$0xf]
    %v2277 = vld [vmem:[%s7 + $0x94] sm:$0xf]
    %v2278 = vld [vmem:[%s7 + $0x98] sm:$0xf]
    %v2279 = vld [vmem:[%s7 + $0x9c] sm:$0xf]
    %v2280 = vld [vmem:[%s7 + $0xa0] sm:$0xf]
    %v2281 = vld [vmem:[%s7 + $0xa4] sm:$0xf]
    %v2282 = vld [vmem:[%s7 + $0xa8] sm:$0xf]
    %v2283 = vld [vmem:[%s7 + $0xac] sm:$0xf]
    %v2284 = vld [vmem:[%s7 + $0xb0] sm:$0xf]
    %v2285 = vld [vmem:[%s7 + $0xb4] sm:$0xf]
    %v2286 = vld [vmem:[%s7 + $0xb8] sm:$0xf]
    %v2287 = vld [vmem:[%s7 + $0xbc] sm:$0xf]
    %v2288 = vld [vmem:[%s7 + $0xc0] sm:$0xf]
    %v2289 = vld [vmem:[%s7 + $0xc4] sm:$0xf]
    %v2290 = vld [vmem:[%s7 + $0xc8] sm:$0xf]
    %v2291 = vld [vmem:[%s7 + $0xcc] sm:$0xf]
    %v2292 = vld [vmem:[%s7 + $0xd0] sm:$0xf]
    %v2293 = vld [vmem:[%s7 + $0xd4] sm:$0xf]
    %v2294 = vld [vmem:[%s7 + $0xd8] sm:$0xf]
    %v2295 = vld [vmem:[%s7 + $0xdc] sm:$0xf]
    %v2296 = vld [vmem:[%s7 + $0xe0] sm:$0xf]
    %v2297 = vld [vmem:[%s7 + $0xe4] sm:$0xf]
    %v2298 = vld [vmem:[%s7 + $0xe8] sm:$0xf]
    %v2299 = vld [vmem:[%s7 + $0xec] sm:$0xf]
    %v2300 = vld [vmem:[%s7 + $0xf0] sm:$0xf]
    %v2301 = vld [vmem:[%s7 + $0xf4] sm:$0xf]
    %v2302 = vld [vmem:[%s7 + $0xf8] sm:$0xf]
    %v2303 = vld [vmem:[%s7 + $0xfc] sm:$0xf]
    %v2304 = vld [vmem:[%s7 + $0x100] sm:$0xf]
    %v2305 = vld [vmem:[%s7 + $0x104] sm:$0xf]
    %v2306 = vld [vmem:[%s7 + $0x108] sm:$0xf]
    %v2307 = vld [vmem:[%s7 + $0x10c] sm:$0xf]
    %v2308 = vld [vmem:[%s7 + $0x110] sm:$0xf]
    %v2309 = vld [vmem:[%s7 + $0x114] sm:$0xf]
    %v2310 = vld [vmem:[%s7 + $0x118] sm:$0xf]
    %v2311 = vld [vmem:[%s7 + $0x11c] sm:$0xf]
    %v2312 = vld [vmem:[%s7 + $0x120] sm:$0xf]
    %v2313 = vld [vmem:[%s7 + $0x124] sm:$0xf]
    %v2314 = vld [vmem:[%s7 + $0x128] sm:$0xf]
    %v2315 = vld [vmem:[%s7 + $0x12c] sm:$0xf]
    %v2316 = vld [vmem:[%s7 + $0x130] sm:$0xf]
    %v2317 = vld [vmem:[%s7 + $0x134] sm:$0xf]
    %v2318 = vld [vmem:[%s7 + $0x138] sm:$0xf]
    %v2319 = vld [vmem:[%s7 + $0x13c] sm:$0xf]
    %v2320 = vld [vmem:[%s7 + $0x140] sm:$0xf]
    %v2321 = vld [vmem:[%s7 + $0x144] sm:$0xf]
    %v2322 = vld [vmem:[%s7 + $0x148] sm:$0xf]
    %v2323 = vld [vmem:[%s7 + $0x14c] sm:$0xf]
    %v2324 = vld [vmem:[%s7 + $0x150] sm:$0xf]
    %v2325 = vld [vmem:[%s7 + $0x154] sm:$0xf]
    %v2326 = vld [vmem:[%s7 + $0x158] sm:$0xf]
    %v2327 = vld [vmem:[%s7 + $0x15c] sm:$0xf]
    %v2328 = vld [vmem:[%s7 + $0x160] sm:$0xf]
    %v2329 = vld [vmem:[%s7 + $0x164] sm:$0xf]
    %v2330 = vld [vmem:[%s7 + $0x168] sm:$0xf]
    %v2331 = vld [vmem:[%s7 + $0x16c] sm:$0xf]
    %v2332 = vld [vmem:[%s7 + $0x170] sm:$0xf]
    %v2333 = vld [vmem:[%s7 + $0x174] sm:$0xf]
    %v2334 = vld [vmem:[%s7 + $0x178] sm:$0xf]
    %v2335 = vld [vmem:[%s7 + $0x17c] sm:$0xf]
    %v2336 = vld [vmem:[%s7 + $0x180] sm:$0xf]
    %v2337 = vld [vmem:[%s7 + $0x184] sm:$0xf]
    %v2338 = vld [vmem:[%s7 + $0x188] sm:$0xf]
    %v2339 = vld [vmem:[%s7 + $0x18c] sm:$0xf]
    %v2340 = vld [vmem:[%s7 + $0x190] sm:$0xf]
    %v2341 = vld [vmem:[%s7 + $0x194] sm:$0xf]
    %v2342 = vld [vmem:[%s7 + $0x198] sm:$0xf]
    %v2343 = vld [vmem:[%s7 + $0x19c] sm:$0xf]
    %v2344 = vld [vmem:[%s7 + $0x1a0] sm:$0xf]
    %v2345 = vld [vmem:[%s7 + $0x1a4] sm:$0xf]
    %v2346 = vld [vmem:[%s7 + $0x1a8] sm:$0xf]
    %v2347 = vld [vmem:[%s7 + $0x1ac] sm:$0xf]
    %v2348 = vld [vmem:[%s7 + $0x1b0] sm:$0xf]
    %v2349 = vld [vmem:[%s7 + $0x1b4] sm:$0xf]
    %v2350 = vld [vmem:[%s7 + $0x1b8] sm:$0xf]
    %v2351 = vld [vmem:[%s7 + $0x1bc] sm:$0xf]
    %v2352 = vld [vmem:[%s7 + $0x1c0] sm:$0xf]
    %v2353 = vld [vmem:[%s7 + $0x1c4] sm:$0xf]
    %v2354 = vld [vmem:[%s7 + $0x1c8] sm:$0xf]
    %v2355 = vld [vmem:[%s7 + $0x1cc] sm:$0xf]
    %v2356 = vld [vmem:[%s7 + $0x1d0] sm:$0xf]
    %v2357 = vld [vmem:[%s7 + $0x1d4] sm:$0xf]
    %v2358 = vld [vmem:[%s7 + $0x1d8] sm:$0xf]
    %v2359 = vld [vmem:[%s7 + $0x1dc] sm:$0xf]
    %v2360 = vld [vmem:[%s7 + $0x1e0] sm:$0xf]
    %v2361 = vld [vmem:[%s7 + $0x1e4] sm:$0xf]
    %v2362 = vld [vmem:[%s7 + $0x1e8] sm:$0xf]
    %v2363 = vld [vmem:[%s7 + $0x1ec] sm:$0xf]
    %v2364 = vld [vmem:[%s7 + $0x1f0] sm:$0xf]
    %v2365 = vld [vmem:[%s7 + $0x1f4] sm:$0xf]
    %v2366 = vld [vmem:[%s7 + $0x1f8] sm:$0xf]
    %v2367 = vld [vmem:[%s7 + $0x1fc] sm:$0xf]
    %v2368 = vld [vmem:[%s7 + $0x200] sm:$0xf]
    %v2369 = vld [vmem:[%s7 + $0x204] sm:$0xf]
    %v2370 = vld [vmem:[%s7 + $0x208] sm:$0xf]
    %v2371 = vld [vmem:[%s7 + $0x20c] sm:$0xf]
    %v2372 = vld [vmem:[%s7 + $0x210] sm:$0xf]
    %v2373 = vld [vmem:[%s7 + $0x214] sm:$0xf]
    %v2374 = vld [vmem:[%s7 + $0x218] sm:$0xf]
    %v2375 = vld [vmem:[%s7 + $0x21c] sm:$0xf]
    %v2376 = vld [vmem:[%s7 + $0x220] sm:$0xf]
    %v2377 = vld [vmem:[%s7 + $0x224] sm:$0xf]
    %v2378 = vld [vmem:[%s7 + $0x228] sm:$0xf]
    %v2379 = vld [vmem:[%s7 + $0x22c] sm:$0xf]
    %v2380 = vld [vmem:[%s7 + $0x230] sm:$0xf]
    %v2381 = vld [vmem:[%s7 + $0x234] sm:$0xf]
    %v2382 = vld [vmem:[%s7 + $0x238] sm:$0xf]
    %v2383 = vld [vmem:[%s7 + $0x23c] sm:$0xf]
    %v2528 = vunpack.c.l.b16 %v2240
    %v2529 = vunpack.c.l.b16 %v2241
    %v2530 = vunpack.c.l.b16 %v2242
    %v2531 = vunpack.c.l.b16 %v2243
    %v2532 = vunpack.c.l.b16 %v2244
    %v2533 = vunpack.c.l.b16 %v2245
    %v2534 = vunpack.c.l.b16 %v2246
    %v2535 = vunpack.c.l.b16 %v2247
    %v2536 = vunpack.c.l.b16 %v2248
    %v2537 = vunpack.c.l.b16 %v2249
    %v2538 = vunpack.c.l.b16 %v2250
    %v2539 = vunpack.c.l.b16 %v2251
    %v2540 = vunpack.c.l.b16 %v2252
    %v2541 = vunpack.c.l.b16 %v2253
    %v2542 = vunpack.c.l.b16 %v2254
    %v2543 = vunpack.c.l.b16 %v2255
    %v2544 = vunpack.c.l.b16 %v2256
    %v2545 = vunpack.c.l.b16 %v2257
    %v2546 = vunpack.c.l.b16 %v2258
    %v2547 = vunpack.c.l.b16 %v2259
    %v2548 = vunpack.c.l.b16 %v2260
    %v2549 = vunpack.c.l.b16 %v2261
    %v2550 = vunpack.c.l.b16 %v2262
    %v2551 = vunpack.c.l.b16 %v2263
    %v2552 = vunpack.c.l.b16 %v2264
    %v2553 = vunpack.c.l.b16 %v2265
    %v2554 = vunpack.c.l.b16 %v2266
    %v2555 = vunpack.c.l.b16 %v2267
    %v2556 = vunpack.c.l.b16 %v2268
    %v2557 = vunpack.c.l.b16 %v2269
    %v2558 = vunpack.c.l.b16 %v2270
    %v2559 = vunpack.c.l.b16 %v2271
    %v2560 = vunpack.c.l.b16 %v2272
    %v2561 = vunpack.c.l.b16 %v2273
    %v2562 = vunpack.c.l.b16 %v2274
    %v2563 = vunpack.c.l.b16 %v2275
    %v2564 = vunpack.c.l.b16 %v2276
    %v2565 = vunpack.c.l.b16 %v2277
    %v2566 = vunpack.c.l.b16 %v2278
    %v2567 = vunpack.c.l.b16 %v2279
    %v2568 = vunpack.c.l.b16 %v2280
    %v2569 = vunpack.c.l.b16 %v2281
    %v2570 = vunpack.c.l.b16 %v2282
    %v2571 = vunpack.c.l.b16 %v2283
    %v2572 = vunpack.c.l.b16 %v2284
    %v2573 = vunpack.c.l.b16 %v2285
    %v2574 = vunpack.c.l.b16 %v2286
    %v2575 = vunpack.c.l.b16 %v2287
    %v2576 = vunpack.c.l.b16 %v2288
    %v2577 = vunpack.c.l.b16 %v2289
    %v2578 = vunpack.c.l.b16 %v2290
    %v2579 = vunpack.c.l.b16 %v2291
    %v2580 = vunpack.c.l.b16 %v2292
    %v2581 = vunpack.c.l.b16 %v2293
    %v2582 = vunpack.c.l.b16 %v2294
    %v2583 = vunpack.c.l.b16 %v2295
    %v2584 = vunpack.c.l.b16 %v2296
    %v2585 = vunpack.c.l.b16 %v2297
    %v2586 = vunpack.c.l.b16 %v2298
    %v2587 = vunpack.c.l.b16 %v2299
    %v2588 = vunpack.c.l.b16 %v2300
    %v2589 = vunpack.c.l.b16 %v2301
    %v2590 = vunpack.c.l.b16 %v2302
    %v2591 = vunpack.c.l.b16 %v2303
    %v2592 = vunpack.c.l.b16 %v2304
    %v2593 = vunpack.c.l.b16 %v2305
    %v2594 = vunpack.c.l.b16 %v2306
    %v2595 = vunpack.c.l.b16 %v2307
    %v2596 = vunpack.c.l.b16 %v2308
    %v2597 = vunpack.c.l.b16 %v2309
    %v2598 = vunpack.c.l.b16 %v2310
    %v2599 = vunpack.c.l.b16 %v2311
    %v2600 = vunpack.c.l.b16 %v2312
    %v2601 = vunpack.c.l.b16 %v2313
    %v2602 = vunpack.c.l.b16 %v2314
    %v2603 = vunpack.c.l.b16 %v2315
    %v2604 = vunpack.c.l.b16 %v2316
    %v2605 = vunpack.c.l.b16 %v2317
    %v2606 = vunpack.c.l.b16 %v2318
    %v2607 = vunpack.c.l.b16 %v2319
    %v2608 = vunpack.c.l.b16 %v2320
    %v2609 = vunpack.c.l.b16 %v2321
    %v2610 = vunpack.c.l.b16 %v2322
    %v2611 = vunpack.c.l.b16 %v2323
    %v2612 = vunpack.c.l.b16 %v2324
    %v2613 = vunpack.c.l.b16 %v2325
    %v2614 = vunpack.c.l.b16 %v2326
    %v2615 = vunpack.c.l.b16 %v2327
    %v2616 = vunpack.c.l.b16 %v2328
    %v2617 = vunpack.c.l.b16 %v2329
    %v2618 = vunpack.c.l.b16 %v2330
    %v2619 = vunpack.c.l.b16 %v2331
    %v2620 = vunpack.c.l.b16 %v2332
    %v2621 = vunpack.c.l.b16 %v2333
    %v2622 = vunpack.c.l.b16 %v2334
    %v2623 = vunpack.c.l.b16 %v2335
    %v2624 = vunpack.c.l.b16 %v2336
    %v2625 = vunpack.c.l.b16 %v2337
    %v2626 = vunpack.c.l.b16 %v2338
    %v2627 = vunpack.c.l.b16 %v2339
    %v2628 = vunpack.c.l.b16 %v2340
    %v2629 = vunpack.c.l.b16 %v2341
    %v2630 = vunpack.c.l.b16 %v2342
    %v2631 = vunpack.c.l.b16 %v2343
    %v2632 = vunpack.c.l.b16 %v2344
    %v2633 = vunpack.c.l.b16 %v2345
    %v2634 = vunpack.c.l.b16 %v2346
    %v2635 = vunpack.c.l.b16 %v2347
    %v2636 = vunpack.c.l.b16 %v2348
    %v2637 = vunpack.c.l.b16 %v2349
    %v2638 = vunpack.c.l.b16 %v2350
    %v2639 = vunpack.c.l.b16 %v2351
    %v2640 = vunpack.c.l.b16 %v2352
    %v2641 = vunpack.c.l.b16 %v2353
    %v2642 = vunpack.c.l.b16 %v2354
    %v2643 = vunpack.c.l.b16 %v2355
    %v2644 = vunpack.c.l.b16 %v2356
    %v2645 = vunpack.c.l.b16 %v2357
    %v2646 = vunpack.c.l.b16 %v2358
    %v2647 = vunpack.c.l.b16 %v2359
    %v2648 = vunpack.c.l.b16 %v2360
    %v2649 = vunpack.c.l.b16 %v2361
    %v2650 = vunpack.c.l.b16 %v2362
    %v2651 = vunpack.c.l.b16 %v2363
    %v2652 = vunpack.c.l.b16 %v2364
    %v2653 = vunpack.c.l.b16 %v2365
    %v2654 = vunpack.c.l.b16 %v2366
    %v2655 = vunpack.c.l.b16 %v2367
    %v2656 = vunpack.c.l.b16 %v2368
    %v2657 = vunpack.c.l.b16 %v2369
    %v2658 = vunpack.c.l.b16 %v2370
    %v2659 = vunpack.c.l.b16 %v2371
    %v2660 = vunpack.c.l.b16 %v2372
    %v2661 = vunpack.c.l.b16 %v2373
    %v2662 = vunpack.c.l.b16 %v2374
    %v2663 = vunpack.c.l.b16 %v2375
    %v2664 = vunpack.c.l.b16 %v2376
    %v2665 = vunpack.c.l.b16 %v2377
    %v2666 = vunpack.c.l.b16 %v2378
    %v2667 = vunpack.c.l.b16 %v2379
    %v2668 = vunpack.c.l.b16 %v2380
    %v2669 = vunpack.c.l.b16 %v2381
    %v2670 = vunpack.c.l.b16 %v2382
    %v2671 = vunpack.c.l.b16 %v2383
    %v2672 = vpack.c.b16 %v2529, %v2528
    %v2673 = vpack.c.b16 %v2531, %v2530
    %v2674 = vpack.c.b16 %v2533, %v2532
    %v2675 = vpack.c.b16 %v2535, %v2534
    %v2676 = vpack.c.b16 %v2537, %v2536
    %v2677 = vpack.c.b16 %v2539, %v2538
    %v2678 = vpack.c.b16 %v2541, %v2540
    %v2679 = vpack.c.b16 %v2543, %v2542
    %v2680 = vpack.c.b16 %v2545, %v2544
    %v2681 = vpack.c.b16 %v2547, %v2546
    %v2682 = vpack.c.b16 %v2549, %v2548
    %v2683 = vpack.c.b16 %v2551, %v2550
    %v2684 = vpack.c.b16 %v2553, %v2552
    %v2685 = vpack.c.b16 %v2555, %v2554
    %v2686 = vpack.c.b16 %v2557, %v2556
    %v2687 = vpack.c.b16 %v2559, %v2558
    %v2688 = vpack.c.b16 %v2561, %v2560
    %v2689 = vpack.c.b16 %v2563, %v2562
    %v2690 = vpack.c.b16 %v2565, %v2564
    %v2691 = vpack.c.b16 %v2567, %v2566
    %v2692 = vpack.c.b16 %v2569, %v2568
    %v2693 = vpack.c.b16 %v2571, %v2570
    %v2694 = vpack.c.b16 %v2573, %v2572
    %v2695 = vpack.c.b16 %v2575, %v2574
    %v2696 = vpack.c.b16 %v2577, %v2576
    %v2697 = vpack.c.b16 %v2579, %v2578
    %v2698 = vpack.c.b16 %v2581, %v2580
    %v2699 = vpack.c.b16 %v2583, %v2582
    %v2700 = vpack.c.b16 %v2585, %v2584
    %v2701 = vpack.c.b16 %v2587, %v2586
    %v2702 = vpack.c.b16 %v2589, %v2588
    %v2703 = vpack.c.b16 %v2591, %v2590
    %v2704 = vpack.c.b16 %v2593, %v2592
    %v2705 = vpack.c.b16 %v2595, %v2594
    %v2706 = vpack.c.b16 %v2597, %v2596
    %v2707 = vpack.c.b16 %v2599, %v2598
    %v2708 = vpack.c.b16 %v2601, %v2600
    %v2709 = vpack.c.b16 %v2603, %v2602
    %v2710 = vpack.c.b16 %v2605, %v2604
    %v2711 = vpack.c.b16 %v2607, %v2606
    %v2712 = vpack.c.b16 %v2609, %v2608
    %v2713 = vpack.c.b16 %v2611, %v2610
    %v2714 = vpack.c.b16 %v2613, %v2612
    %v2715 = vpack.c.b16 %v2615, %v2614
    %v2716 = vpack.c.b16 %v2617, %v2616
    %v2717 = vpack.c.b16 %v2619, %v2618
    %v2718 = vpack.c.b16 %v2621, %v2620
    %v2719 = vpack.c.b16 %v2623, %v2622
    %v2720 = vpack.c.b16 %v2625, %v2624
    %v2721 = vpack.c.b16 %v2627, %v2626
    %v2722 = vpack.c.b16 %v2629, %v2628
    %v2723 = vpack.c.b16 %v2631, %v2630
    %v2724 = vpack.c.b16 %v2633, %v2632
    %v2725 = vpack.c.b16 %v2635, %v2634
    %v2726 = vpack.c.b16 %v2637, %v2636
    %v2727 = vpack.c.b16 %v2639, %v2638
    %v2728 = vpack.c.b16 %v2641, %v2640
    %v2729 = vpack.c.b16 %v2643, %v2642
    %v2730 = vpack.c.b16 %v2645, %v2644
    %v2731 = vpack.c.b16 %v2647, %v2646
    %v2732 = vpack.c.b16 %v2649, %v2648
    %v2733 = vpack.c.b16 %v2651, %v2650
    %v2734 = vpack.c.b16 %v2653, %v2652
    %v2735 = vpack.c.b16 %v2655, %v2654
    %v2736 = vpack.c.b16 %v2657, %v2656
    %v2737 = vpack.c.b16 %v2659, %v2658
    %v2738 = vpack.c.b16 %v2661, %v2660
    %v2739 = vpack.c.b16 %v2663, %v2662
    %v2740 = vpack.c.b16 %v2665, %v2664
    %v2741 = vpack.c.b16 %v2667, %v2666
    %v2742 = vpack.c.b16 %v2669, %v2668
    %v2743 = vpack.c.b16 %v2671, %v2670
    %2816 = vmatprep.subr.bf16.mxu0 0
    %2817 = vmatpush1.bf16.msra.mxu0 %v2672
    %2818 = vmatprep.subr.bf16.mxu0 0
    %2819 = vmatpush1.bf16.msra.mxu0 %v2673
    %2820 = vmatprep.subr.bf16.mxu0 0
    %2821 = vmatpush1.bf16.msra.mxu0 %v2674
    %2822 = vmatprep.subr.bf16.mxu0 0
    %2823 = vmatpush1.bf16.msra.mxu0 %v2675
    %2824 = vmatprep.subr.bf16.mxu0 0
    %2825 = vmatpush1.bf16.msra.mxu0 %v2676
    %2826 = vmatprep.subr.bf16.mxu0 0
    %2827 = vmatpush1.bf16.msra.mxu0 %v2677
    %2828 = vmatprep.subr.bf16.mxu0 0
    %2829 = vmatpush1.bf16.msra.mxu0 %v2678
    %2830 = vmatprep.subr.bf16.mxu0 0
    %2831 = vmatpush1.bf16.msra.mxu0 %v2679
    %2832 = vmatprep.subr.bf16.mxu0 0
    %2833 = vmatpush1.bf16.msra.mxu0 %v2680
    %2834 = vmatprep.subr.bf16.mxu0 0
    %2835 = vmatpush1.bf16.msra.mxu0 %v2681
    %2836 = vmatprep.subr.bf16.mxu0 0
    %2837 = vmatpush1.bf16.msra.mxu0 %v2682
    %2838 = vmatprep.subr.bf16.mxu0 0
    %2839 = vmatpush1.bf16.msra.mxu0 %v2683
    %2840 = vmatprep.subr.bf16.mxu0 0
    %2841 = vmatpush1.bf16.msra.mxu0 %v2684
    %2842 = vmatprep.subr.bf16.mxu0 0
    %2843 = vmatpush1.bf16.msra.mxu0 %v2685
    %2844 = vmatprep.subr.bf16.mxu0 0
    %2845 = vmatpush1.bf16.msra.mxu0 %v2686
    %2846 = vmatprep.subr.bf16.mxu0 0
    %2847 = vmatpush1.bf16.msra.mxu0 %v2687
    %2848 = vmatprep.mubr.bf16.mxu0 %v2169
    %2849 = vmatmul.mubr.bf16.gmra.mrb[0].mxu0 %v2168
    %v2850 = vpop.f32.mrb[0].mxu0
    %v2851 = vadd.f32 0.0, %v2850
    %v2852 = vpop.f32.mrb[0].mxu0
    %v2853 = vpop.f32.mrb[0].mxu0
    %v2854 = vadd.f32 0.0, %v2853
    %v2855 = vpop.f32.mrb[0].mxu0
    %2856 = vmatprep.mubr.bf16.mxu0 %v2178
    %2857 = vmatmul.mubr.bf16.gmra.mrb[0].mxu0 %v2177
    %v2858 = vpop.f32.mrb[0].mxu0
    %v2859 = vadd.f32 0.0, %v2858
    %v2860 = vpop.f32.mrb[0].mxu0
    %v2861 = vpop.f32.mrb[0].mxu0
    %v2862 = vadd.f32 0.0, %v2861
    %v2863 = vpop.f32.mrb[0].mxu0
    %2864 = vmatprep.mubr.bf16.mxu0 %v2187
    %2865 = vmatmul.mubr.bf16.gmra.mrb[0].mxu0 %v2186
    %v2866 = vpop.f32.mrb[0].mxu0
    %v2867 = vadd.f32 0.0, %v2866
    %v2868 = vpop.f32.mrb[0].mxu0
    %v2869 = vpop.f32.mrb[0].mxu0
    %v2870 = vadd.f32 0.0, %v2869
    %v2871 = vpop.f32.mrb[0].mxu0
    %2872 = vmatprep.mubr.bf16.mxu0 %v2196
    %2873 = vmatmul.mubr.bf16.gmra.mrb[0].mxu0 %v2195
    %v2874 = vpop.f32.mrb[0].mxu0
    %v2875 = vadd.f32 0.0, %v2874
    %v2876 = vpop.f32.mrb[0].mxu0
    %v2877 = vpop.f32.mrb[0].mxu0
    %v2878 = vadd.f32 0.0, %v2877
    %v2879 = vpop.f32.mrb[0].mxu0
    %2880 = vmatprep.mubr.bf16.mxu0 %v2205
    %2881 = vmatmul.mubr.bf16.gmra.mrb[0].mxu0 %v2204
    %v2882 = vpop.f32.mrb[0].mxu0
    %v2883 = vadd.f32 0.0, %v2882
    %v2884 = vpop.f32.mrb[0].mxu0
    %v2885 = vpop.f32.mrb[0].mxu0
    %v2886 = vadd.f32 0.0, %v2885
    %v2887 = vpop.f32.mrb[0].mxu0
    %2888 = vmatprep.mubr.bf16.mxu0 %v2214
    %2889 = vmatmul.mubr.bf16.gmra.mrb[0].mxu0 %v2213
    %v2890 = vpop.f32.mrb[0].mxu0
    %v2891 = vadd.f32 0.0, %v2890
    %v2892 = vpop.f32.mrb[0].mxu0
    %v2893 = vpop.f32.mrb[0].mxu0
    %v2894 = vadd.f32 0.0, %v2893
    %v2895 = vpop.f32.mrb[0].mxu0
    %2896 = vmatprep.mubr.bf16.mxu0 %v2223
    %2897 = vmatmul.mubr.bf16.gmra.mrb[0].mxu0 %v2222
    %v2898 = vpop.f32.mrb[0].mxu0
    %v2899 = vadd.f32 0.0, %v2898
    %v2900 = vpop.f32.mrb[0].mxu0
    %v2901 = vpop.f32.mrb[0].mxu0
    %v2902 = vadd.f32 0.0, %v2901
    %v2903 = vpop.f32.mrb[0].mxu0
    %2904 = vmatprep.mubr.bf16.mxu0 %v2232
    %2905 = vmatmul.mubr.bf16.gmra.mrb[0].mxu0 %v2231
    %v2906 = vpop.f32.mrb[0].mxu0
    %v2907 = vadd.f32 0.0, %v2906
    %v2908 = vpop.f32.mrb[0].mxu0
    %v2909 = vpop.f32.mrb[0].mxu0
    %v2910 = vadd.f32 0.0, %v2909
    %v2911 = vpop.f32.mrb[0].mxu0
    %2912 = vdwg.mxu0
    %2913 = vmatprep.subr.bf16.mxu0 0
    %2914 = vmatpush1.bf16.msra.mxu0 %v2688
    %2915 = vmatprep.subr.bf16.mxu0 0
    %2916 = vmatpush1.bf16.msra.mxu0 %v2689
    %2917 = vmatprep.subr.bf16.mxu0 0
    %2918 = vmatpush1.bf16.msra.mxu0 %v2690
    %2919 = vmatprep.subr.bf16.mxu0 0
    %2920 = vmatpush1.bf16.msra.mxu0 %v2691
    %2921 = vmatprep.subr.bf16.mxu0 0
    %2922 = vmatpush1.bf16.msra.mxu0 %v2692
    %2923 = vmatprep.subr.bf16.mxu0 0
    %2924 = vmatpush1.bf16.msra.mxu0 %v2693
    %2925 = vmatprep.subr.bf16.mxu0 0
    %2926 = vmatpush1.bf16.msra.mxu0 %v2694
    %2927 = vmatprep.subr.bf16.mxu0 0
    %2928 = vmatpush1.bf16.msra.mxu0 %v2695
    %2929 = vmatprep.subr.bf16.mxu0 0
    %2930 = vmatpush1.bf16.msra.mxu0 %v2696
    %2931 = vmatprep.subr.bf16.mxu0 0
    %2932 = vmatpush1.bf16.msra.mxu0 %v2697
    %2933 = vmatprep.subr.bf16.mxu0 0
    %2934 = vmatpush1.bf16.msra.mxu0 %v2698
    %2935 = vmatprep.subr.bf16.mxu0 0
    %2936 = vmatpush1.bf16.msra.mxu0 %v2699
    %2937 = vmatprep.subr.bf16.mxu0 0
    %2938 = vmatpush1.bf16.msra.mxu0 %v2700
    %2939 = vmatprep.subr.bf16.mxu0 0
    %2940 = vmatpush1.bf16.msra.mxu0 %v2701
    %2941 = vmatprep.subr.bf16.mxu0 0
    %2942 = vmatpush1.bf16.msra.mxu0 %v2702
    %2943 = vmatprep.subr.bf16.mxu0 0
    %2944 = vmatpush1.bf16.msra.mxu0 %v2703
    %2945 = vmatprep.mubr.bf16.mxu0 %v2171
    %2946 = vmatmul.mubr.bf16.gmra.mrb[0].mxu0 %v2170
    %v2947 = vpop.f32.mrb[0].mxu0
    %v2948 = vadd.f32 %v2851, %v2947
    %v2949 = vpop.f32.mrb[0].mxu0
    %v2950 = vpop.f32.mrb[0].mxu0
    %v2951 = vadd.f32 %v2854, %v2950
    %v2952 = vpop.f32.mrb[0].mxu0
    %2953 = vmatprep.mubr.bf16.mxu0 %v2180
    %2954 = vmatmul.mubr.bf16.gmra.mrb[0].mxu0 %v2179
    %v2955 = vpop.f32.mrb[0].mxu0
    %v2956 = vadd.f32 %v2859, %v2955
    %v2957 = vpop.f32.mrb[0].mxu0
    %v2958 = vpop.f32.mrb[0].mxu0
    %v2959 = vadd.f32 %v2862, %v2958
    %v2960 = vpop.f32.mrb[0].mxu0
    %2961 = vmatprep.mubr.bf16.mxu0 %v2189
    %2962 = vmatmul.mubr.bf16.gmra.mrb[0].mxu0 %v2188
    %v2963 = vpop.f32.mrb[0].mxu0
    %v2964 = vadd.f32 %v2867, %v2963
    %v2965 = vpop.f32.mrb[0].mxu0
    %v2966 = vpop.f32.mrb[0].mxu0
    %v2967 = vadd.f32 %v2870, %v2966
    %v2968 = vpop.f32.mrb[0].mxu0
    %2969 = vmatprep.mubr.bf16.mxu0 %v2198
    %2970 = vmatmul.mubr.bf16.gmra.mrb[0].mxu0 %v2197
    %v2971 = vpop.f32.mrb[0].mxu0
    %v2972 = vadd.f32 %v2875, %v2971
    %v2973 = vpop.f32.mrb[0].mxu0
    %v2974 = vpop.f32.mrb[0].mxu0
    %v2975 = vadd.f32 %v2878, %v2974
    %v2976 = vpop.f32.mrb[0].mxu0
    %2977 = vmatprep.mubr.bf16.mxu0 %v2207
    %2978 = vmatmul.mubr.bf16.gmra.mrb[0].mxu0 %v2206
    %v2979 = vpop.f32.mrb[0].mxu0
    %v2980 = vadd.f32 %v2883, %v2979
    %v2981 = vpop.f32.mrb[0].mxu0
    %v2982 = vpop.f32.mrb[0].mxu0
    %v2983 = vadd.f32 %v2886, %v2982
    %v2984 = vpop.f32.mrb[0].mxu0
    %2985 = vmatprep.mubr.bf16.mxu0 %v2216
    %2986 = vmatmul.mubr.bf16.gmra.mrb[0].mxu0 %v2215
    %v2987 = vpop.f32.mrb[0].mxu0
    %v2988 = vadd.f32 %v2891, %v2987
    %v2989 = vpop.f32.mrb[0].mxu0
    %v2990 = vpop.f32.mrb[0].mxu0
    %v2991 = vadd.f32 %v2894, %v2990
    %v2992 = vpop.f32.mrb[0].mxu0
    %2993 = vmatprep.mubr.bf16.mxu0 %v2225
    %2994 = vmatmul.mubr.bf16.gmra.mrb[0].mxu0 %v2224
    %v2995 = vpop.f32.mrb[0].mxu0
    %v2996 = vadd.f32 %v2899, %v2995
    %v2997 = vpop.f32.mrb[0].mxu0
    %v2998 = vpop.f32.mrb[0].mxu0
    %v2999 = vadd.f32 %v2902, %v2998
    %v3000 = vpop.f32.mrb[0].mxu0
    %3001 = vmatprep.mubr.bf16.mxu0 %v2234
    %3002 = vmatmul.mubr.bf16.gmra.mrb[0].mxu0 %v2233
    %v3003 = vpop.f32.mrb[0].mxu0
    %v3004 = vadd.f32 %v2907, %v3003
    %v3005 = vpop.f32.mrb[0].mxu0
    %v3006 = vpop.f32.mrb[0].mxu0
    %v3007 = vadd.f32 %v2910, %v3006
    %v3008 = vpop.f32.mrb[0].mxu0
    %3009 = vdwg.mxu0
    %3010 = vmatprep.subr.bf16.mxu0 0
    %3011 = vmatpush1.bf16.msra.mxu0 %v2704
    %3012 = vmatprep.subr.bf16.mxu0 0
    %3013 = vmatpush1.bf16.msra.mxu0 %v2705
    %3014 = vmatprep.subr.bf16.mxu0 0
    %3015 = vmatpush1.bf16.msra.mxu0 %v2706
    %3016 = vmatprep.subr.bf16.mxu0 0
    %3017 = vmatpush1.bf16.msra.mxu0 %v2707
    %3018 = vmatprep.subr.bf16.mxu0 0
    %3019 = vmatpush1.bf16.msra.mxu0 %v2708
    %3020 = vmatprep.subr.bf16.mxu0 0
    %3021 = vmatpush1.bf16.msra.mxu0 %v2709
    %3022 = vmatprep.subr.bf16.mxu0 0
    %3023 = vmatpush1.bf16.msra.mxu0 %v2710
    %3024 = vmatprep.subr.bf16.mxu0 0
    %3025 = vmatpush1.bf16.msra.mxu0 %v2711
    %3026 = vmatprep.subr.bf16.mxu0 0
    %3027 = vmatpush1.bf16.msra.mxu0 %v2712
    %3028 = vmatprep.subr.bf16.mxu0 0
    %3029 = vmatpush1.bf16.msra.mxu0 %v2713
    %3030 = vmatprep.subr.bf16.mxu0 0
    %3031 = vmatpush1.bf16.msra.mxu0 %v2714
    %3032 = vmatprep.subr.bf16.mxu0 0
    %3033 = vmatpush1.bf16.msra.mxu0 %v2715
    %3034 = vmatprep.subr.bf16.mxu0 0
    %3035 = vmatpush1.bf16.msra.mxu0 %v2716
    %3036 = vmatprep.subr.bf16.mxu0 0
    %3037 = vmatpush1.bf16.msra.mxu0 %v2717
    %3038 = vmatprep.subr.bf16.mxu0 0
    %3039 = vmatpush1.bf16.msra.mxu0 %v2718
    %3040 = vmatprep.subr.bf16.mxu0 0
    %3041 = vmatpush1.bf16.msra.mxu0 %v2719
    %3042 = vmatprep.mubr.bf16.mxu0 %v2173
    %3043 = vmatmul.mubr.bf16.gmra.mrb[0].mxu0 %v2172
    %v3044 = vpop.f32.mrb[0].mxu0
    %v3045 = vadd.f32 %v2948, %v3044
    %v3046 = vpop.f32.mrb[0].mxu0
    %v3047 = vpop.f32.mrb[0].mxu0
    %v3048 = vadd.f32 %v2951, %v3047
    %v3049 = vpop.f32.mrb[0].mxu0
    %3050 = vmatprep.mubr.bf16.mxu0 %v2182
    %3051 = vmatmul.mubr.bf16.gmra.mrb[0].mxu0 %v2181
    %v3052 = vpop.f32.mrb[0].mxu0
    %v3053 = vadd.f32 %v2956, %v3052
    %v3054 = vpop.f32.mrb[0].mxu0
    %v3055 = vpop.f32.mrb[0].mxu0
    %v3056 = vadd.f32 %v2959, %v3055
    %v3057 = vpop.f32.mrb[0].mxu0
    %3058 = vmatprep.mubr.bf16.mxu0 %v2191
    %3059 = vmatmul.mubr.bf16.gmra.mrb[0].mxu0 %v2190
    %v3060 = vpop.f32.mrb[0].mxu0
    %v3061 = vadd.f32 %v2964, %v3060
    %v3062 = vpop.f32.mrb[0].mxu0
    %v3063 = vpop.f32.mrb[0].mxu0
    %v3064 = vadd.f32 %v2967, %v3063
    %v3065 = vpop.f32.mrb[0].mxu0
    %3066 = vmatprep.mubr.bf16.mxu0 %v2200
    %3067 = vmatmul.mubr.bf16.gmra.mrb[0].mxu0 %v2199
    %v3068 = vpop.f32.mrb[0].mxu0
    %v3069 = vadd.f32 %v2972, %v3068
    %v3070 = vpop.f32.mrb[0].mxu0
    %v3071 = vpop.f32.mrb[0].mxu0
    %v3072 = vadd.f32 %v2975, %v3071
    %v3073 = vpop.f32.mrb[0].mxu0
    %3074 = vmatprep.mubr.bf16.mxu0 %v2209
    %3075 = vmatmul.mubr.bf16.gmra.mrb[0].mxu0 %v2208
    %v3076 = vpop.f32.mrb[0].mxu0
    %v3077 = vadd.f32 %v2980, %v3076
    %v3078 = vpop.f32.mrb[0].mxu0
    %v3079 = vpop.f32.mrb[0].mxu0
    %v3080 = vadd.f32 %v2983, %v3079
    %v3081 = vpop.f32.mrb[0].mxu0
    %3082 = vmatprep.mubr.bf16.mxu0 %v2218
    %3083 = vmatmul.mubr.bf16.gmra.mrb[0].mxu0 %v2217
    %v3084 = vpop.f32.mrb[0].mxu0
    %v3085 = vadd.f32 %v2988, %v3084
    %v3086 = vpop.f32.mrb[0].mxu0
    %v3087 = vpop.f32.mrb[0].mxu0
    %v3088 = vadd.f32 %v2991, %v3087
    %v3089 = vpop.f32.mrb[0].mxu0
    %3090 = vmatprep.mubr.bf16.mxu0 %v2227
    %3091 = vmatmul.mubr.bf16.gmra.mrb[0].mxu0 %v2226
    %v3092 = vpop.f32.mrb[0].mxu0
    %v3093 = vadd.f32 %v2996, %v3092
    %v3094 = vpop.f32.mrb[0].mxu0
    %v3095 = vpop.f32.mrb[0].mxu0
    %v3096 = vadd.f32 %v2999, %v3095
    %v3097 = vpop.f32.mrb[0].mxu0
    %3098 = vmatprep.mubr.bf16.mxu0 %v2236
    %3099 = vmatmul.mubr.bf16.gmra.mrb[0].mxu0 %v2235
    %v3100 = vpop.f32.mrb[0].mxu0
    %v3101 = vadd.f32 %v3004, %v3100
    %v3102 = vpop.f32.mrb[0].mxu0
    %v3103 = vpop.f32.mrb[0].mxu0
    %v3104 = vadd.f32 %v3007, %v3103
    %v3105 = vpop.f32.mrb[0].mxu0
    %3106 = vdwg.mxu0
    %3107 = vmatprep.subr.bf16.mxu0 0
    %3108 = vmatpush1.bf16.msra.mxu0 %v2720
    %3109 = vmatprep.subr.bf16.mxu0 0
    %3110 = vmatpush1.bf16.msra.mxu0 %v2721
    %3111 = vmatprep.subr.bf16.mxu0 0
    %3112 = vmatpush1.bf16.msra.mxu0 %v2722
    %3113 = vmatprep.subr.bf16.mxu0 0
    %3114 = vmatpush1.bf16.msra.mxu0 %v2723
    %3115 = vmatprep.subr.bf16.mxu0 0
    %3116 = vmatpush1.bf16.msra.mxu0 %v2724
    %3117 = vmatprep.subr.bf16.mxu0 0
    %3118 = vmatpush1.bf16.msra.mxu0 %v2725
    %3119 = vmatprep.subr.bf16.mxu0 0
    %3120 = vmatpush1.bf16.msra.mxu0 %v2726
    %3121 = vmatprep.subr.bf16.mxu0 0
    %3122 = vmatpush1.bf16.msra.mxu0 %v2727
    %3123 = vmatprep.subr.bf16.mxu0 0
    %3124 = vmatpush1.bf16.msra.mxu0 %v2728
    %3125 = vmatprep.subr.bf16.mxu0 0
    %3126 = vmatpush1.bf16.msra.mxu0 %v2729
    %3127 = vmatprep.subr.bf16.mxu0 0
    %3128 = vmatpush1.bf16.msra.mxu0 %v2730
    %3129 = vmatprep.subr.bf16.mxu0 0
    %3130 = vmatpush1.bf16.msra.mxu0 %v2731
    %3131 = vmatprep.subr.bf16.mxu0 0
    %3132 = vmatpush1.bf16.msra.mxu0 %v2732
    %3133 = vmatprep.subr.bf16.mxu0 0
    %3134 = vmatpush1.bf16.msra.mxu0 %v2733
    %3135 = vmatprep.subr.bf16.mxu0 0
    %3136 = vmatpush1.bf16.msra.mxu0 %v2734
    %3137 = vmatprep.subr.bf16.mxu0 0
    %3138 = vmatpush1.bf16.msra.mxu0 %v2735
    %3139 = vmatprep.mubr.bf16.mxu0 %v2175
    %3140 = vmatmul.mubr.bf16.gmra.mrb[0].mxu0 %v2174
    %v3141 = vpop.f32.mrb[0].mxu0
    %v3142 = vadd.f32 %v3045, %v3141
    %v3143 = vpop.f32.mrb[0].mxu0
    %v3144 = vpop.f32.mrb[0].mxu0
    %v3145 = vadd.f32 %v3048, %v3144
    %v3146 = vpop.f32.mrb[0].mxu0
    %3147 = vmatprep.mubr.bf16.mxu0 %v2184
    %3148 = vmatmul.mubr.bf16.gmra.mrb[0].mxu0 %v2183
    %v3149 = vpop.f32.mrb[0].mxu0
    %v3150 = vadd.f32 %v3053, %v3149
    %v3151 = vpop.f32.mrb[0].mxu0
    %v3152 = vpop.f32.mrb[0].mxu0
    %v3153 = vadd.f32 %v3056, %v3152
    %v3154 = vpop.f32.mrb[0].mxu0
    %3155 = vmatprep.mubr.bf16.mxu0 %v2193
    %3156 = vmatmul.mubr.bf16.gmra.mrb[0].mxu0 %v2192
    %v3157 = vpop.f32.mrb[0].mxu0
    %v3158 = vadd.f32 %v3061, %v3157
    %v3159 = vpop.f32.mrb[0].mxu0
    %v3160 = vpop.f32.mrb[0].mxu0
    %v3161 = vadd.f32 %v3064, %v3160
    %v3162 = vpop.f32.mrb[0].mxu0
    %3163 = vmatprep.mubr.bf16.mxu0 %v2202
    %3164 = vmatmul.mubr.bf16.gmra.mrb[0].mxu0 %v2201
    %v3165 = vpop.f32.mrb[0].mxu0
    %v3166 = vadd.f32 %v3069, %v3165
    %v3167 = vpop.f32.mrb[0].mxu0
    %v3168 = vpop.f32.mrb[0].mxu0
    %v3169 = vadd.f32 %v3072, %v3168
    %v3170 = vpop.f32.mrb[0].mxu0
    %3171 = vmatprep.mubr.bf16.mxu0 %v2211
    %3172 = vmatmul.mubr.bf16.gmra.mrb[0].mxu0 %v2210
    %v3173 = vpop.f32.mrb[0].mxu0
    %v3174 = vadd.f32 %v3077, %v3173
    %v3175 = vpop.f32.mrb[0].mxu0
    %v3176 = vpop.f32.mrb[0].mxu0
    %v3177 = vadd.f32 %v3080, %v3176
    %v3178 = vpop.f32.mrb[0].mxu0
    %3179 = vmatprep.mubr.bf16.mxu0 %v2220
    %3180 = vmatmul.mubr.bf16.gmra.mrb[0].mxu0 %v2219
    %v3181 = vpop.f32.mrb[0].mxu0
    %v3182 = vadd.f32 %v3085, %v3181
    %v3183 = vpop.f32.mrb[0].mxu0
    %v3184 = vpop.f32.mrb[0].mxu0
    %v3185 = vadd.f32 %v3088, %v3184
    %v3186 = vpop.f32.mrb[0].mxu0
    %3187 = vmatprep.mubr.bf16.mxu0 %v2229
    %3188 = vmatmul.mubr.bf16.gmra.mrb[0].mxu0 %v2228
    %v3189 = vpop.f32.mrb[0].mxu0
    %v3190 = vadd.f32 %v3093, %v3189
    %v3191 = vpop.f32.mrb[0].mxu0
    %v3192 = vpop.f32.mrb[0].mxu0
    %v3193 = vadd.f32 %v3096, %v3192
    %v3194 = vpop.f32.mrb[0].mxu0
    %3195 = vmatprep.mubr.bf16.mxu0 %v2238
    %3196 = vmatmul.mubr.bf16.gmra.mrb[0].mxu0 %v2237
    %v3197 = vpop.f32.mrb[0].mxu0
    %v3198 = vadd.f32 %v3101, %v3197
    %v3199 = vpop.f32.mrb[0].mxu0
    %v3200 = vpop.f32.mrb[0].mxu0
    %v3201 = vadd.f32 %v3104, %v3200
    %v3202 = vpop.f32.mrb[0].mxu0
    %3203 = vdwg.mxu0
    %3204 = vmatprep.subr.bf16.mxu0 0
    %3205 = vmatpush1.bf16.msra.mxu0 %v2736
    %3206 = vmatprep.subr.bf16.mxu0 0
    %3207 = vmatpush1.bf16.msra.mxu0 %v2737
    %3208 = vmatprep.subr.bf16.mxu0 0
    %3209 = vmatpush1.bf16.msra.mxu0 %v2738
    %3210 = vmatprep.subr.bf16.mxu0 0
    %3211 = vmatpush1.bf16.msra.mxu0 %v2739
    %3212 = vmatprep.subr.bf16.mxu0 0
    %3213 = vmatpush1.bf16.msra.mxu0 %v2740
    %3214 = vmatprep.subr.bf16.mxu0 0
    %3215 = vmatpush1.bf16.msra.mxu0 %v2741
    %3216 = vmatprep.subr.bf16.mxu0 0
    %3217 = vmatpush1.bf16.msra.mxu0 %v2742
    %3218 = vmatprep.subr.bf16.mxu0 0
    %3219 = vmatpush1.bf16.msra.mxu0 %v2743
    %3220 = vmatprep.subr.bf16.mxu0 0
    %3221 = vmatpush1.bf16.msra.mxu0 0
    %3222 = vmatprep.subr.bf16.mxu0 0
    %3223 = vmatpush1.bf16.msra.mxu0 0
    %3224 = vmatprep.subr.bf16.mxu0 0
    %3225 = vmatpush1.bf16.msra.mxu0 0
    %3226 = vmatprep.subr.bf16.mxu0 0
    %3227 = vmatpush1.bf16.msra.mxu0 0
    %3228 = vmatprep.subr.bf16.mxu0 0
    %3229 = vmatpush1.bf16.msra.mxu0 0
    %3230 = vmatprep.subr.bf16.mxu0 0
    %3231 = vmatpush1.bf16.msra.mxu0 0
    %3232 = vmatprep.subr.bf16.mxu0 0
    %3233 = vmatpush1.bf16.msra.mxu0 0
    %3234 = vmatprep.subr.bf16.mxu0 0
    %3235 = vmatpush1.bf16.msra.mxu0 0
    %3236 = vmatprep.mubr.bf16.mxu0 0
    %3237 = vmatmul.mubr.bf16.gmra.mrb[0].mxu0 %v2176
    %v3238 = vpop.f32.mrb[0].mxu0
    %v3239 = vadd.f32 %v3142, %v3238
    %v3240 = vpop.f32.mrb[0].mxu0
    %v3241 = vpop.f32.mrb[0].mxu0
    %v3242 = vadd.f32 %v3145, %v3241
    %v3243 = vpop.f32.mrb[0].mxu0
    %3244 = vmatprep.mubr.bf16.mxu0 0
    %3245 = vmatmul.mubr.bf16.gmra.mrb[0].mxu0 %v2185
    %v3246 = vpop.f32.mrb[0].mxu0
    %v3247 = vadd.f32 %v3150, %v3246
    %v3248 = vpop.f32.mrb[0].mxu0
    %v3249 = vpop.f32.mrb[0].mxu0
    %v3250 = vadd.f32 %v3153, %v3249
    %v3251 = vpop.f32.mrb[0].mxu0
    %3252 = vmatprep.mubr.bf16.mxu0 0
    %3253 = vmatmul.mubr.bf16.gmra.mrb[0].mxu0 %v2194
    %v3254 = vpop.f32.mrb[0].mxu0
    %v3255 = vadd.f32 %v3158, %v3254
    %v3256 = vpop.f32.mrb[0].mxu0
    %v3257 = vpop.f32.mrb[0].mxu0
    %v3258 = vadd.f32 %v3161, %v3257
    %v3259 = vpop.f32.mrb[0].mxu0
    %3260 = vmatprep.mubr.bf16.mxu0 0
    %3261 = vmatmul.mubr.bf16.gmra.mrb[0].mxu0 %v2203
    %v3262 = vpop.f32.mrb[0].mxu0
    %v3263 = vadd.f32 %v3166, %v3262
    %v3264 = vpop.f32.mrb[0].mxu0
    %v3265 = vpop.f32.mrb[0].mxu0
    %v3266 = vadd.f32 %v3169, %v3265
    %v3267 = vpop.f32.mrb[0].mxu0
    %3268 = vmatprep.mubr.bf16.mxu0 0
    %3269 = vmatmul.mubr.bf16.gmra.mrb[0].mxu0 %v2212
    %v3270 = vpop.f32.mrb[0].mxu0
    %v3271 = vadd.f32 %v3174, %v3270
    %v3272 = vpop.f32.mrb[0].mxu0
    %v3273 = vpop.f32.mrb[0].mxu0
    %v3274 = vadd.f32 %v3177, %v3273
    %v3275 = vpop.f32.mrb[0].mxu0
    %3276 = vmatprep.mubr.bf16.mxu0 0
    %3277 = vmatmul.mubr.bf16.gmra.mrb[0].mxu0 %v2221
    %v3278 = vpop.f32.mrb[0].mxu0
    %v3279 = vadd.f32 %v3182, %v3278
    %v3280 = vpop.f32.mrb[0].mxu0
    %v3281 = vpop.f32.mrb[0].mxu0
    %v3282 = vadd.f32 %v3185, %v3281
    %v3283 = vpop.f32.mrb[0].mxu0
    %3284 = vmatprep.mubr.bf16.mxu0 0
    %3285 = vmatmul.mubr.bf16.gmra.mrb[0].mxu0 %v2230
    %v3286 = vpop.f32.mrb[0].mxu0
    %v3287 = vadd.f32 %v3190, %v3286
    %v3288 = vpop.f32.mrb[0].mxu0
    %v3289 = vpop.f32.mrb[0].mxu0
    %v3290 = vadd.f32 %v3193, %v3289
    %v3291 = vpop.f32.mrb[0].mxu0
    %3292 = vmatprep.mubr.bf16.mxu0 0
    %3293 = vmatmul.mubr.bf16.gmra.mrb[0].mxu0 %v2239
    %v3294 = vpop.f32.mrb[0].mxu0
    %v3295 = vadd.f32 %v3198, %v3294
    %v3296 = vpop.f32.mrb[0].mxu0
    %v3297 = vpop.f32.mrb[0].mxu0
    %v3298 = vadd.f32 %v3201, %v3297
    %v3299 = vpop.f32.mrb[0].mxu0
    %3300 = vdwg.mxu0
    %v3301 = vld [vmem:[%s8] sm:$0x1]
    %v3302 = vld [vmem:[%s9] sm:$0x1]
    %v3303 = vadd.f32 %v3239, %v3242
    %v3304 = vadd.f32 %v3303, %v3247
    %v3305 = vadd.f32 %v3304, %v3250
    %v3306 = vadd.f32 %v3305, %v3255
    %v3307 = vadd.f32 %v3306, %v3258
    %v3308 = vadd.f32 %v3307, %v3263
    %v3309 = vadd.f32 %v3308, %v3266
    %v3310 = vadd.f32 %v3309, %v3271
    %v3311 = vadd.f32 %v3310, %v3274
    %v3312 = vadd.f32 %v3311, %v3279
    %v3313 = vadd.f32 %v3312, %v3282
    %v3314 = vadd.f32 %v3313, %v3287
    %v3315 = vadd.f32 %v3314, %v3290
    %v3316 = vadd.f32 %v3315, %v3295
    %v3317 = vadd.f32 %v3316, %v3298
    %v3318 = vrot.slane %v3317, 4
    %v3319 = vadd.f32 %v3317, %v3318
    %v3320 = vrot.slane %v3319, 2
    %v3321 = vadd.f32 %v3319, %v3320
    %v3322 = vrot.slane %v3321, 1
    %v3323 = vadd.f32 %v3321, %v3322
    %v3324 = vmul.f32 %v3239, %v3239
    %v3325 = vmul.f32 %v3242, %v3242
    %v3326 = vmul.f32 %v3247, %v3247
    %v3327 = vmul.f32 %v3250, %v3250
    %v3328 = vmul.f32 %v3255, %v3255
    %v3329 = vmul.f32 %v3258, %v3258
    %v3330 = vmul.f32 %v3263, %v3263
    %v3331 = vmul.f32 %v3266, %v3266
    %v3332 = vmul.f32 %v3271, %v3271
    %v3333 = vmul.f32 %v3274, %v3274
    %v3334 = vmul.f32 %v3279, %v3279
    %v3335 = vmul.f32 %v3282, %v3282
    %v3336 = vmul.f32 %v3287, %v3287
    %v3337 = vmul.f32 %v3290, %v3290
    %v3338 = vmul.f32 %v3295, %v3295
    %v3339 = vmul.f32 %v3298, %v3298
    %v3340 = vadd.f32 %v3324, %v3325
    %v3341 = vadd.f32 %v3340, %v3326
    %v3342 = vadd.f32 %v3341, %v3327
    %v3343 = vadd.f32 %v3342, %v3328
    %v3344 = vadd.f32 %v3343, %v3329
    %v3345 = vadd.f32 %v3344, %v3330
    %v3346 = vadd.f32 %v3345, %v3331
    %v3347 = vadd.f32 %v3346, %v3332
    %v3348 = vadd.f32 %v3347, %v3333
    %v3349 = vadd.f32 %v3348, %v3334
    %v3350 = vadd.f32 %v3349, %v3335
    %v3351 = vadd.f32 %v3350, %v3336
    %v3352 = vadd.f32 %v3351, %v3337
    %v3353 = vadd.f32 %v3352, %v3338
    %v3354 = vadd.f32 %v3353, %v3339
    %v3355 = vrot.slane %v3354, 4
    %v3356 = vadd.f32 %v3354, %v3355
    %v3357 = vrot.slane %v3356, 2
    %v3358 = vadd.f32 %v3356, %v3357
    %v3359 = vrot.slane %v3358, 1
    %v3360 = vadd.f32 %v3358, %v3359
    %v3361 = vmul.f32 %v3323, 0.0078125
    %v3362 = vmul.f32 %v3360, 0.0078125
    %v3363 = vmul.f32 %v3361, %v3361
    %v3364 = vsub.f32 %v3362, %v3363
    %v3365 = vmax.f32 %v3364, 0.0
    %v3366 = vsub.f32 %v3239, %v3361
    %v3367 = vsub.f32 %v3242, %v3361
    %v3368 = vsub.f32 %v3247, %v3361
    %v3369 = vsub.f32 %v3250, %v3361
    %v3370 = vsub.f32 %v3255, %v3361
    %v3371 = vsub.f32 %v3258, %v3361
    %v3372 = vsub.f32 %v3263, %v3361
    %v3373 = vsub.f32 %v3266, %v3361
    %v3374 = vsub.f32 %v3271, %v3361
    %v3375 = vsub.f32 %v3274, %v3361
    %v3376 = vsub.f32 %v3279, %v3361
    %v3377 = vsub.f32 %v3282, %v3361
    %v3378 = vsub.f32 %v3287, %v3361
    %v3379 = vsub.f32 %v3290, %v3361
    %v3380 = vsub.f32 %v3295, %v3361
    %v3381 = vsub.f32 %v3298, %v3361
    %v3382 = vadd.f32 %v3365, 1e-05
    %v3383 = vrsqrt.pop %v3382
    %v3384 = vmul.f32 %v3366, %v3383
    %v3385 = vmul.f32 %v3367, %v3383
    %v3386 = vmul.f32 %v3368, %v3383
    %v3387 = vmul.f32 %v3369, %v3383
    %v3388 = vmul.f32 %v3370, %v3383
    %v3389 = vmul.f32 %v3371, %v3383
    %v3390 = vmul.f32 %v3372, %v3383
    %v3391 = vmul.f32 %v3373, %v3383
    %v3392 = vmul.f32 %v3374, %v3383
    %v3393 = vmul.f32 %v3375, %v3383
    %v3394 = vmul.f32 %v3376, %v3383
    %v3395 = vmul.f32 %v3377, %v3383
    %v3396 = vmul.f32 %v3378, %v3383
    %v3397 = vmul.f32 %v3379, %v3383
    %v3398 = vmul.f32 %v3380, %v3383
    %v3399 = vmul.f32 %v3381, %v3383
    %v3401 = vlaneseq
    %v3402 = vshrl.u32 %v3401, 7
    %v3403 = vsub.s32 0, %v3402
    %v3404 = vrot.slane %v3301, %v3403
    %v3406 = vmul.f32 %v3384, %v3404
    %v3407 = vmul.f32 %v3385, %v3404
    %v3408 = vmul.f32 %v3386, %v3404
    %v3409 = vmul.f32 %v3387, %v3404
    %v3410 = vmul.f32 %v3388, %v3404
    %v3411 = vmul.f32 %v3389, %v3404
    %v3412 = vmul.f32 %v3390, %v3404
    %v3413 = vmul.f32 %v3391, %v3404
    %v3414 = vmul.f32 %v3392, %v3404
    %v3415 = vmul.f32 %v3393, %v3404
    %v3416 = vmul.f32 %v3394, %v3404
    %v3417 = vmul.f32 %v3395, %v3404
    %v3418 = vmul.f32 %v3396, %v3404
    %v3419 = vmul.f32 %v3397, %v3404
    %v3420 = vmul.f32 %v3398, %v3404
    %v3421 = vmul.f32 %v3399, %v3404
    %v3423 = vlaneseq
    %v3424 = vshrl.u32 %v3423, 7
    %v3425 = vsub.s32 0, %v3424
    %v3426 = vrot.slane %v3302, %v3425
    %v3428 = vadd.f32 %v3406, %v3426
    %v3429 = vadd.f32 %v3407, %v3426
    %v3430 = vadd.f32 %v3408, %v3426
    %v3431 = vadd.f32 %v3409, %v3426
    %v3432 = vadd.f32 %v3410, %v3426
    %v3433 = vadd.f32 %v3411, %v3426
    %v3434 = vadd.f32 %v3412, %v3426
    %v3435 = vadd.f32 %v3413, %v3426
    %v3436 = vadd.f32 %v3414, %v3426
    %v3437 = vadd.f32 %v3415, %v3426
    %v3438 = vadd.f32 %v3416, %v3426
    %v3439 = vadd.f32 %v3417, %v3426
    %v3440 = vadd.f32 %v3418, %v3426
    %v3441 = vadd.f32 %v3419, %v3426
    %v3442 = vadd.f32 %v3420, %v3426
    %v3443 = vadd.f32 %v3421, %v3426
    %v3444 = vld [vmem:[%s3] sm:$0xf]
    %v3445 = vld [vmem:[%s3 + $0x8] sm:$0xf]
    %v3446 = vld [vmem:[%s3 + $0x10] sm:$0xf]
    %v3447 = vld [vmem:[%s3 + $0x18] sm:$0xf]
    %v3448 = vld [vmem:[%s3 + $0x20] sm:$0xf]
    %v3449 = vld [vmem:[%s3 + $0x28] sm:$0xf]
    %v3450 = vld [vmem:[%s3 + $0x30] sm:$0xf]
    %v3451 = vld [vmem:[%s3 + $0x38] sm:$0xf]
    %v3452 = vld [vmem:[%s3 + $0x48] sm:$0xf]
    %v3453 = vld [vmem:[%s3 + $0x50] sm:$0xf]
    %v3454 = vld [vmem:[%s3 + $0x58] sm:$0xf]
    %v3455 = vld [vmem:[%s3 + $0x60] sm:$0xf]
    %v3456 = vld [vmem:[%s3 + $0x68] sm:$0xf]
    %v3457 = vld [vmem:[%s3 + $0x70] sm:$0xf]
    %v3458 = vld [vmem:[%s3 + $0x78] sm:$0xf]
    %v3459 = vld [vmem:[%s3 + $0x80] sm:$0xf]
    %v3460 = vld [vmem:[%s10] sm:$0x3]
    %v3477 = vunpack.c.l.b16 %v3444
    %v3478 = vunpack.c.l.b16 %v3445
    %v3479 = vunpack.c.l.b16 %v3446
    %v3480 = vunpack.c.l.b16 %v3447
    %v3481 = vunpack.c.l.b16 %v3448
    %v3482 = vunpack.c.l.b16 %v3449
    %v3483 = vunpack.c.l.b16 %v3450
    %v3484 = vunpack.c.l.b16 %v3451
    %v3485 = vunpack.c.l.b16 %v3452
    %v3486 = vunpack.c.l.b16 %v3453
    %v3487 = vunpack.c.l.b16 %v3454
    %v3488 = vunpack.c.l.b16 %v3455
    %v3489 = vunpack.c.l.b16 %v3456
    %v3490 = vunpack.c.l.b16 %v3457
    %v3491 = vunpack.c.l.b16 %v3458
    %v3492 = vunpack.c.l.b16 %v3459
    %v3493 = vpack.c.b16 %v3478, %v3477
    %v3494 = vpack.c.b16 %v3480, %v3479
    %v3495 = vpack.c.b16 %v3482, %v3481
    %v3496 = vpack.c.b16 %v3484, %v3483
    %v3497 = vpack.c.b16 %v3486, %v3485
    %v3498 = vpack.c.b16 %v3488, %v3487
    %v3499 = vpack.c.b16 %v3490, %v3489
    %v3500 = vpack.c.b16 %v3492, %v3491
    %v3502 = vsel %vm110, %v3493, 0
    %v3505 = vsel %vm110, %v3494, 0
    %v3508 = vsel %vm110, %v3495, 0
    %v3511 = vsel %vm110, %v3496, 0
    %v3514 = vsel %vm110, %v3497, 0
    %v3517 = vsel %vm110, %v3498, 0
    %v3520 = vsel %vm110, %v3499, 0
    %v3523 = vsel %vm110, %v3500, 0
    %v3526 = vsel %vm1561, %v3460, 0
    %3528 = vmatprep.subr.bf16.mxu0 0
    %3529 = vmatpush1.bf16.msra.mxu0 %v3526
    %3530 = vmatprep.subr.bf16.mxu0 0
    %3531 = vmatpush1.bf16.msra.mxu0 0
    %3532 = vmatprep.subr.bf16.mxu0 0
    %3533 = vmatpush1.bf16.msra.mxu0 0
    %3534 = vmatprep.subr.bf16.mxu0 0
    %3535 = vmatpush1.bf16.msra.mxu0 0
    %3536 = vmatprep.subr.bf16.mxu0 0
    %3537 = vmatpush1.bf16.msra.mxu0 0
    %3538 = vmatprep.subr.bf16.mxu0 0
    %3539 = vmatpush1.bf16.msra.mxu0 0
    %3540 = vmatprep.subr.bf16.mxu0 0
    %3541 = vmatpush1.bf16.msra.mxu0 0
    %3542 = vmatprep.subr.bf16.mxu0 0
    %3543 = vmatpush1.bf16.msra.mxu0 0
    %3544 = vmatprep.subr.bf16.mxu0 0
    %3545 = vmatpush1.bf16.msra.mxu0 0
    %3546 = vmatprep.subr.bf16.mxu0 0
    %3547 = vmatpush1.bf16.msra.mxu0 0
    %3548 = vmatprep.subr.bf16.mxu0 0
    %3549 = vmatpush1.bf16.msra.mxu0 0
    %3550 = vmatprep.subr.bf16.mxu0 0
    %3551 = vmatpush1.bf16.msra.mxu0 0
    %3552 = vmatprep.subr.bf16.mxu0 0
    %3553 = vmatpush1.bf16.msra.mxu0 0
    %3554 = vmatprep.subr.bf16.mxu0 0
    %3555 = vmatpush1.bf16.msra.mxu0 0
    %3556 = vmatprep.subr.bf16.mxu0 0
    %3557 = vmatpush1.bf16.msra.mxu0 0
    %3558 = vmatprep.subr.bf16.mxu0 0
    %3559 = vmatpush1.bf16.msra.mxu0 0
    %3560 = vmatprep.mubr.bf16.mxu0 0
    %3561 = vmatmul.mubr.bf16.gmra.mrb[0].mxu0 %v3502
    %v3562 = vpop.f32.mrb[0].mxu0
    %v3563 = vadd.f32 0.0, %v3562
    %v3564 = vpop.f32.mrb[0].mxu0
    %v3565 = vpop.f32.mrb[0].mxu0
    %v3566 = vadd.f32 0.0, %v3565
    %v3567 = vpop.f32.mrb[0].mxu0
    %3568 = vmatprep.mubr.bf16.mxu0 0
    %3569 = vmatmul.mubr.bf16.gmra.mrb[0].mxu0 %v3505
    %v3570 = vpop.f32.mrb[0].mxu0
    %v3571 = vadd.f32 0.0, %v3570
    %v3572 = vpop.f32.mrb[0].mxu0
    %v3573 = vpop.f32.mrb[0].mxu0
    %v3574 = vadd.f32 0.0, %v3573
    %v3575 = vpop.f32.mrb[0].mxu0
    %3576 = vmatprep.mubr.bf16.mxu0 0
    %3577 = vmatmul.mubr.bf16.gmra.mrb[0].mxu0 %v3508
    %v3578 = vpop.f32.mrb[0].mxu0
    %v3579 = vadd.f32 0.0, %v3578
    %v3580 = vpop.f32.mrb[0].mxu0
    %v3581 = vpop.f32.mrb[0].mxu0
    %v3582 = vadd.f32 0.0, %v3581
    %v3583 = vpop.f32.mrb[0].mxu0
    %3584 = vmatprep.mubr.bf16.mxu0 0
    %3585 = vmatmul.mubr.bf16.gmra.mrb[0].mxu0 %v3511
    %v3586 = vpop.f32.mrb[0].mxu0
    %v3587 = vadd.f32 0.0, %v3586
    %v3588 = vpop.f32.mrb[0].mxu0
    %v3589 = vpop.f32.mrb[0].mxu0
    %v3590 = vadd.f32 0.0, %v3589
    %v3591 = vpop.f32.mrb[0].mxu0
    %3592 = vmatprep.mubr.bf16.mxu0 0
    %3593 = vmatmul.mubr.bf16.gmra.mrb[0].mxu0 %v3514
    %v3594 = vpop.f32.mrb[0].mxu0
    %v3595 = vadd.f32 0.0, %v3594
    %v3596 = vpop.f32.mrb[0].mxu0
    %v3597 = vpop.f32.mrb[0].mxu0
    %v3598 = vadd.f32 0.0, %v3597
    %v3599 = vpop.f32.mrb[0].mxu0
    %3600 = vmatprep.mubr.bf16.mxu0 0
    %3601 = vmatmul.mubr.bf16.gmra.mrb[0].mxu0 %v3517
    %v3602 = vpop.f32.mrb[0].mxu0
    %v3603 = vadd.f32 0.0, %v3602
    %v3604 = vpop.f32.mrb[0].mxu0
    %v3605 = vpop.f32.mrb[0].mxu0
    %v3606 = vadd.f32 0.0, %v3605
    %v3607 = vpop.f32.mrb[0].mxu0
    %3608 = vmatprep.mubr.bf16.mxu0 0
    %3609 = vmatmul.mubr.bf16.gmra.mrb[0].mxu0 %v3520
    %v3610 = vpop.f32.mrb[0].mxu0
    %v3611 = vadd.f32 0.0, %v3610
    %v3612 = vpop.f32.mrb[0].mxu0
    %v3613 = vpop.f32.mrb[0].mxu0
    %v3614 = vadd.f32 0.0, %v3613
    %v3615 = vpop.f32.mrb[0].mxu0
    %3616 = vmatprep.mubr.bf16.mxu0 0
    %3617 = vmatmul.mubr.bf16.gmra.mrb[0].mxu0 %v3523
    %v3618 = vpop.f32.mrb[0].mxu0
    %v3619 = vadd.f32 0.0, %v3618
    %v3620 = vpop.f32.mrb[0].mxu0
    %v3621 = vpop.f32.mrb[0].mxu0
    %v3622 = vadd.f32 0.0, %v3621
    %v3623 = vpop.f32.mrb[0].mxu0
    %3624 = vdwg.mxu0
    %v3625 = vld [vmem:[%s11] sm:$0x1]
    %v3626 = vld [vmem:[%s12] sm:$0x1]
    %v3627 = vadd.f32 %v3563, %v3566
    %v3628 = vadd.f32 %v3627, %v3571
    %v3629 = vadd.f32 %v3628, %v3574
    %v3630 = vadd.f32 %v3629, %v3579
    %v3631 = vadd.f32 %v3630, %v3582
    %v3632 = vadd.f32 %v3631, %v3587
    %v3633 = vadd.f32 %v3632, %v3590
    %v3634 = vadd.f32 %v3633, %v3595
    %v3635 = vadd.f32 %v3634, %v3598
    %v3636 = vadd.f32 %v3635, %v3603
    %v3637 = vadd.f32 %v3636, %v3606
    %v3638 = vadd.f32 %v3637, %v3611
    %v3639 = vadd.f32 %v3638, %v3614
    %v3640 = vadd.f32 %v3639, %v3619
    %v3641 = vadd.f32 %v3640, %v3622
    %v3642 = vrot.slane %v3641, 4
    %v3643 = vadd.f32 %v3641, %v3642
    %v3644 = vrot.slane %v3643, 2
    %v3645 = vadd.f32 %v3643, %v3644
    %v3646 = vrot.slane %v3645, 1
    %v3647 = vadd.f32 %v3645, %v3646
    %v3648 = vmul.f32 %v3563, %v3563
    %v3649 = vmul.f32 %v3566, %v3566
    %v3650 = vmul.f32 %v3571, %v3571
    %v3651 = vmul.f32 %v3574, %v3574
    %v3652 = vmul.f32 %v3579, %v3579
    %v3653 = vmul.f32 %v3582, %v3582
    %v3654 = vmul.f32 %v3587, %v3587
    %v3655 = vmul.f32 %v3590, %v3590
    %v3656 = vmul.f32 %v3595, %v3595
    %v3657 = vmul.f32 %v3598, %v3598
    %v3658 = vmul.f32 %v3603, %v3603
    %v3659 = vmul.f32 %v3606, %v3606
    %v3660 = vmul.f32 %v3611, %v3611
    %v3661 = vmul.f32 %v3614, %v3614
    %v3662 = vmul.f32 %v3619, %v3619
    %v3663 = vmul.f32 %v3622, %v3622
    %v3664 = vadd.f32 %v3648, %v3649
    %v3665 = vadd.f32 %v3664, %v3650
    %v3666 = vadd.f32 %v3665, %v3651
    %v3667 = vadd.f32 %v3666, %v3652
    %v3668 = vadd.f32 %v3667, %v3653
    %v3669 = vadd.f32 %v3668, %v3654
    %v3670 = vadd.f32 %v3669, %v3655
    %v3671 = vadd.f32 %v3670, %v3656
    %v3672 = vadd.f32 %v3671, %v3657
    %v3673 = vadd.f32 %v3672, %v3658
    %v3674 = vadd.f32 %v3673, %v3659
    %v3675 = vadd.f32 %v3674, %v3660
    %v3676 = vadd.f32 %v3675, %v3661
    %v3677 = vadd.f32 %v3676, %v3662
    %v3678 = vadd.f32 %v3677, %v3663
    %v3679 = vrot.slane %v3678, 4
    %v3680 = vadd.f32 %v3678, %v3679
    %v3681 = vrot.slane %v3680, 2
    %v3682 = vadd.f32 %v3680, %v3681
    %v3683 = vrot.slane %v3682, 1
    %v3684 = vadd.f32 %v3682, %v3683
    %v3685 = vmul.f32 %v3647, 0.0078125
    %v3686 = vmul.f32 %v3684, 0.0078125
    %v3687 = vmul.f32 %v3685, %v3685
    %v3688 = vsub.f32 %v3686, %v3687
    %v3689 = vmax.f32 %v3688, 0.0
    %v3690 = vsub.f32 %v3563, %v3685
    %v3691 = vsub.f32 %v3566, %v3685
    %v3692 = vsub.f32 %v3571, %v3685
    %v3693 = vsub.f32 %v3574, %v3685
    %v3694 = vsub.f32 %v3579, %v3685
    %v3695 = vsub.f32 %v3582, %v3685
    %v3696 = vsub.f32 %v3587, %v3685
    %v3697 = vsub.f32 %v3590, %v3685
    %v3698 = vsub.f32 %v3595, %v3685
    %v3699 = vsub.f32 %v3598, %v3685
    %v3700 = vsub.f32 %v3603, %v3685
    %v3701 = vsub.f32 %v3606, %v3685
    %v3702 = vsub.f32 %v3611, %v3685
    %v3703 = vsub.f32 %v3614, %v3685
    %v3704 = vsub.f32 %v3619, %v3685
    %v3705 = vsub.f32 %v3622, %v3685
    %v3706 = vadd.f32 %v3689, 1e-05
    %v3707 = vrsqrt.pop %v3706
    %v3708 = vmul.f32 %v3690, %v3707
    %v3709 = vmul.f32 %v3691, %v3707
    %v3710 = vmul.f32 %v3692, %v3707
    %v3711 = vmul.f32 %v3693, %v3707
    %v3712 = vmul.f32 %v3694, %v3707
    %v3713 = vmul.f32 %v3695, %v3707
    %v3714 = vmul.f32 %v3696, %v3707
    %v3715 = vmul.f32 %v3697, %v3707
    %v3716 = vmul.f32 %v3698, %v3707
    %v3717 = vmul.f32 %v3699, %v3707
    %v3718 = vmul.f32 %v3700, %v3707
    %v3719 = vmul.f32 %v3701, %v3707
    %v3720 = vmul.f32 %v3702, %v3707
    %v3721 = vmul.f32 %v3703, %v3707
    %v3722 = vmul.f32 %v3704, %v3707
    %v3723 = vmul.f32 %v3705, %v3707
    %v3725 = vlaneseq
    %v3726 = vshrl.u32 %v3725, 7
    %v3727 = vsub.s32 0, %v3726
    %v3728 = vrot.slane %v3625, %v3727
    %v3730 = vmul.f32 %v3708, %v3728
    %v3731 = vmul.f32 %v3709, %v3728
    %v3732 = vmul.f32 %v3710, %v3728
    %v3733 = vmul.f32 %v3711, %v3728
    %v3734 = vmul.f32 %v3712, %v3728
    %v3735 = vmul.f32 %v3713, %v3728
    %v3736 = vmul.f32 %v3714, %v3728
    %v3737 = vmul.f32 %v3715, %v3728
    %v3738 = vmul.f32 %v3716, %v3728
    %v3739 = vmul.f32 %v3717, %v3728
    %v3740 = vmul.f32 %v3718, %v3728
    %v3741 = vmul.f32 %v3719, %v3728
    %v3742 = vmul.f32 %v3720, %v3728
    %v3743 = vmul.f32 %v3721, %v3728
    %v3744 = vmul.f32 %v3722, %v3728
    %v3745 = vmul.f32 %v3723, %v3728
    %v3747 = vlaneseq
    %v3748 = vshrl.u32 %v3747, 7
    %v3749 = vsub.s32 0, %v3748
    %v3750 = vrot.slane %v3626, %v3749
    %v3752 = vadd.f32 %v3730, %v3750
    %v3753 = vadd.f32 %v3731, %v3750
    %v3754 = vadd.f32 %v3732, %v3750
    %v3755 = vadd.f32 %v3733, %v3750
    %v3756 = vadd.f32 %v3734, %v3750
    %v3757 = vadd.f32 %v3735, %v3750
    %v3758 = vadd.f32 %v3736, %v3750
    %v3759 = vadd.f32 %v3737, %v3750
    %v3760 = vadd.f32 %v3738, %v3750
    %v3761 = vadd.f32 %v3739, %v3750
    %v3762 = vadd.f32 %v3740, %v3750
    %v3763 = vadd.f32 %v3741, %v3750
    %v3764 = vadd.f32 %v3742, %v3750
    %v3765 = vadd.f32 %v3743, %v3750
    %v3766 = vadd.f32 %v3744, %v3750
    %v3767 = vadd.f32 %v3745, %v3750
    %v3768 = vadd.f32 %v3428, %v3752
    %v3769 = vadd.f32 %v3429, %v3753
    %v3770 = vadd.f32 %v3430, %v3754
    %v3771 = vadd.f32 %v3431, %v3755
    %v3772 = vadd.f32 %v3432, %v3756
    %v3773 = vadd.f32 %v3433, %v3757
    %v3774 = vadd.f32 %v3434, %v3758
    %v3775 = vadd.f32 %v3435, %v3759
    %v3776 = vadd.f32 %v3436, %v3760
    %v3777 = vadd.f32 %v3437, %v3761
    %v3778 = vadd.f32 %v3438, %v3762
    %v3779 = vadd.f32 %v3439, %v3763
    %v3780 = vadd.f32 %v3440, %v3764
    %v3781 = vadd.f32 %v3441, %v3765
    %v3782 = vadd.f32 %v3442, %v3766
    %v3783 = vadd.f32 %v3443, %v3767
    %v3784 = vmax.f32 %v3768, 0.0
    %v3785 = vmax.f32 %v3769, 0.0
    %v3786 = vmax.f32 %v3770, 0.0
    %v3787 = vmax.f32 %v3771, 0.0
    %v3788 = vmax.f32 %v3772, 0.0
    %v3789 = vmax.f32 %v3773, 0.0
    %v3790 = vmax.f32 %v3774, 0.0
    %v3791 = vmax.f32 %v3775, 0.0
    %v3792 = vmax.f32 %v3776, 0.0
    %v3793 = vmax.f32 %v3777, 0.0
    %v3794 = vmax.f32 %v3778, 0.0
    %v3795 = vmax.f32 %v3779, 0.0
    %v3796 = vmax.f32 %v3780, 0.0
    %v3797 = vmax.f32 %v3781, 0.0
    %v3798 = vmax.f32 %v3782, 0.0
    %v3799 = vmax.f32 %v3783, 0.0
    %v3800 = vpack.c.bf16 %v3785, %v3784
    %v3801 = vpack.c.bf16 %v3787, %v3786
    %v3802 = vpack.c.bf16 %v3789, %v3788
    %v3803 = vpack.c.bf16 %v3791, %v3790
    %v3804 = vpack.c.bf16 %v3793, %v3792
    %v3805 = vpack.c.bf16 %v3795, %v3794
    %v3806 = vpack.c.bf16 %v3797, %v3796
    %v3807 = vpack.c.bf16 %v3799, %v3798
    %v3816 = vunpack.c.l.b16 %v3800
    %v3817 = vunpack.c.h.b16 %v3800
    %v3818 = vunpack.c.l.b16 %v3801
    %v3819 = vunpack.c.h.b16 %v3801
    %v3820 = vunpack.c.l.b16 %v3802
    %v3821 = vunpack.c.h.b16 %v3802
    %v3822 = vunpack.c.l.b16 %v3803
    %v3823 = vunpack.c.h.b16 %v3803
    %v3824 = vunpack.c.l.b16 %v3804
    %v3825 = vunpack.c.h.b16 %v3804
    %v3826 = vunpack.c.l.b16 %v3805
    %v3827 = vunpack.c.h.b16 %v3805
    %v3828 = vunpack.c.l.b16 %v3806
    %v3829 = vunpack.c.h.b16 %v3806
    %v3830 = vunpack.c.l.b16 %v3807
    %v3831 = vunpack.c.h.b16 %v3807
    %v3832 = vpack.c.b16 %v3816, %v3816
    %v3833 = vpack.c.b16 %v3817, %v3817
    %v3834 = vpack.c.b16 %v3818, %v3818
    %v3835 = vpack.c.b16 %v3819, %v3819
    %v3836 = vpack.c.b16 %v3820, %v3820
    %v3837 = vpack.c.b16 %v3821, %v3821
    %v3838 = vpack.c.b16 %v3822, %v3822
    %v3839 = vpack.c.b16 %v3823, %v3823
    %v3840 = vpack.c.b16 %v3824, %v3824
    %v3841 = vpack.c.b16 %v3825, %v3825
    %v3842 = vpack.c.b16 %v3826, %v3826
    %v3843 = vpack.c.b16 %v3827, %v3827
    %v3844 = vpack.c.b16 %v3828, %v3828
    %v3845 = vpack.c.b16 %v3829, %v3829
    %v3846 = vpack.c.b16 %v3830, %v3830
    %v3847 = vpack.c.b16 %v3831, %v3831
    %3864 = vst [vmem:[#allocation5] sm:$0xf] %v3832
    %3865 = vst [vmem:[#allocation5 + $0x4] sm:$0xf] %v3833
    %3866 = vst [vmem:[#allocation5 + $0x8] sm:$0xf] %v3834
    %3867 = vst [vmem:[#allocation5 + $0xc] sm:$0xf] %v3835
    %3868 = vst [vmem:[#allocation5 + $0x10] sm:$0xf] %v3836
    %3869 = vst [vmem:[#allocation5 + $0x14] sm:$0xf] %v3837
    %3870 = vst [vmem:[#allocation5 + $0x18] sm:$0xf] %v3838
    %3871 = vst [vmem:[#allocation5 + $0x1c] sm:$0xf] %v3839
    %3872 = vst [vmem:[#allocation5 + $0x20] sm:$0xf] %v3840
    %3873 = vst [vmem:[#allocation5 + $0x24] sm:$0xf] %v3841
    %3874 = vst [vmem:[#allocation5 + $0x28] sm:$0xf] %v3842
    %3875 = vst [vmem:[#allocation5 + $0x2c] sm:$0xf] %v3843
    %3876 = vst [vmem:[#allocation5 + $0x30] sm:$0xf] %v3844
    %3877 = vst [vmem:[#allocation5 + $0x34] sm:$0xf] %v3845
    %3878 = vst [vmem:[#allocation5 + $0x38] sm:$0xf] %v3846
    %3879 = vst [vmem:[#allocation5 + $0x3c] sm:$0xf] %v3847
    // Predicated region
    $region54: #{tpu_custom_call.1} parent=1 // pred_check
      _
    $region55: #{tpu_custom_call.1} parent=1 // pred_check_branch
      %3881 = sbr.rel (0) target = $region57
    $region56: #{tpu_custom_call.1} parent=1 // pred_region
      %s3883 = ssub.s32 1024, 1024
      %3884 = vsyncadd [#allocation6], %s3883
      %s3885 = sshll.u32 [#allocation5], 4
      %s3886 = int_to_ptr.vmem [resolvable:$true] %s3885
      %3891 = dma.vmem_to_hbm [thread:$0]  %s3886, 1024, %s13, [#allocation6], 64, 64, 4
    $region57: #{tpu_custom_call.1} parent=1 // pred_fallthru
      _
    // Predicated region
    $region58: #{tpu_custom_call.1} parent=1 // pred_check
      _
    $region59: #{tpu_custom_call.1} parent=1 // pred_check_branch
      %3893 = sbr.rel (0) target = $region61
    $region60: #{tpu_custom_call.1} parent=1 // pred_region
      %3894 = dma.done [#allocation6], 1024
    $region61: #{tpu_custom_call.1} parent=1 // pred_fallthru
      _
    %3895 = vsyncpa [#allocation6], 1

</llo_original>
